<compile_context>
chip_gen: v7x
topology: tpu7x:2x2x1
jax: 0.10.0
libtpu: 0.0.40
codegen_flags: <defaults>
</compile_context>

<pallas_src>
import functools

import jax
import jax.numpy as jnp
from jax.experimental import pallas as pl
from jax.experimental.pallas import tpu as pltpu

IN_DIM = 28 * 28
ENC_DIMS = [IN_DIM, 128, 64, 12, 3]
DEC_DIMS = [3, 12, 64, 128, IN_DIM]
CODE_DIM = 3
ENC_PAD = 128  # lane-dense width used for the encoder output block


def autoencoder_kernel(x_ref,
                       # encoder params
                       w1_ref, b1_ref, w2_ref, b2_ref, w3_ref, b3_ref, w4_ref, b4_ref,
                       # decoder params
                       w5_ref, b5_ref, w6_ref, b6_ref, w7_ref, b7_ref, w8_ref, b8_ref,
                       # outputs
                       enc_ref, dec_ref):
    f32 = jnp.float32

    def lin(h, w_ref, b_ref):
        # Weights arrive pre-cast to bf16 (done once in the wrapper); activations are
        # cast to the weight dtype right before the MXU, accumulation stays f32, and
        # the f32 bias add / tanh / sigmoid run on the VPU/EUP (v5e has no bf16 VPU).
        return jnp.dot(h.astype(w_ref.dtype), w_ref[...],
                       preferred_element_type=f32) + b_ref[...]

    # ---- encoder: Linear+Tanh x3, then Linear (no activation) ----
    x = x_ref[...]  # bf16 if the caller supplies bf16; lin() handles the cast if f32
    h = jnp.tanh(lin(x, w1_ref, b1_ref))
    h = jnp.tanh(lin(h, w2_ref, b2_ref))
    h = jnp.tanh(lin(h, w3_ref, b3_ref))
    # w4/b4 are zero-padded to 128 output lanes: columns CODE_DIM.. are exactly zero,
    # so this is a full, unmasked, lane-dense store.
    enc = lin(h, w4_ref, b4_ref)                  # (block_b, 128) f32
    enc_ref[...] = enc.astype(enc_ref.dtype)

    # ---- decoder: Linear+Tanh x3, then Linear + Sigmoid ----
    # w5 is zero-row-padded to (128, 12), so feeding the padded code is exact.
    h = jnp.tanh(lin(enc, w5_ref, b5_ref))
    h = jnp.tanh(lin(h, w6_ref, b6_ref))
    h = jnp.tanh(lin(h, w7_ref, b7_ref))
    dec = jax.nn.sigmoid(lin(h, w8_ref, b8_ref))  # f32 sigmoid
    dec_ref[...] = dec.astype(dec_ref.dtype)      # bf16 store halves the HBM writeback


def _prepare_params(params):
    """Pad layer-4/5 params to the lane-dense 128-wide code and pre-cast every weight
    matrix to bf16 once (outside the per-tile kernel path).  Biases stay f32."""
    (w1, b1, w2, b2, w3, b3, w4, b4,
     w5, b5, w6, b6, w7, b7, w8, b8) = params
    pad = ENC_PAD - CODE_DIM
    w4p = jnp.pad(w4, ((0, 0), (0, pad)))  # (12, 128): extra output columns are zero
    b4p = jnp.pad(b4, ((0, 0), (0, pad)))  # (1, 128)
    w5p = jnp.pad(w5, ((0, pad), (0, 0)))  # (128, 12): extra input rows are zero
    bf = jnp.bfloat16
    return (w1.astype(bf), b1, w2.astype(bf), b2, w3.astype(bf), b3,
            w4p.astype(bf), b4p,
            w5p.astype(bf), b5, w6.astype(bf), b6, w7.astype(bf), b7,
            w8.astype(bf), b8)


def _choose_block_b(B, *, block_b_max=512, min_steps=4):
    """Batch tile: (a) >= min_steps grid steps when B allows it (>= 2 per TensorCore
    on dual-TC chips so per-step DMAs pipeline), (b) multiple of 8 sublanes, (c) rows
    distributed evenly so ragged batches pad < 8 rows, (d) capped at block_b_max so
    double-buffered VMEM stays well inside every generation's scoped limit."""
    target = max(1, min(block_b_max, pl.cdiv(B, min_steps)))
    n_steps = pl.cdiv(B, target)
    bb = pl.cdiv(pl.cdiv(B, n_steps), 8) * 8
    return max(8, min(bb, block_b_max))


@functools.partial(jax.jit, static_argnames=("block_b", "return_padded_code"))
def autoencoder_forward(x, params, *, block_b=None, return_padded_code=False):
    """x: (B, 784), f32 or (preferably, for ~20% less HBM read) bf16.
    params: flat tuple (w1, b1, ..., w8, b8) in f32, torch.nn.Linear layout transposed
    to (in_features, out_features) weights and (1, out_features) biases.

    Returns (encoded, decoded) matching the PyTorch forward: encoded (B, 3) f32,
    decoded (B, 784) bf16 (sigmoid computed in f32, stored bf16 to halve writeback).
    return_padded_code=True returns the lane-dense (B_padded, 128) code slab instead
    of the (B, 3) slice, skipping one extra HBM-bound XLA pass at the consumer.
    """
    B, D = x.shape
    assert D == IN_DIM
    if block_b is None:
        block_b = _choose_block_b(B)
    block_b = max(8, min(block_b, pl.cdiv(B, 8) * 8, 512))
    B_padded = pl.cdiv(B, block_b) * block_b
    if B_padded != B:
        x = jnp.pad(x, ((0, B_padded - B), (0, 0)))

    kparams = _prepare_params(params)
    grid = (B_padded // block_b,)

    # Batch-tiled x / outputs; params are tiny and passed whole with a constant
    # index_map (DMA'd once, resident in VMEM across every batch tile).
    x_spec = pl.BlockSpec((block_b, D), lambda i: (i, 0))
    param_specs = [pl.BlockSpec(p.shape, lambda i, nd=p.ndim: (0,) * nd)
                   for p in kparams]
    enc_spec = pl.BlockSpec((block_b, ENC_PAD), lambda i: (i, 0))
    dec_spec = pl.BlockSpec((block_b, IN_DIM), lambda i: (i, 0))

    out_shapes = (
        jax.ShapeDtypeStruct((B_padded, ENC_PAD), jnp.float32),   # code stays f32
        jax.ShapeDtypeStruct((B_padded, IN_DIM), jnp.bfloat16),   # bf16 writeback
    )

    enc_padded, dec = pl.pallas_call(
        autoencoder_kernel,
        out_shape=out_shapes,
        grid_spec=pltpu.PrefetchScalarGridSpec(
            num_scalar_prefetch=0,
            grid=grid,
            in_specs=[x_spec] + param_specs,
            out_specs=[enc_spec, dec_spec],
        ),
        compiler_params=pltpu.CompilerParams(
            dimension_semantics=("parallel",),
            vmem_limit_bytes=32 << 20,
        ),
    )(x, *kparams)

    if return_padded_code:
        return enc_padded, dec[:B]
    return enc_padded[:B, :CODE_DIM], dec[:B]


def init_params(key):
    """Deterministic init matching torch.nn.Linear's U(-1/sqrt(fan_in), 1/sqrt(fan_in))."""
    params = []
    dims = list(zip(ENC_DIMS[:-1], ENC_DIMS[1:])) + list(zip(DEC_DIMS[:-1], DEC_DIMS[1:]))
    for (fan_in, fan_out) in dims:
        key, kw, kb = jax.random.split(key, 3)
        bound = 1.0 / (fan_in ** 0.5)
        w = jax.random.uniform(kw, (fan_in, fan_out), jnp.float32, -bound, bound)
        b = jax.random.uniform(kb, (1, fan_out), jnp.float32, -bound, bound)
        params += [w, b]
    return tuple(params)


def reference_forward(x, params, *, mixed=True):
    """Pure-JAX reference. mixed=True mirrors the kernel's precision (bf16 MXU inputs
    on every matmul, f32 accumulate, f32 bias/tanh/sigmoid); mixed=False is the exact
    f32 PyTorch semantics."""
    (w1, b1, w2, b2, w3, b3, w4, b4,
     w5, b5, w6, b6, w7, b7, w8, b8) = params

    def lin(h, w, b):
        if mixed:
            h = h.astype(jnp.bfloat16)
            w = w.astype(jnp.bfloat16)
        return jnp.dot(h, w, preferred_element_type=jnp.float32) + b

    h = jnp.tanh(lin(x, w1, b1))
    h = jnp.tanh(lin(h, w2, b2))
    h = jnp.tanh(lin(h, w3, b3))
    enc = lin(h, w4, b4)
    h = jnp.tanh(lin(enc, w5, b5))
    h = jnp.tanh(lin(h, w6, b6))
    h = jnp.tanh(lin(h, w7, b7))
    dec = jax.nn.sigmoid(lin(h, w8, b8))
    return enc, dec


if __name__ == "__main__":
    key = jax.random.PRNGKey(0)
    key_x, key_p = jax.random.split(key)

    # Small demo batch; adaptive tiling gives block_b=64 -> grid=(4,), i.e. >= 2
    # steps per TensorCore on dual-TC chips, with zero batch padding.
    B = 256
    x_f32 = jax.random.uniform(key_x, (B, IN_DIM), jnp.float32)  # MNIST-like in [0, 1)
    x = x_f32.astype(jnp.bfloat16)  # producer-side bf16: halves the HBM read
    params = init_params(key_p)

    enc, dec = autoencoder_forward(x, params)
    jax.block_until_ready((enc, dec))

    assert enc.shape == (B, CODE_DIM) and enc.dtype == jnp.float32
    assert dec.shape == (B, IN_DIM) and dec.dtype == jnp.bfloat16

    dec_f = dec.astype(jnp.float32)

    # Tight check vs. a reference that mirrors the kernel's mixed precision.
    enc_mp, dec_mp = reference_forward(x_f32, params, mixed=True)
    assert jnp.allclose(enc, enc_mp, atol=1e-2, rtol=1e-2)
    assert jnp.allclose(dec_f, dec_mp, atol=1e-2, rtol=1e-2)

    # Loose check vs. the pure-f32 forward (the exact PyTorch semantics); deviation is
    # bf16 rounding on the MXU inputs plus the bf16 decoded store.
    enc_f32, dec_f32 = reference_forward(x_f32, params, mixed=False)
    assert jnp.allclose(enc, enc_f32, atol=5e-2, rtol=5e-2)
    assert jnp.allclose(dec_f, dec_f32, atol=5e-2, rtol=5e-2)

    print("KERNEL_OK")
</pallas_src>

<mosaic_0001>
module attributes {stable_mosaic.version = 11 : i64} {
  func.func @autoencoder_kernel(%arg0: i32, %arg1: memref<64x784xbf16, #tpu.memory_space<vmem>>, %arg2: memref<784x128xbf16, #tpu.memory_space<vmem>>, %arg3: memref<1x128xf32, #tpu.memory_space<vmem>>, %arg4: memref<128x64xbf16, #tpu.memory_space<vmem>>, %arg5: memref<1x64xf32, #tpu.memory_space<vmem>>, %arg6: memref<64x12xbf16, #tpu.memory_space<vmem>>, %arg7: memref<1x12xf32, #tpu.memory_space<vmem>>, %arg8: memref<12x128xbf16, #tpu.memory_space<vmem>>, %arg9: memref<1x128xf32, #tpu.memory_space<vmem>>, %arg10: memref<128x12xbf16, #tpu.memory_space<vmem>>, %arg11: memref<1x12xf32, #tpu.memory_space<vmem>>, %arg12: memref<12x64xbf16, #tpu.memory_space<vmem>>, %arg13: memref<1x64xf32, #tpu.memory_space<vmem>>, %arg14: memref<64x128xbf16, #tpu.memory_space<vmem>>, %arg15: memref<1x128xf32, #tpu.memory_space<vmem>>, %arg16: memref<128x784xbf16, #tpu.memory_space<vmem>>, %arg17: memref<1x784xf32, #tpu.memory_space<vmem>>, %arg18: memref<64x128xf32, #tpu.memory_space<vmem>>, %arg19: memref<64x784xbf16, #tpu.memory_space<vmem>>) attributes {dimension_semantics = [#tpu.dimension_semantics<parallel>], iteration_bounds = array<i64: 4>, scalar_prefetch = 0 : i64, scratch_operands = 0 : i64, tpu.core_type = #tpu.core_type<tc>, window_params = [{transform_indices = @transform_0, window_bounds = array<i64: 64, 784>}, {pipeline_mode = #tpu.pipeline_mode<synchronous>, transform_indices = @transform_1, window_bounds = array<i64: 784, 128>}, {pipeline_mode = #tpu.pipeline_mode<synchronous>, transform_indices = @transform_2, window_bounds = array<i64: 1, 128>}, {pipeline_mode = #tpu.pipeline_mode<synchronous>, transform_indices = @transform_3, window_bounds = array<i64: 128, 64>}, {pipeline_mode = #tpu.pipeline_mode<synchronous>, transform_indices = @transform_4, window_bounds = array<i64: 1, 64>}, {pipeline_mode = #tpu.pipeline_mode<synchronous>, transform_indices = @transform_5, window_bounds = array<i64: 64, 12>}, {pipeline_mode = #tpu.pipeline_mode<synchronous>, transform_indices = @transform_6, window_bounds = array<i64: 1, 12>}, {pipeline_mode = #tpu.pipeline_mode<synchronous>, transform_indices = @transform_7, window_bounds = array<i64: 12, 128>}, {pipeline_mode = #tpu.pipeline_mode<synchronous>, transform_indices = @transform_8, window_bounds = array<i64: 1, 128>}, {pipeline_mode = #tpu.pipeline_mode<synchronous>, transform_indices = @transform_9, window_bounds = array<i64: 128, 12>}, {pipeline_mode = #tpu.pipeline_mode<synchronous>, transform_indices = @transform_10, window_bounds = array<i64: 1, 12>}, {pipeline_mode = #tpu.pipeline_mode<synchronous>, transform_indices = @transform_11, window_bounds = array<i64: 12, 64>}, {pipeline_mode = #tpu.pipeline_mode<synchronous>, transform_indices = @transform_12, window_bounds = array<i64: 1, 64>}, {pipeline_mode = #tpu.pipeline_mode<synchronous>, transform_indices = @transform_13, window_bounds = array<i64: 64, 128>}, {pipeline_mode = #tpu.pipeline_mode<synchronous>, transform_indices = @transform_14, window_bounds = array<i64: 1, 128>}, {pipeline_mode = #tpu.pipeline_mode<synchronous>, transform_indices = @transform_15, window_bounds = array<i64: 128, 784>}, {pipeline_mode = #tpu.pipeline_mode<synchronous>, transform_indices = @transform_16, window_bounds = array<i64: 1, 784>}, {transform_indices = @transform_17, window_bounds = array<i64: 64, 128>}, {transform_indices = @transform_18, window_bounds = array<i64: 64, 784>}]} {
    %c0 = arith.constant 0 : index
    %c0_0 = arith.constant 0 : index
    %0 = vector.load %arg1[%c0, %c0_0] : memref<64x784xbf16, #tpu.memory_space<vmem>>, vector<64x784xbf16>
    %c0_1 = arith.constant 0 : index
    %c0_2 = arith.constant 0 : index
    %1 = vector.load %arg2[%c0_1, %c0_2] : memref<784x128xbf16, #tpu.memory_space<vmem>>, vector<784x128xbf16>
    %cst = arith.constant dense<0.000000e+00> : vector<64x128xf32>
    %2 = tpu.matmul %0, %1, %cst {dimension_numbers = #tpu.dot_dimension_numbers<[1], [0], [0], [1], [0, 0, 1, 1], [], []>} : vector<64x784xbf16>, vector<784x128xbf16>, vector<64x128xf32> -> vector<64x128xf32>
    %c0_3 = arith.constant 0 : index
    %c0_4 = arith.constant 0 : index
    %3 = vector.load %arg3[%c0_3, %c0_4] : memref<1x128xf32, #tpu.memory_space<vmem>>, vector<1x128xf32>
    %4 = vector.broadcast %3 : vector<1x128xf32> to vector<64x128xf32>
    %5 = arith.addf %2, %4 : vector<64x128xf32>
    %6 = math.tanh %5 : vector<64x128xf32>
    %7 = arith.truncf %6 : vector<64x128xf32> to vector<64x128xbf16>
    %c0_5 = arith.constant 0 : index
    %c0_6 = arith.constant 0 : index
    %8 = vector.load %arg4[%c0_5, %c0_6] : memref<128x64xbf16, #tpu.memory_space<vmem>>, vector<128x64xbf16>
    %cst_7 = arith.constant dense<0.000000e+00> : vector<64x64xf32>
    %9 = tpu.matmul %7, %8, %cst_7 {dimension_numbers = #tpu.dot_dimension_numbers<[1], [0], [0], [1], [0, 0, 1, 1], [], []>} : vector<64x128xbf16>, vector<128x64xbf16>, vector<64x64xf32> -> vector<64x64xf32>
    %c0_8 = arith.constant 0 : index
    %c0_9 = arith.constant 0 : index
    %10 = vector.load %arg5[%c0_8, %c0_9] : memref<1x64xf32, #tpu.memory_space<vmem>>, vector<1x64xf32>
    %11 = vector.broadcast %10 : vector<1x64xf32> to vector<64x64xf32>
    %12 = arith.addf %9, %11 : vector<64x64xf32>
    %13 = math.tanh %12 : vector<64x64xf32>
    %14 = arith.truncf %13 : vector<64x64xf32> to vector<64x64xbf16>
    %c0_10 = arith.constant 0 : index
    %c0_11 = arith.constant 0 : index
    %15 = vector.load %arg6[%c0_10, %c0_11] : memref<64x12xbf16, #tpu.memory_space<vmem>>, vector<64x12xbf16>
    %cst_12 = arith.constant dense<0.000000e+00> : vector<64x12xf32>
    %16 = tpu.matmul %14, %15, %cst_12 {dimension_numbers = #tpu.dot_dimension_numbers<[1], [0], [0], [1], [0, 0, 1, 1], [], []>} : vector<64x64xbf16>, vector<64x12xbf16>, vector<64x12xf32> -> vector<64x12xf32>
    %c0_13 = arith.constant 0 : index
    %c0_14 = arith.constant 0 : index
    %17 = vector.load %arg7[%c0_13, %c0_14] : memref<1x12xf32, #tpu.memory_space<vmem>>, vector<1x12xf32>
    %18 = vector.broadcast %17 : vector<1x12xf32> to vector<64x12xf32>
    %19 = arith.addf %16, %18 : vector<64x12xf32>
    %20 = math.tanh %19 : vector<64x12xf32>
    %21 = arith.truncf %20 : vector<64x12xf32> to vector<64x12xbf16>
    %c0_15 = arith.constant 0 : index
    %c0_16 = arith.constant 0 : index
    %22 = vector.load %arg8[%c0_15, %c0_16] : memref<12x128xbf16, #tpu.memory_space<vmem>>, vector<12x128xbf16>
    %cst_17 = arith.constant dense<0.000000e+00> : vector<64x128xf32>
    %23 = tpu.matmul %21, %22, %cst_17 {dimension_numbers = #tpu.dot_dimension_numbers<[1], [0], [0], [1], [0, 0, 1, 1], [], []>} : vector<64x12xbf16>, vector<12x128xbf16>, vector<64x128xf32> -> vector<64x128xf32>
    %c0_18 = arith.constant 0 : index
    %c0_19 = arith.constant 0 : index
    %24 = vector.load %arg9[%c0_18, %c0_19] : memref<1x128xf32, #tpu.memory_space<vmem>>, vector<1x128xf32>
    %25 = vector.broadcast %24 : vector<1x128xf32> to vector<64x128xf32>
    %26 = arith.addf %23, %25 : vector<64x128xf32>
    %c0_20 = arith.constant 0 : index
    %c0_21 = arith.constant 0 : index
    %27 = vector.load %arg18[%c0_20, %c0_21] : memref<64x128xf32, #tpu.memory_space<vmem>>, vector<64x128xf32>
    tpu.vector_store %arg18[%c0_20, %c0_21], %26 {strides = array<i32>} : memref<64x128xf32, #tpu.memory_space<vmem>>, vector<64x128xf32>,
    %28 = arith.truncf %26 : vector<64x128xf32> to vector<64x128xbf16>
    %c0_22 = arith.constant 0 : index
    %c0_23 = arith.constant 0 : index
    %29 = vector.load %arg10[%c0_22, %c0_23] : memref<128x12xbf16, #tpu.memory_space<vmem>>, vector<128x12xbf16>
    %cst_24 = arith.constant dense<0.000000e+00> : vector<64x12xf32>
    %30 = tpu.matmul %28, %29, %cst_24 {dimension_numbers = #tpu.dot_dimension_numbers<[1], [0], [0], [1], [0, 0, 1, 1], [], []>} : vector<64x128xbf16>, vector<128x12xbf16>, vector<64x12xf32> -> vector<64x12xf32>
    %c0_25 = arith.constant 0 : index
    %c0_26 = arith.constant 0 : index
    %31 = vector.load %arg11[%c0_25, %c0_26] : memref<1x12xf32, #tpu.memory_space<vmem>>, vector<1x12xf32>
    %32 = vector.broadcast %31 : vector<1x12xf32> to vector<64x12xf32>
    %33 = arith.addf %30, %32 : vector<64x12xf32>
    %34 = math.tanh %33 : vector<64x12xf32>
    %35 = arith.truncf %34 : vector<64x12xf32> to vector<64x12xbf16>
    %c0_27 = arith.constant 0 : index
    %c0_28 = arith.constant 0 : index
    %36 = vector.load %arg12[%c0_27, %c0_28] : memref<12x64xbf16, #tpu.memory_space<vmem>>, vector<12x64xbf16>
    %cst_29 = arith.constant dense<0.000000e+00> : vector<64x64xf32>
    %37 = tpu.matmul %35, %36, %cst_29 {dimension_numbers = #tpu.dot_dimension_numbers<[1], [0], [0], [1], [0, 0, 1, 1], [], []>} : vector<64x12xbf16>, vector<12x64xbf16>, vector<64x64xf32> -> vector<64x64xf32>
    %c0_30 = arith.constant 0 : index
    %c0_31 = arith.constant 0 : index
    %38 = vector.load %arg13[%c0_30, %c0_31] : memref<1x64xf32, #tpu.memory_space<vmem>>, vector<1x64xf32>
    %39 = vector.broadcast %38 : vector<1x64xf32> to vector<64x64xf32>
    %40 = arith.addf %37, %39 : vector<64x64xf32>
    %41 = math.tanh %40 : vector<64x64xf32>
    %42 = arith.truncf %41 : vector<64x64xf32> to vector<64x64xbf16>
    %c0_32 = arith.constant 0 : index
    %c0_33 = arith.constant 0 : index
    %43 = vector.load %arg14[%c0_32, %c0_33] : memref<64x128xbf16, #tpu.memory_space<vmem>>, vector<64x128xbf16>
    %cst_34 = arith.constant dense<0.000000e+00> : vector<64x128xf32>
    %44 = tpu.matmul %42, %43, %cst_34 {dimension_numbers = #tpu.dot_dimension_numbers<[1], [0], [0], [1], [0, 0, 1, 1], [], []>} : vector<64x64xbf16>, vector<64x128xbf16>, vector<64x128xf32> -> vector<64x128xf32>
    %c0_35 = arith.constant 0 : index
    %c0_36 = arith.constant 0 : index
    %45 = vector.load %arg15[%c0_35, %c0_36] : memref<1x128xf32, #tpu.memory_space<vmem>>, vector<1x128xf32>
    %46 = vector.broadcast %45 : vector<1x128xf32> to vector<64x128xf32>
    %47 = arith.addf %44, %46 : vector<64x128xf32>
    %48 = math.tanh %47 : vector<64x128xf32>
    %49 = arith.truncf %48 : vector<64x128xf32> to vector<64x128xbf16>
    %c0_37 = arith.constant 0 : index
    %c0_38 = arith.constant 0 : index
    %50 = vector.load %arg16[%c0_37, %c0_38] : memref<128x784xbf16, #tpu.memory_space<vmem>>, vector<128x784xbf16>
    %cst_39 = arith.constant dense<0.000000e+00> : vector<64x784xf32>
    %51 = tpu.matmul %49, %50, %cst_39 {dimension_numbers = #tpu.dot_dimension_numbers<[1], [0], [0], [1], [0, 0, 1, 1], [], []>} : vector<64x128xbf16>, vector<128x784xbf16>, vector<64x784xf32> -> vector<64x784xf32>
    %c0_40 = arith.constant 0 : index
    %c0_41 = arith.constant 0 : index
    %52 = vector.load %arg17[%c0_40, %c0_41] : memref<1x784xf32, #tpu.memory_space<vmem>>, vector<1x784xf32>
    %53 = vector.broadcast %52 : vector<1x784xf32> to vector<64x784xf32>
    %54 = arith.addf %51, %53 : vector<64x784xf32>
    %55 = arith.negf %54 : vector<64x784xf32>
    %56 = math.exp %55 : vector<64x784xf32>
    %cst_42 = arith.constant 1.000000e+00 : f32
    %57 = vector.broadcast %cst_42 : f32 to vector<64x784xf32>
    %58 = arith.addf %57, %56 : vector<64x784xf32>
    %59 = arith.divf %57, %58 : vector<64x784xf32>
    %60 = arith.truncf %59 : vector<64x784xf32> to vector<64x784xbf16>
    %c0_43 = arith.constant 0 : index
    %c0_44 = arith.constant 0 : index
    %61 = vector.load %arg19[%c0_43, %c0_44] : memref<64x784xbf16, #tpu.memory_space<vmem>>, vector<64x784xbf16>
    tpu.vector_store %arg19[%c0_43, %c0_44], %60 {strides = array<i32>} : memref<64x784xbf16, #tpu.memory_space<vmem>>, vector<64x784xbf16>,
    return
  }
  func.func @transform_0(%arg0: i32) -> (i32, i32) {
    %c0_i32 = arith.constant 0 : i32
    %c0_i32_0 = arith.constant 0 : i32
    return %arg0, %c0_i32 : i32, i32
  }
  func.func @transform_1(%arg0: i32) -> (i32, i32) {
    %c0_i32 = arith.constant 0 : i32
    %c0_i32_0 = arith.constant 0 : i32
    %c0_i32_1 = arith.constant 0 : i32
    return %c0_i32, %c0_i32_0 : i32, i32
  }
  func.func @transform_2(%arg0: i32) -> (i32, i32) {
    %c0_i32 = arith.constant 0 : i32
    %c0_i32_0 = arith.constant 0 : i32
    %c0_i32_1 = arith.constant 0 : i32
    return %c0_i32, %c0_i32_0 : i32, i32
  }
  func.func @transform_3(%arg0: i32) -> (i32, i32) {
    %c0_i32 = arith.constant 0 : i32
    %c0_i32_0 = arith.constant 0 : i32
    %c0_i32_1 = arith.constant 0 : i32
    return %c0_i32, %c0_i32_0 : i32, i32
  }
  func.func @transform_4(%arg0: i32) -> (i32, i32) {
    %c0_i32 = arith.constant 0 : i32
    %c0_i32_0 = arith.constant 0 : i32
    %c0_i32_1 = arith.constant 0 : i32
    return %c0_i32, %c0_i32_0 : i32, i32
  }
  func.func @transform_5(%arg0: i32) -> (i32, i32) {
    %c0_i32 = arith.constant 0 : i32
    %c0_i32_0 = arith.constant 0 : i32
    %c0_i32_1 = arith.constant 0 : i32
    return %c0_i32, %c0_i32_0 : i32, i32
  }
  func.func @transform_6(%arg0: i32) -> (i32, i32) {
    %c0_i32 = arith.constant 0 : i32
    %c0_i32_0 = arith.constant 0 : i32
    %c0_i32_1 = arith.constant 0 : i32
    return %c0_i32, %c0_i32_0 : i32, i32
  }
  func.func @transform_7(%arg0: i32) -> (i32, i32) {
    %c0_i32 = arith.constant 0 : i32
    %c0_i32_0 = arith.constant 0 : i32
    %c0_i32_1 = arith.constant 0 : i32
    return %c0_i32, %c0_i32_0 : i32, i32
  }
  func.func @transform_8(%arg0: i32) -> (i32, i32) {
    %c0_i32 = arith.constant 0 : i32
    %c0_i32_0 = arith.constant 0 : i32
    %c0_i32_1 = arith.constant 0 : i32
    return %c0_i32, %c0_i32_0 : i32, i32
  }
  func.func @transform_9(%arg0: i32) -> (i32, i32) {
    %c0_i32 = arith.constant 0 : i32
    %c0_i32_0 = arith.constant 0 : i32
    %c0_i32_1 = arith.constant 0 : i32
    return %c0_i32, %c0_i32_0 : i32, i32
  }
  func.func @transform_10(%arg0: i32) -> (i32, i32) {
    %c0_i32 = arith.constant 0 : i32
    %c0_i32_0 = arith.constant 0 : i32
    %c0_i32_1 = arith.constant 0 : i32
    return %c0_i32, %c0_i32_0 : i32, i32
  }
  func.func @transform_11(%arg0: i32) -> (i32, i32) {
    %c0_i32 = arith.constant 0 : i32
    %c0_i32_0 = arith.constant 0 : i32
    %c0_i32_1 = arith.constant 0 : i32
    return %c0_i32, %c0_i32_0 : i32, i32
  }
  func.func @transform_12(%arg0: i32) -> (i32, i32) {
    %c0_i32 = arith.constant 0 : i32
    %c0_i32_0 = arith.constant 0 : i32
    %c0_i32_1 = arith.constant 0 : i32
    return %c0_i32, %c0_i32_0 : i32, i32
  }
  func.func @transform_13(%arg0: i32) -> (i32, i32) {
    %c0_i32 = arith.constant 0 : i32
    %c0_i32_0 = arith.constant 0 : i32
    %c0_i32_1 = arith.constant 0 : i32
    return %c0_i32, %c0_i32_0 : i32, i32
  }
  func.func @transform_14(%arg0: i32) -> (i32, i32) {
    %c0_i32 = arith.constant 0 : i32
    %c0_i32_0 = arith.constant 0 : i32
    %c0_i32_1 = arith.constant 0 : i32
    return %c0_i32, %c0_i32_0 : i32, i32
  }
  func.func @transform_15(%arg0: i32) -> (i32, i32) {
    %c0_i32 = arith.constant 0 : i32
    %c0_i32_0 = arith.constant 0 : i32
    %c0_i32_1 = arith.constant 0 : i32
    return %c0_i32, %c0_i32_0 : i32, i32
  }
  func.func @transform_16(%arg0: i32) -> (i32, i32) {
    %c0_i32 = arith.constant 0 : i32
    %c0_i32_0 = arith.constant 0 : i32
    %c0_i32_1 = arith.constant 0 : i32
    return %c0_i32, %c0_i32_0 : i32, i32
  }
  func.func @transform_17(%arg0: i32) -> (i32, i32) {
    %c0_i32 = arith.constant 0 : i32
    %c0_i32_0 = arith.constant 0 : i32
    return %arg0, %c0_i32 : i32, i32
  }
  func.func @transform_18(%arg0: i32) -> (i32, i32) {
    %c0_i32 = arith.constant 0 : i32
    %c0_i32_0 = arith.constant 0 : i32
    return %arg0, %c0_i32 : i32, i32
  }
}

</mosaic_0001>

<llo_original>
// kernel: autoencoder_forward.1
$region0: #{autoencoder_forward.1}
  #allocation0 [shape = 'u32[]', space=smem, size = 0x4, offset = 0x4, fixed_abs, tag = 'smem constant byte address 0x4 - core index']
  #allocation1 [shape = 'u32[144,128]{1,0:T(1,128)}', space=vmem, size = 0x12000, scoped, tag = 'internal scratch']
  %s0 = inlined_call_operand.vmem [shape: bf16[256,784], index: 0, kind: input, shape index: {}]
  %s1 = inlined_call_operand.vmem [shape: bf16[784,128], index: 1, kind: input, shape index: {}]
  %s2 = inlined_call_operand.vmem [shape: f32[1,128], index: 2, kind: input, shape index: {}]
  %s3 = inlined_call_operand.vmem [shape: bf16[128,64], index: 3, kind: input, shape index: {}]
  %s4 = inlined_call_operand.vmem [shape: f32[1,64], index: 4, kind: input, shape index: {}]
  %s5 = inlined_call_operand.vmem [shape: bf16[64,12], index: 5, kind: input, shape index: {}]
  %s6 = inlined_call_operand.vmem [shape: f32[1,12], index: 6, kind: input, shape index: {}]
  %s7 = inlined_call_operand.vmem [shape: bf16[12,128], index: 7, kind: input, shape index: {}]
  %s8 = inlined_call_operand.vmem [shape: f32[1,128], index: 8, kind: input, shape index: {}]
  %s9 = inlined_call_operand.vmem [shape: bf16[128,12], index: 9, kind: input, shape index: {}]
  %s10 = inlined_call_operand.vmem [shape: f32[1,12], index: 10, kind: input, shape index: {}]
  %s11 = inlined_call_operand.vmem [shape: bf16[12,64], index: 11, kind: input, shape index: {}]
  %s12 = inlined_call_operand.vmem [shape: f32[1,64], index: 12, kind: input, shape index: {}]
  %s13 = inlined_call_operand.vmem [shape: bf16[64,128], index: 13, kind: input, shape index: {}]
  %s14 = inlined_call_operand.vmem [shape: f32[1,128], index: 14, kind: input, shape index: {}]
  %s15 = inlined_call_operand.vmem [shape: bf16[128,784], index: 15, kind: input, shape index: {}]
  %s16 = inlined_call_operand.vmem [shape: f32[1,784], index: 16, kind: input, shape index: {}]
  %s17 = inlined_call_operand.vmem [shape: f32[256,128], index: 17, kind: output, shape index: {0}]
  %s18 = inlined_call_operand.vmem [shape: bf16[256,784], index: 18, kind: output, shape index: {1}]
  %19 = xla_tuple %s17, %s18
  %s20 = sld [smem:[#allocation0]]
  $region109: #{autoencoder_forward.1} parent=0
    _
  %s22 = ssub.s32 1, %s20
  %s23 = scalar_select 0, %s22, %s20
  loop: start=0, step=1, limit=6
  $region2: #{autoencoder_forward.1} parent=0 // loop_pre_header
    _
  $region3: #{autoencoder_forward.1} parent=0 // loop_header
    %s25 = sphi 0, %s29
    %p26 = scmp.ge.s32.totalorder %s25, 6
    %s35 = sphi 0, %s37
    %s38 = sphi 0, %s35
    %s39 = sphi 0, %s38
    %s55 = sphi 0, %s39
    %s59 = sphi 0, %s59
    %s61 = sphi 0, %s59
    %s62 = sphi 0, %s61
    %s76 = sphi 0, %s62
    %s80 = sphi 0, %s80
    %s82 = sphi 0, %s80
    %s83 = sphi 0, %s82
    %s97 = sphi 0, %s83
    %s101 = sphi 0, %s101
    %s103 = sphi 0, %s101
    %s104 = sphi 0, %s103
    %s118 = sphi 0, %s104
    %s122 = sphi 0, %s122
    %s124 = sphi 0, %s122
    %s125 = sphi 0, %s124
    %s139 = sphi 0, %s125
    %s143 = sphi 0, %s143
    %s145 = sphi 0, %s143
    %s146 = sphi 0, %s145
    %s160 = sphi 0, %s146
    %s164 = sphi 0, %s164
    %s166 = sphi 0, %s164
    %s167 = sphi 0, %s166
    %s181 = sphi 0, %s167
    %s185 = sphi 0, %s185
    %s187 = sphi 0, %s185
    %s188 = sphi 0, %s187
    %s202 = sphi 0, %s188
    %s206 = sphi 0, %s206
    %s208 = sphi 0, %s206
    %s209 = sphi 0, %s208
    %s223 = sphi 0, %s209
    %s227 = sphi 0, %s227
    %s229 = sphi 0, %s227
    %s230 = sphi 0, %s229
    %s244 = sphi 0, %s230
    %s248 = sphi 0, %s248
    %s250 = sphi 0, %s248
    %s251 = sphi 0, %s250
    %s265 = sphi 0, %s251
    %s269 = sphi 0, %s269
    %s271 = sphi 0, %s269
    %s272 = sphi 0, %s271
    %s286 = sphi 0, %s272
    %s290 = sphi 0, %s290
    %s292 = sphi 0, %s290
    %s293 = sphi 0, %s292
    %s307 = sphi 0, %s293
    %s311 = sphi 0, %s311
    %s313 = sphi 0, %s311
    %s314 = sphi 0, %s313
    %s328 = sphi 0, %s314
    %s332 = sphi 0, %s332
    %s334 = sphi 0, %s332
    %s335 = sphi 0, %s334
    %s349 = sphi 0, %s335
    %s353 = sphi 0, %s353
    %s355 = sphi 0, %s353
    %s356 = sphi 0, %s355
    %s370 = sphi 0, %s356
    %s374 = sphi 0, %s374
    %s376 = sphi 0, %s374
    %s377 = sphi 0, %s376
    %s391 = sphi 0, %s377
    %s397 = sphi 0, %s399
    %s400 = sphi 0, %s397
    %s401 = sphi 0, %s400
    %s417 = sphi 0, %s401
    %s423 = sphi 0, %s425
    %s426 = sphi 0, %s423
    %s427 = sphi 0, %s426
    %s443 = sphi 0, %s427
  $region4: #{autoencoder_forward.1} parent=0 // loop_header_branch
    %28 = sbr.rel (%p26) target = $region8
  $region5: #{autoencoder_forward.1} parent=0 // loop_body
    %s30 = ssub.s32 %s25, 1
    %s31 = ssub.s32 %s25, 2
    %s32 = sadd.s32 %s25, 1
    %s33 = ssub.s32 %s25, %s32
    %p34 = scmp.eq.s32.totalorder %s33, 0
    %s36 = sadd.s32 %s35, 1
    %s37 = scalar_select %p34, %s35, %s36
    %p40 = pneg %p34
    %p41 = scmp.eq.s32.totalorder %s25, 3
    %p42 = por %p40, %p41
    %p43 = scmp.ne.s32.totalorder %s35, %s38
    %p44 = scmp.eq.s32.totalorder %s25, 0
    %p45 = por %p43, %p44
    %p46 = scmp.ne.s32.totalorder %s35, %s38
    %p47 = scmp.eq.s32.totalorder %s30, 3
    %p48 = por %p46, %p47
    %p49 = scmp.ne.s32.totalorder %s38, %s39
    %p50 = scmp.eq.s32.totalorder %s30, 0
    %p51 = por %p49, %p50
    %p52 = scmp.ne.s32.totalorder %s38, %s39
    %p53 = scmp.eq.s32.totalorder %s31, 3
    %p54 = por %p52, %p53
    %p56 = scmp.ne.s32.totalorder %s39, %s55
    %p57 = scmp.eq.s32.totalorder %s31, 0
    %p58 = por %p56, %p57
    %s60 = sadd.s32 %s59, 1
    %p63 = scmp.eq.s32.totalorder %s25, 3
    %p64 = scmp.ne.s32.totalorder %s59, %s61
    %p65 = scmp.eq.s32.totalorder %s25, 0
    %p66 = por %p64, %p65
    %p67 = scmp.ne.s32.totalorder %s59, %s61
    %p68 = scmp.eq.s32.totalorder %s30, 3
    %p69 = por %p67, %p68
    %p70 = scmp.ne.s32.totalorder %s61, %s62
    %p71 = scmp.eq.s32.totalorder %s30, 0
    %p72 = por %p70, %p71
    %p73 = scmp.ne.s32.totalorder %s61, %s62
    %p74 = scmp.eq.s32.totalorder %s31, 3
    %p75 = por %p73, %p74
    %p77 = scmp.ne.s32.totalorder %s62, %s76
    %p78 = scmp.eq.s32.totalorder %s31, 0
    %p79 = por %p77, %p78
    %s81 = sadd.s32 %s80, 1
    %p84 = scmp.eq.s32.totalorder %s25, 3
    %p85 = scmp.ne.s32.totalorder %s80, %s82
    %p86 = scmp.eq.s32.totalorder %s25, 0
    %p87 = por %p85, %p86
    %p88 = scmp.ne.s32.totalorder %s80, %s82
    %p89 = scmp.eq.s32.totalorder %s30, 3
    %p90 = por %p88, %p89
    %p91 = scmp.ne.s32.totalorder %s82, %s83
    %p92 = scmp.eq.s32.totalorder %s30, 0
    %p93 = por %p91, %p92
    %p94 = scmp.ne.s32.totalorder %s82, %s83
    %p95 = scmp.eq.s32.totalorder %s31, 3
    %p96 = por %p94, %p95
    %p98 = scmp.ne.s32.totalorder %s83, %s97
    %p99 = scmp.eq.s32.totalorder %s31, 0
    %p100 = por %p98, %p99
    %s102 = sadd.s32 %s101, 1
    %p105 = scmp.eq.s32.totalorder %s25, 3
    %p106 = scmp.ne.s32.totalorder %s101, %s103
    %p107 = scmp.eq.s32.totalorder %s25, 0
    %p108 = por %p106, %p107
    %p109 = scmp.ne.s32.totalorder %s101, %s103
    %p110 = scmp.eq.s32.totalorder %s30, 3
    %p111 = por %p109, %p110
    %p112 = scmp.ne.s32.totalorder %s103, %s104
    %p113 = scmp.eq.s32.totalorder %s30, 0
    %p114 = por %p112, %p113
    %p115 = scmp.ne.s32.totalorder %s103, %s104
    %p116 = scmp.eq.s32.totalorder %s31, 3
    %p117 = por %p115, %p116
    %p119 = scmp.ne.s32.totalorder %s104, %s118
    %p120 = scmp.eq.s32.totalorder %s31, 0
    %p121 = por %p119, %p120
    %s123 = sadd.s32 %s122, 1
    %p126 = scmp.eq.s32.totalorder %s25, 3
    %p127 = scmp.ne.s32.totalorder %s122, %s124
    %p128 = scmp.eq.s32.totalorder %s25, 0
    %p129 = por %p127, %p128
    %p130 = scmp.ne.s32.totalorder %s122, %s124
    %p131 = scmp.eq.s32.totalorder %s30, 3
    %p132 = por %p130, %p131
    %p133 = scmp.ne.s32.totalorder %s124, %s125
    %p134 = scmp.eq.s32.totalorder %s30, 0
    %p135 = por %p133, %p134
    %p136 = scmp.ne.s32.totalorder %s124, %s125
    %p137 = scmp.eq.s32.totalorder %s31, 3
    %p138 = por %p136, %p137
    %p140 = scmp.ne.s32.totalorder %s125, %s139
    %p141 = scmp.eq.s32.totalorder %s31, 0
    %p142 = por %p140, %p141
    %s144 = sadd.s32 %s143, 1
    %p147 = scmp.eq.s32.totalorder %s25, 3
    %p148 = scmp.ne.s32.totalorder %s143, %s145
    %p149 = scmp.eq.s32.totalorder %s25, 0
    %p150 = por %p148, %p149
    %p151 = scmp.ne.s32.totalorder %s143, %s145
    %p152 = scmp.eq.s32.totalorder %s30, 3
    %p153 = por %p151, %p152
    %p154 = scmp.ne.s32.totalorder %s145, %s146
    %p155 = scmp.eq.s32.totalorder %s30, 0
    %p156 = por %p154, %p155
    %p157 = scmp.ne.s32.totalorder %s145, %s146
    %p158 = scmp.eq.s32.totalorder %s31, 3
    %p159 = por %p157, %p158
    %p161 = scmp.ne.s32.totalorder %s146, %s160
    %p162 = scmp.eq.s32.totalorder %s31, 0
    %p163 = por %p161, %p162
    %s165 = sadd.s32 %s164, 1
    %p168 = scmp.eq.s32.totalorder %s25, 3
    %p169 = scmp.ne.s32.totalorder %s164, %s166
    %p170 = scmp.eq.s32.totalorder %s25, 0
    %p171 = por %p169, %p170
    %p172 = scmp.ne.s32.totalorder %s164, %s166
    %p173 = scmp.eq.s32.totalorder %s30, 3
    %p174 = por %p172, %p173
    %p175 = scmp.ne.s32.totalorder %s166, %s167
    %p176 = scmp.eq.s32.totalorder %s30, 0
    %p177 = por %p175, %p176
    %p178 = scmp.ne.s32.totalorder %s166, %s167
    %p179 = scmp.eq.s32.totalorder %s31, 3
    %p180 = por %p178, %p179
    %p182 = scmp.ne.s32.totalorder %s167, %s181
    %p183 = scmp.eq.s32.totalorder %s31, 0
    %p184 = por %p182, %p183
    %s186 = sadd.s32 %s185, 1
    %p189 = scmp.eq.s32.totalorder %s25, 3
    %p190 = scmp.ne.s32.totalorder %s185, %s187
    %p191 = scmp.eq.s32.totalorder %s25, 0
    %p192 = por %p190, %p191
    %p193 = scmp.ne.s32.totalorder %s185, %s187
    %p194 = scmp.eq.s32.totalorder %s30, 3
    %p195 = por %p193, %p194
    %p196 = scmp.ne.s32.totalorder %s187, %s188
    %p197 = scmp.eq.s32.totalorder %s30, 0
    %p198 = por %p196, %p197
    %p199 = scmp.ne.s32.totalorder %s187, %s188
    %p200 = scmp.eq.s32.totalorder %s31, 3
    %p201 = por %p199, %p200
    %p203 = scmp.ne.s32.totalorder %s188, %s202
    %p204 = scmp.eq.s32.totalorder %s31, 0
    %p205 = por %p203, %p204
    %s207 = sadd.s32 %s206, 1
    %p210 = scmp.eq.s32.totalorder %s25, 3
    %p211 = scmp.ne.s32.totalorder %s206, %s208
    %p212 = scmp.eq.s32.totalorder %s25, 0
    %p213 = por %p211, %p212
    %p214 = scmp.ne.s32.totalorder %s206, %s208
    %p215 = scmp.eq.s32.totalorder %s30, 3
    %p216 = por %p214, %p215
    %p217 = scmp.ne.s32.totalorder %s208, %s209
    %p218 = scmp.eq.s32.totalorder %s30, 0
    %p219 = por %p217, %p218
    %p220 = scmp.ne.s32.totalorder %s208, %s209
    %p221 = scmp.eq.s32.totalorder %s31, 3
    %p222 = por %p220, %p221
    %p224 = scmp.ne.s32.totalorder %s209, %s223
    %p225 = scmp.eq.s32.totalorder %s31, 0
    %p226 = por %p224, %p225
    %s228 = sadd.s32 %s227, 1
    %p231 = scmp.eq.s32.totalorder %s25, 3
    %p232 = scmp.ne.s32.totalorder %s227, %s229
    %p233 = scmp.eq.s32.totalorder %s25, 0
    %p234 = por %p232, %p233
    %p235 = scmp.ne.s32.totalorder %s227, %s229
    %p236 = scmp.eq.s32.totalorder %s30, 3
    %p237 = por %p235, %p236
    %p238 = scmp.ne.s32.totalorder %s229, %s230
    %p239 = scmp.eq.s32.totalorder %s30, 0
    %p240 = por %p238, %p239
    %p241 = scmp.ne.s32.totalorder %s229, %s230
    %p242 = scmp.eq.s32.totalorder %s31, 3
    %p243 = por %p241, %p242
    %p245 = scmp.ne.s32.totalorder %s230, %s244
    %p246 = scmp.eq.s32.totalorder %s31, 0
    %p247 = por %p245, %p246
    %s249 = sadd.s32 %s248, 1
    %p252 = scmp.eq.s32.totalorder %s25, 3
    %p253 = scmp.ne.s32.totalorder %s248, %s250
    %p254 = scmp.eq.s32.totalorder %s25, 0
    %p255 = por %p253, %p254
    %p256 = scmp.ne.s32.totalorder %s248, %s250
    %p257 = scmp.eq.s32.totalorder %s30, 3
    %p258 = por %p256, %p257
    %p259 = scmp.ne.s32.totalorder %s250, %s251
    %p260 = scmp.eq.s32.totalorder %s30, 0
    %p261 = por %p259, %p260
    %p262 = scmp.ne.s32.totalorder %s250, %s251
    %p263 = scmp.eq.s32.totalorder %s31, 3
    %p264 = por %p262, %p263
    %p266 = scmp.ne.s32.totalorder %s251, %s265
    %p267 = scmp.eq.s32.totalorder %s31, 0
    %p268 = por %p266, %p267
    %s270 = sadd.s32 %s269, 1
    %p273 = scmp.eq.s32.totalorder %s25, 3
    %p274 = scmp.ne.s32.totalorder %s269, %s271
    %p275 = scmp.eq.s32.totalorder %s25, 0
    %p276 = por %p274, %p275
    %p277 = scmp.ne.s32.totalorder %s269, %s271
    %p278 = scmp.eq.s32.totalorder %s30, 3
    %p279 = por %p277, %p278
    %p280 = scmp.ne.s32.totalorder %s271, %s272
    %p281 = scmp.eq.s32.totalorder %s30, 0
    %p282 = por %p280, %p281
    %p283 = scmp.ne.s32.totalorder %s271, %s272
    %p284 = scmp.eq.s32.totalorder %s31, 3
    %p285 = por %p283, %p284
    %p287 = scmp.ne.s32.totalorder %s272, %s286
    %p288 = scmp.eq.s32.totalorder %s31, 0
    %p289 = por %p287, %p288
    %s291 = sadd.s32 %s290, 1
    %p294 = scmp.eq.s32.totalorder %s25, 3
    %p295 = scmp.ne.s32.totalorder %s290, %s292
    %p296 = scmp.eq.s32.totalorder %s25, 0
    %p297 = por %p295, %p296
    %p298 = scmp.ne.s32.totalorder %s290, %s292
    %p299 = scmp.eq.s32.totalorder %s30, 3
    %p300 = por %p298, %p299
    %p301 = scmp.ne.s32.totalorder %s292, %s293
    %p302 = scmp.eq.s32.totalorder %s30, 0
    %p303 = por %p301, %p302
    %p304 = scmp.ne.s32.totalorder %s292, %s293
    %p305 = scmp.eq.s32.totalorder %s31, 3
    %p306 = por %p304, %p305
    %p308 = scmp.ne.s32.totalorder %s293, %s307
    %p309 = scmp.eq.s32.totalorder %s31, 0
    %p310 = por %p308, %p309
    %s312 = sadd.s32 %s311, 1
    %p315 = scmp.eq.s32.totalorder %s25, 3
    %p316 = scmp.ne.s32.totalorder %s311, %s313
    %p317 = scmp.eq.s32.totalorder %s25, 0
    %p318 = por %p316, %p317
    %p319 = scmp.ne.s32.totalorder %s311, %s313
    %p320 = scmp.eq.s32.totalorder %s30, 3
    %p321 = por %p319, %p320
    %p322 = scmp.ne.s32.totalorder %s313, %s314
    %p323 = scmp.eq.s32.totalorder %s30, 0
    %p324 = por %p322, %p323
    %p325 = scmp.ne.s32.totalorder %s313, %s314
    %p326 = scmp.eq.s32.totalorder %s31, 3
    %p327 = por %p325, %p326
    %p329 = scmp.ne.s32.totalorder %s314, %s328
    %p330 = scmp.eq.s32.totalorder %s31, 0
    %p331 = por %p329, %p330
    %s333 = sadd.s32 %s332, 1
    %p336 = scmp.eq.s32.totalorder %s25, 3
    %p337 = scmp.ne.s32.totalorder %s332, %s334
    %p338 = scmp.eq.s32.totalorder %s25, 0
    %p339 = por %p337, %p338
    %p340 = scmp.ne.s32.totalorder %s332, %s334
    %p341 = scmp.eq.s32.totalorder %s30, 3
    %p342 = por %p340, %p341
    %p343 = scmp.ne.s32.totalorder %s334, %s335
    %p344 = scmp.eq.s32.totalorder %s30, 0
    %p345 = por %p343, %p344
    %p346 = scmp.ne.s32.totalorder %s334, %s335
    %p347 = scmp.eq.s32.totalorder %s31, 3
    %p348 = por %p346, %p347
    %p350 = scmp.ne.s32.totalorder %s335, %s349
    %p351 = scmp.eq.s32.totalorder %s31, 0
    %p352 = por %p350, %p351
    %s354 = sadd.s32 %s353, 1
    %p357 = scmp.eq.s32.totalorder %s25, 3
    %p358 = scmp.ne.s32.totalorder %s353, %s355
    %p359 = scmp.eq.s32.totalorder %s25, 0
    %p360 = por %p358, %p359
    %p361 = scmp.ne.s32.totalorder %s353, %s355
    %p362 = scmp.eq.s32.totalorder %s30, 3
    %p363 = por %p361, %p362
    %p364 = scmp.ne.s32.totalorder %s355, %s356
    %p365 = scmp.eq.s32.totalorder %s30, 0
    %p366 = por %p364, %p365
    %p367 = scmp.ne.s32.totalorder %s355, %s356
    %p368 = scmp.eq.s32.totalorder %s31, 3
    %p369 = por %p367, %p368
    %p371 = scmp.ne.s32.totalorder %s356, %s370
    %p372 = scmp.eq.s32.totalorder %s31, 0
    %p373 = por %p371, %p372
    %s375 = sadd.s32 %s374, 1
    %p378 = scmp.eq.s32.totalorder %s25, 3
    %p379 = scmp.ne.s32.totalorder %s374, %s376
    %p380 = scmp.eq.s32.totalorder %s25, 0
    %p381 = por %p379, %p380
    %p382 = scmp.ne.s32.totalorder %s374, %s376
    %p383 = scmp.eq.s32.totalorder %s30, 3
    %p384 = por %p382, %p383
    %p385 = scmp.ne.s32.totalorder %s376, %s377
    %p386 = scmp.eq.s32.totalorder %s30, 0
    %p387 = por %p385, %p386
    %p388 = scmp.ne.s32.totalorder %s376, %s377
    %p389 = scmp.eq.s32.totalorder %s31, 3
    %p390 = por %p388, %p389
    %p392 = scmp.ne.s32.totalorder %s377, %s391
    %p393 = scmp.eq.s32.totalorder %s31, 0
    %p394 = por %p392, %p393
    %s395 = ssub.s32 %s25, %s32
    %p396 = scmp.eq.s32.totalorder %s395, 0
    %s398 = sadd.s32 %s397, 1
    %s399 = scalar_select %p396, %s397, %s398
    %p402 = pneg %p396
    %p403 = scmp.eq.s32.totalorder %s25, 3
    %p404 = por %p402, %p403
    %p405 = scmp.ne.s32.totalorder %s397, %s400
    %p406 = scmp.eq.s32.totalorder %s25, 0
    %p407 = por %p405, %p406
    %p408 = scmp.ne.s32.totalorder %s397, %s400
    %p409 = scmp.eq.s32.totalorder %s30, 3
    %p410 = por %p408, %p409
    %p411 = scmp.ne.s32.totalorder %s400, %s401
    %p412 = scmp.eq.s32.totalorder %s30, 0
    %p413 = por %p411, %p412
    %p414 = scmp.ne.s32.totalorder %s400, %s401
    %p415 = scmp.eq.s32.totalorder %s31, 3
    %p416 = por %p414, %p415
    %p418 = scmp.ne.s32.totalorder %s401, %s417
    %p419 = scmp.eq.s32.totalorder %s31, 0
    %p420 = por %p418, %p419
    %s421 = ssub.s32 %s25, %s32
    %p422 = scmp.eq.s32.totalorder %s421, 0
    %s424 = sadd.s32 %s423, 1
    %s425 = scalar_select %p422, %s423, %s424
    %p428 = pneg %p422
    %p429 = scmp.eq.s32.totalorder %s25, 3
    %p430 = por %p428, %p429
    %p431 = scmp.ne.s32.totalorder %s423, %s426
    %p432 = scmp.eq.s32.totalorder %s25, 0
    %p433 = por %p431, %p432
    %p434 = scmp.ne.s32.totalorder %s423, %s426
    %p435 = scmp.eq.s32.totalorder %s30, 3
    %p436 = por %p434, %p435
    %p437 = scmp.ne.s32.totalorder %s426, %s427
    %p438 = scmp.eq.s32.totalorder %s30, 0
    %p439 = por %p437, %p438
    %p440 = scmp.ne.s32.totalorder %s426, %s427
    %p441 = scmp.eq.s32.totalorder %s31, 3
    %p442 = por %p440, %p441
    %p444 = scmp.ne.s32.totalorder %s427, %s443
    %p445 = scmp.eq.s32.totalorder %s31, 0
    %p446 = por %p444, %p445
    %p447 = scmp.le.s32.totalorder 1, %s25
    %p448 = scmp.lt.s32.totalorder %s25, 5
    %p449 = pnand %p447, %p448
    %p450 = pneg %p449
    // Predicated region
    $region9: #{autoencoder_forward.1} parent=5 // pred_check
      _
    $region10: #{autoencoder_forward.1} parent=5 // pred_check_branch
      %452 = sbr.rel (%p449) target = $region12
    $region11: #{autoencoder_forward.1} parent=5 // pred_region
      %s453 = ssub.s32 %s25, 1
      // Predicated region
      $region13: #{autoencoder_forward.1} parent=11 // pred_check
        %p454 = pneg %p72
      $region14: #{autoencoder_forward.1} parent=11 // pred_check_branch
        %456 = sbr.rel (%p454) target = $region16
      $region15: #{autoencoder_forward.1} parent=11 // pred_region
        _
      $region16: #{autoencoder_forward.1} parent=11 // pred_fallthru
        _
      // Predicated region
      $region17: #{autoencoder_forward.1} parent=11 // pred_check
        %p457 = pneg %p93
      $region18: #{autoencoder_forward.1} parent=11 // pred_check_branch
        %459 = sbr.rel (%p457) target = $region20
      $region19: #{autoencoder_forward.1} parent=11 // pred_region
        _
      $region20: #{autoencoder_forward.1} parent=11 // pred_fallthru
        _
      // Predicated region
      $region21: #{autoencoder_forward.1} parent=11 // pred_check
        %p460 = pneg %p114
      $region22: #{autoencoder_forward.1} parent=11 // pred_check_branch
        %462 = sbr.rel (%p460) target = $region24
      $region23: #{autoencoder_forward.1} parent=11 // pred_region
        _
      $region24: #{autoencoder_forward.1} parent=11 // pred_fallthru
        _
      // Predicated region
      $region25: #{autoencoder_forward.1} parent=11 // pred_check
        %p463 = pneg %p135
      $region26: #{autoencoder_forward.1} parent=11 // pred_check_branch
        %465 = sbr.rel (%p463) target = $region28
      $region27: #{autoencoder_forward.1} parent=11 // pred_region
        _
      $region28: #{autoencoder_forward.1} parent=11 // pred_fallthru
        _
      // Predicated region
      $region29: #{autoencoder_forward.1} parent=11 // pred_check
        %p466 = pneg %p156
      $region30: #{autoencoder_forward.1} parent=11 // pred_check_branch
        %468 = sbr.rel (%p466) target = $region32
      $region31: #{autoencoder_forward.1} parent=11 // pred_region
        _
      $region32: #{autoencoder_forward.1} parent=11 // pred_fallthru
        _
      // Predicated region
      $region33: #{autoencoder_forward.1} parent=11 // pred_check
        %p469 = pneg %p177
      $region34: #{autoencoder_forward.1} parent=11 // pred_check_branch
        %471 = sbr.rel (%p469) target = $region36
      $region35: #{autoencoder_forward.1} parent=11 // pred_region
        _
      $region36: #{autoencoder_forward.1} parent=11 // pred_fallthru
        _
      // Predicated region
      $region37: #{autoencoder_forward.1} parent=11 // pred_check
        %p472 = pneg %p198
      $region38: #{autoencoder_forward.1} parent=11 // pred_check_branch
        %474 = sbr.rel (%p472) target = $region40
      $region39: #{autoencoder_forward.1} parent=11 // pred_region
        _
      $region40: #{autoencoder_forward.1} parent=11 // pred_fallthru
        _
      // Predicated region
      $region41: #{autoencoder_forward.1} parent=11 // pred_check
        %p475 = pneg %p219
      $region42: #{autoencoder_forward.1} parent=11 // pred_check_branch
        %477 = sbr.rel (%p475) target = $region44
      $region43: #{autoencoder_forward.1} parent=11 // pred_region
        _
      $region44: #{autoencoder_forward.1} parent=11 // pred_fallthru
        _
      // Predicated region
      $region45: #{autoencoder_forward.1} parent=11 // pred_check
        %p478 = pneg %p240
      $region46: #{autoencoder_forward.1} parent=11 // pred_check_branch
        %480 = sbr.rel (%p478) target = $region48
      $region47: #{autoencoder_forward.1} parent=11 // pred_region
        _
      $region48: #{autoencoder_forward.1} parent=11 // pred_fallthru
        _
      // Predicated region
      $region49: #{autoencoder_forward.1} parent=11 // pred_check
        %p481 = pneg %p261
      $region50: #{autoencoder_forward.1} parent=11 // pred_check_branch
        %483 = sbr.rel (%p481) target = $region52
      $region51: #{autoencoder_forward.1} parent=11 // pred_region
        _
      $region52: #{autoencoder_forward.1} parent=11 // pred_fallthru
        _
      // Predicated region
      $region53: #{autoencoder_forward.1} parent=11 // pred_check
        %p484 = pneg %p282
      $region54: #{autoencoder_forward.1} parent=11 // pred_check_branch
        %486 = sbr.rel (%p484) target = $region56
      $region55: #{autoencoder_forward.1} parent=11 // pred_region
        _
      $region56: #{autoencoder_forward.1} parent=11 // pred_fallthru
        _
      // Predicated region
      $region57: #{autoencoder_forward.1} parent=11 // pred_check
        %p487 = pneg %p303
      $region58: #{autoencoder_forward.1} parent=11 // pred_check_branch
        %489 = sbr.rel (%p487) target = $region60
      $region59: #{autoencoder_forward.1} parent=11 // pred_region
        _
      $region60: #{autoencoder_forward.1} parent=11 // pred_fallthru
        _
      // Predicated region
      $region61: #{autoencoder_forward.1} parent=11 // pred_check
        %p490 = pneg %p324
      $region62: #{autoencoder_forward.1} parent=11 // pred_check_branch
        %492 = sbr.rel (%p490) target = $region64
      $region63: #{autoencoder_forward.1} parent=11 // pred_region
        _
      $region64: #{autoencoder_forward.1} parent=11 // pred_fallthru
        _
      // Predicated region
      $region65: #{autoencoder_forward.1} parent=11 // pred_check
        %p493 = pneg %p345
      $region66: #{autoencoder_forward.1} parent=11 // pred_check_branch
        %495 = sbr.rel (%p493) target = $region68
      $region67: #{autoencoder_forward.1} parent=11 // pred_region
        _
      $region68: #{autoencoder_forward.1} parent=11 // pred_fallthru
        _
      // Predicated region
      $region69: #{autoencoder_forward.1} parent=11 // pred_check
        %p496 = pneg %p366
      $region70: #{autoencoder_forward.1} parent=11 // pred_check_branch
        %498 = sbr.rel (%p496) target = $region72
      $region71: #{autoencoder_forward.1} parent=11 // pred_region
        _
      $region72: #{autoencoder_forward.1} parent=11 // pred_fallthru
        _
      // Predicated region
      $region73: #{autoencoder_forward.1} parent=11 // pred_check
        %p499 = pneg %p387
      $region74: #{autoencoder_forward.1} parent=11 // pred_check_branch
        %501 = sbr.rel (%p499) target = $region76
      $region75: #{autoencoder_forward.1} parent=11 // pred_region
        _
      $region76: #{autoencoder_forward.1} parent=11 // pred_fallthru
        _
    $region12: #{autoencoder_forward.1} parent=5 // pred_fallthru
      _
    %p502 = scmp.lt.s32.totalorder %s25, 4
    // Predicated region
    $region77: #{autoencoder_forward.1} parent=5 // pred_check
      %p503 = pneg %p502
    $region78: #{autoencoder_forward.1} parent=5 // pred_check_branch
      %505 = sbr.rel (%p503) target = $region80
    $region79: #{autoencoder_forward.1} parent=5 // pred_region
      // Predicated region
      $region81: #{autoencoder_forward.1} parent=79 // pred_check
        %p506 = pneg %p45
      $region82: #{autoencoder_forward.1} parent=79 // pred_check_branch
        %508 = sbr.rel (%p506) target = $region84
      $region83: #{autoencoder_forward.1} parent=79 // pred_region
        %s509 = smul.u32 8, %s25
        %p510 = scmp.lt.s32.totalorder %s509, 31
        %s511 = scalar_select %p510, %s509, 31
        %s512 = smul.addr %s511, 7
        %s513 = smul.addr %s512, 4
        %s514 = scalar_lea.vmem %s0, %s513
        %s515 = smul.u32 8, %s25
      $region84: #{autoencoder_forward.1} parent=79 // pred_fallthru
        _
    $region80: #{autoencoder_forward.1} parent=5 // pred_fallthru
      _
    %p516 = scmp.le.s32.totalorder 1, %s25
    %p517 = scmp.lt.s32.totalorder %s25, 5
    %p518 = pnand %p516, %p517
    %p519 = pneg %p518
    // Predicated region
    $region85: #{autoencoder_forward.1} parent=5 // pred_check
      _
    $region86: #{autoencoder_forward.1} parent=5 // pred_check_branch
      %521 = sbr.rel (%p518) target = $region88
    $region87: #{autoencoder_forward.1} parent=5 // pred_region
      %s522 = ssub.s32 %s25, 1
      %s523 = smul.u32 8, %s30
      %p524 = scmp.lt.s32.totalorder %s523, 31
      %s525 = scalar_select %p524, %s523, 31
      %s526 = smul.addr %s525, 7
      %s527 = smul.addr %s526, 4
      %s528 = scalar_lea.vmem %s0, %s527
      %p529 = pneg %p51
      %p530 = pneg %p48
      %p531 = pneg %p72
      %p532 = pneg %p69
      %p533 = pneg %p93
      %p534 = pneg %p90
      %p535 = pneg %p114
      %p536 = pneg %p111
      %p537 = pneg %p135
      %p538 = pneg %p132
      %p539 = pneg %p156
      %p540 = pneg %p153
      %p541 = pneg %p177
      %p542 = pneg %p174
      %p543 = pneg %p198
      %p544 = pneg %p195
      %p545 = pneg %p219
      %p546 = pneg %p216
      %p547 = pneg %p240
      %p548 = pneg %p237
      %p549 = pneg %p261
      %p550 = pneg %p258
      %p551 = pneg %p282
      %p552 = pneg %p279
      %p553 = pneg %p303
      %p554 = pneg %p300
      %p555 = pneg %p324
      %p556 = pneg %p321
      %p557 = pneg %p345
      %p558 = pneg %p342
      %p559 = pneg %p366
      %p560 = pneg %p363
      %p561 = pneg %p387
      %p562 = pneg %p384
      %p563 = pneg %p413
      %p564 = pneg %p410
      %s565 = smul.u32 8, %s30
      %p566 = scmp.lt.s32.totalorder %s565, 31
      %s567 = scalar_select %p566, %s565, 31
      %s568 = smul.addr %s567, 8
      %s569 = scalar_lea.vmem %s17, %s568
      %p570 = pneg %p439
      %p571 = pneg %p436
      %s572 = smul.u32 8, %s30
      %p573 = scmp.lt.s32.totalorder %s572, 31
      %s574 = scalar_select %p573, %s572, 31
      %s575 = smul.addr %s574, 7
      %s576 = smul.addr %s575, 4
      %s577 = scalar_lea.vmem %s18, %s576
      %s578 = smul.u32 8, %s30
      %p579 = scmp.lt.s32.totalorder %s578, 31
      %s580 = scalar_select %p579, %s578, 31
      %s581 = smul.addr %s580, 7
      %s582 = smul.addr %s581, 4
      %s583 = scalar_lea.vmem %s0, %s582
      %s584 = smul.u32 8, %s30
      %s585 = smul.u32 8, %s30
      %p586 = scmp.lt.s32.totalorder %s585, 31
      %s587 = scalar_select %p586, %s585, 31
      %s588 = smul.addr %s587, 8
      %s589 = scalar_lea.vmem %s17, %s588
      %s590 = smul.u32 8, %s30
      %s591 = smul.u32 8, %s30
      %p592 = scmp.lt.s32.totalorder %s591, 31
      %s593 = scalar_select %p592, %s591, 31
      %s594 = smul.addr %s593, 7
      %s595 = smul.addr %s594, 4
      %s596 = scalar_lea.vmem %s18, %s595
      %s597 = smul.u32 8, %s30
      %v599 = vld [vmem:[%s583] sm:$0xff]
      %v600 = vld [vmem:[%s583 + $0x8] sm:$0xff]
      %v601 = vld [vmem:[%s583 + $0x10] sm:$0xff]
      %v602 = vld [vmem:[%s583 + $0x18] sm:$0xf]
      %v603 = vld [vmem:[%s583 + $0x1c] sm:$0xff]
      %v604 = vld [vmem:[%s583 + $0x24] sm:$0xff]
      %v605 = vld [vmem:[%s583 + $0x2c] sm:$0xff]
      %v606 = vld [vmem:[%s583 + $0x34] sm:$0xf]
      %v607 = vld [vmem:[%s583 + $0x38] sm:$0xff]
      %v608 = vld [vmem:[%s583 + $0x40] sm:$0xff]
      %v609 = vld [vmem:[%s583 + $0x48] sm:$0xff]
      %v610 = vld [vmem:[%s583 + $0x50] sm:$0xf]
      %v611 = vld [vmem:[%s583 + $0x54] sm:$0xff]
      %v612 = vld [vmem:[%s583 + $0x5c] sm:$0xff]
      %v613 = vld [vmem:[%s583 + $0x64] sm:$0xff]
      %v614 = vld [vmem:[%s583 + $0x6c] sm:$0xf]
      %v615 = vld [vmem:[%s583 + $0x70] sm:$0xff]
      %v616 = vld [vmem:[%s583 + $0x78] sm:$0xff]
      %v617 = vld [vmem:[%s583 + $0x80] sm:$0xff]
      %v618 = vld [vmem:[%s583 + $0x88] sm:$0xf]
      %v619 = vld [vmem:[%s583 + $0x8c] sm:$0xff]
      %v620 = vld [vmem:[%s583 + $0x94] sm:$0xff]
      %v621 = vld [vmem:[%s583 + $0x9c] sm:$0xff]
      %v622 = vld [vmem:[%s583 + $0xa4] sm:$0xf]
      %v623 = vld [vmem:[%s583 + $0xa8] sm:$0xff]
      %v624 = vld [vmem:[%s583 + $0xb0] sm:$0xff]
      %v625 = vld [vmem:[%s583 + $0xb8] sm:$0xff]
      %v626 = vld [vmem:[%s583 + $0xc0] sm:$0xf]
      %v627 = vld [vmem:[%s583 + $0xc4] sm:$0xff]
      %v628 = vld [vmem:[%s583 + $0xcc] sm:$0xff]
      %v629 = vld [vmem:[%s583 + $0xd4] sm:$0xff]
      %v630 = vld [vmem:[%s583 + $0xdc] sm:$0xf]
      %v631 = vld [vmem:[%s1] sm:$0xf]
      %v632 = vld [vmem:[%s1 + $0x4] sm:$0xf]
      %v633 = vld [vmem:[%s1 + $0x8] sm:$0xf]
      %v634 = vld [vmem:[%s1 + $0xc] sm:$0xf]
      %v635 = vld [vmem:[%s1 + $0x10] sm:$0xf]
      %v636 = vld [vmem:[%s1 + $0x14] sm:$0xf]
      %v637 = vld [vmem:[%s1 + $0x18] sm:$0xf]
      %v638 = vld [vmem:[%s1 + $0x1c] sm:$0xf]
      %v639 = vld [vmem:[%s1 + $0x20] sm:$0xf]
      %v640 = vld [vmem:[%s1 + $0x24] sm:$0xf]
      %v641 = vld [vmem:[%s1 + $0x28] sm:$0xf]
      %v642 = vld [vmem:[%s1 + $0x2c] sm:$0xf]
      %v643 = vld [vmem:[%s1 + $0x30] sm:$0xf]
      %v644 = vld [vmem:[%s1 + $0x34] sm:$0xf]
      %v645 = vld [vmem:[%s1 + $0x38] sm:$0xf]
      %v646 = vld [vmem:[%s1 + $0x3c] sm:$0xf]
      %v647 = vld [vmem:[%s1 + $0x40] sm:$0xf]
      %v648 = vld [vmem:[%s1 + $0x44] sm:$0xf]
      %v649 = vld [vmem:[%s1 + $0x48] sm:$0xf]
      %v650 = vld [vmem:[%s1 + $0x4c] sm:$0xf]
      %v651 = vld [vmem:[%s1 + $0x50] sm:$0xf]
      %v652 = vld [vmem:[%s1 + $0x54] sm:$0xf]
      %v653 = vld [vmem:[%s1 + $0x58] sm:$0xf]
      %v654 = vld [vmem:[%s1 + $0x5c] sm:$0xf]
      %v655 = vld [vmem:[%s1 + $0x60] sm:$0xf]
      %v656 = vld [vmem:[%s1 + $0x64] sm:$0xf]
      %v657 = vld [vmem:[%s1 + $0x68] sm:$0xf]
      %v658 = vld [vmem:[%s1 + $0x6c] sm:$0xf]
      %v659 = vld [vmem:[%s1 + $0x70] sm:$0xf]
      %v660 = vld [vmem:[%s1 + $0x74] sm:$0xf]
      %v661 = vld [vmem:[%s1 + $0x78] sm:$0xf]
      %v662 = vld [vmem:[%s1 + $0x7c] sm:$0xf]
      %v663 = vld [vmem:[%s1 + $0x80] sm:$0xf]
      %v664 = vld [vmem:[%s1 + $0x84] sm:$0xf]
      %v665 = vld [vmem:[%s1 + $0x88] sm:$0xf]
      %v666 = vld [vmem:[%s1 + $0x8c] sm:$0xf]
      %v667 = vld [vmem:[%s1 + $0x90] sm:$0xf]
      %v668 = vld [vmem:[%s1 + $0x94] sm:$0xf]
      %v669 = vld [vmem:[%s1 + $0x98] sm:$0xf]
      %v670 = vld [vmem:[%s1 + $0x9c] sm:$0xf]
      %v671 = vld [vmem:[%s1 + $0xa0] sm:$0xf]
      %v672 = vld [vmem:[%s1 + $0xa4] sm:$0xf]
      %v673 = vld [vmem:[%s1 + $0xa8] sm:$0xf]
      %v674 = vld [vmem:[%s1 + $0xac] sm:$0xf]
      %v675 = vld [vmem:[%s1 + $0xb0] sm:$0xf]
      %v676 = vld [vmem:[%s1 + $0xb4] sm:$0xf]
      %v677 = vld [vmem:[%s1 + $0xb8] sm:$0xf]
      %v678 = vld [vmem:[%s1 + $0xbc] sm:$0xf]
      %v679 = vld [vmem:[%s1 + $0xc0] sm:$0xf]
      %v680 = vld [vmem:[%s1 + $0xc4] sm:$0xf]
      %v681 = vld [vmem:[%s1 + $0xc8] sm:$0xf]
      %v682 = vld [vmem:[%s1 + $0xcc] sm:$0xf]
      %v683 = vld [vmem:[%s1 + $0xd0] sm:$0xf]
      %v684 = vld [vmem:[%s1 + $0xd4] sm:$0xf]
      %v685 = vld [vmem:[%s1 + $0xd8] sm:$0xf]
      %v686 = vld [vmem:[%s1 + $0xdc] sm:$0xf]
      %v687 = vld [vmem:[%s1 + $0xe0] sm:$0xf]
      %v688 = vld [vmem:[%s1 + $0xe4] sm:$0xf]
      %v689 = vld [vmem:[%s1 + $0xe8] sm:$0xf]
      %v690 = vld [vmem:[%s1 + $0xec] sm:$0xf]
      %v691 = vld [vmem:[%s1 + $0xf0] sm:$0xf]
      %v692 = vld [vmem:[%s1 + $0xf4] sm:$0xf]
      %v693 = vld [vmem:[%s1 + $0xf8] sm:$0xf]
      %v694 = vld [vmem:[%s1 + $0xfc] sm:$0xf]
      %v695 = vld [vmem:[%s1 + $0x100] sm:$0xf]
      %v696 = vld [vmem:[%s1 + $0x104] sm:$0xf]
      %v697 = vld [vmem:[%s1 + $0x108] sm:$0xf]
      %v698 = vld [vmem:[%s1 + $0x10c] sm:$0xf]
      %v699 = vld [vmem:[%s1 + $0x110] sm:$0xf]
      %v700 = vld [vmem:[%s1 + $0x114] sm:$0xf]
      %v701 = vld [vmem:[%s1 + $0x118] sm:$0xf]
      %v702 = vld [vmem:[%s1 + $0x11c] sm:$0xf]
      %v703 = vld [vmem:[%s1 + $0x120] sm:$0xf]
      %v704 = vld [vmem:[%s1 + $0x124] sm:$0xf]
      %v705 = vld [vmem:[%s1 + $0x128] sm:$0xf]
      %v706 = vld [vmem:[%s1 + $0x12c] sm:$0xf]
      %v707 = vld [vmem:[%s1 + $0x130] sm:$0xf]
      %v708 = vld [vmem:[%s1 + $0x134] sm:$0xf]
      %v709 = vld [vmem:[%s1 + $0x138] sm:$0xf]
      %v710 = vld [vmem:[%s1 + $0x13c] sm:$0xf]
      %v711 = vld [vmem:[%s1 + $0x140] sm:$0xf]
      %v712 = vld [vmem:[%s1 + $0x144] sm:$0xf]
      %v713 = vld [vmem:[%s1 + $0x148] sm:$0xf]
      %v714 = vld [vmem:[%s1 + $0x14c] sm:$0xf]
      %v715 = vld [vmem:[%s1 + $0x150] sm:$0xf]
      %v716 = vld [vmem:[%s1 + $0x154] sm:$0xf]
      %v717 = vld [vmem:[%s1 + $0x158] sm:$0xf]
      %v718 = vld [vmem:[%s1 + $0x15c] sm:$0xf]
      %v719 = vld [vmem:[%s1 + $0x160] sm:$0xf]
      %v720 = vld [vmem:[%s1 + $0x164] sm:$0xf]
      %v721 = vld [vmem:[%s1 + $0x168] sm:$0xf]
      %v722 = vld [vmem:[%s1 + $0x16c] sm:$0xf]
      %v723 = vld [vmem:[%s1 + $0x170] sm:$0xf]
      %v724 = vld [vmem:[%s1 + $0x174] sm:$0xf]
      %v725 = vld [vmem:[%s1 + $0x178] sm:$0xf]
      %v726 = vld [vmem:[%s1 + $0x17c] sm:$0xf]
      %v727 = vld [vmem:[%s1 + $0x180] sm:$0xf]
      %v728 = vld [vmem:[%s1 + $0x184] sm:$0xf]
      %v729 = vld [vmem:[%s2] sm:$0x1]
      %v731 = vlaneseq
      %v732 = vshrl.u32 %v731, 7
      %v733 = vsub.s32 0, %v732
      %v734 = vrot.slane %v729, %v733
      %v768 = vunpack.c.l.b16 %v599
      %v769 = vunpack.c.h.b16 %v599
      %v770 = vunpack.c.l.b16 %v600
      %v771 = vunpack.c.h.b16 %v600
      %v772 = vunpack.c.l.b16 %v601
      %v773 = vunpack.c.h.b16 %v601
      %v774 = vunpack.c.l.b16 %v602
      %v775 = vunpack.c.l.b16 %v603
      %v776 = vunpack.c.h.b16 %v603
      %v777 = vunpack.c.l.b16 %v604
      %v778 = vunpack.c.h.b16 %v604
      %v779 = vunpack.c.l.b16 %v605
      %v780 = vunpack.c.h.b16 %v605
      %v781 = vunpack.c.l.b16 %v606
      %v782 = vunpack.c.l.b16 %v607
      %v783 = vunpack.c.h.b16 %v607
      %v784 = vunpack.c.l.b16 %v608
      %v785 = vunpack.c.h.b16 %v608
      %v786 = vunpack.c.l.b16 %v609
      %v787 = vunpack.c.h.b16 %v609
      %v788 = vunpack.c.l.b16 %v610
      %v789 = vunpack.c.l.b16 %v611
      %v790 = vunpack.c.h.b16 %v611
      %v791 = vunpack.c.l.b16 %v612
      %v792 = vunpack.c.h.b16 %v612
      %v793 = vunpack.c.l.b16 %v613
      %v794 = vunpack.c.h.b16 %v613
      %v795 = vunpack.c.l.b16 %v614
      %v796 = vunpack.c.l.b16 %v615
      %v797 = vunpack.c.h.b16 %v615
      %v798 = vunpack.c.l.b16 %v616
      %v799 = vunpack.c.h.b16 %v616
      %v800 = vunpack.c.l.b16 %v617
      %v801 = vunpack.c.h.b16 %v617
      %v802 = vunpack.c.l.b16 %v618
      %v803 = vunpack.c.l.b16 %v619
      %v804 = vunpack.c.h.b16 %v619
      %v805 = vunpack.c.l.b16 %v620
      %v806 = vunpack.c.h.b16 %v620
      %v807 = vunpack.c.l.b16 %v621
      %v808 = vunpack.c.h.b16 %v621
      %v809 = vunpack.c.l.b16 %v622
      %v810 = vunpack.c.l.b16 %v623
      %v811 = vunpack.c.h.b16 %v623
      %v812 = vunpack.c.l.b16 %v624
      %v813 = vunpack.c.h.b16 %v624
      %v814 = vunpack.c.l.b16 %v625
      %v815 = vunpack.c.h.b16 %v625
      %v816 = vunpack.c.l.b16 %v626
      %v817 = vunpack.c.l.b16 %v627
      %v818 = vunpack.c.h.b16 %v627
      %v819 = vunpack.c.l.b16 %v628
      %v820 = vunpack.c.h.b16 %v628
      %v821 = vunpack.c.l.b16 %v629
      %v822 = vunpack.c.h.b16 %v629
      %v823 = vunpack.c.l.b16 %v630
      %v824 = vpack.c.b16 %v775, %v768
      %v825 = vpack.c.b16 %v776, %v769
      %v826 = vpack.c.b16 %v777, %v770
      %v827 = vpack.c.b16 %v778, %v771
      %v828 = vpack.c.b16 %v779, %v772
      %v829 = vpack.c.b16 %v780, %v773
      %v830 = vpack.c.b16 %v781, %v774
      %v831 = vpack.c.b16 %v789, %v782
      %v832 = vpack.c.b16 %v790, %v783
      %v833 = vpack.c.b16 %v791, %v784
      %v834 = vpack.c.b16 %v792, %v785
      %v835 = vpack.c.b16 %v793, %v786
      %v836 = vpack.c.b16 %v794, %v787
      %v837 = vpack.c.b16 %v795, %v788
      %v838 = vpack.c.b16 %v803, %v796
      %v839 = vpack.c.b16 %v804, %v797
      %v840 = vpack.c.b16 %v805, %v798
      %v841 = vpack.c.b16 %v806, %v799
      %v842 = vpack.c.b16 %v807, %v800
      %v843 = vpack.c.b16 %v808, %v801
      %v844 = vpack.c.b16 %v809, %v802
      %v845 = vpack.c.b16 %v817, %v810
      %v846 = vpack.c.b16 %v818, %v811
      %v847 = vpack.c.b16 %v819, %v812
      %v848 = vpack.c.b16 %v820, %v813
      %v849 = vpack.c.b16 %v821, %v814
      %v850 = vpack.c.b16 %v822, %v815
      %v851 = vpack.c.b16 %v823, %v816
      %v974 = vunpack.c.l.b16 %v631
      %v975 = vunpack.c.l.b16 %v632
      %v976 = vunpack.c.l.b16 %v633
      %v977 = vunpack.c.l.b16 %v634
      %v978 = vunpack.c.l.b16 %v635
      %v979 = vunpack.c.l.b16 %v636
      %v980 = vunpack.c.l.b16 %v637
      %v981 = vunpack.c.l.b16 %v638
      %v982 = vunpack.c.l.b16 %v639
      %v983 = vunpack.c.l.b16 %v640
      %v984 = vunpack.c.l.b16 %v641
      %v985 = vunpack.c.l.b16 %v642
      %v986 = vunpack.c.l.b16 %v643
      %v987 = vunpack.c.l.b16 %v644
      %v988 = vunpack.c.l.b16 %v645
      %v989 = vunpack.c.l.b16 %v646
      %v990 = vunpack.c.l.b16 %v647
      %v991 = vunpack.c.l.b16 %v648
      %v992 = vunpack.c.l.b16 %v649
      %v993 = vunpack.c.l.b16 %v650
      %v994 = vunpack.c.l.b16 %v651
      %v995 = vunpack.c.l.b16 %v652
      %v996 = vunpack.c.l.b16 %v653
      %v997 = vunpack.c.l.b16 %v654
      %v998 = vunpack.c.l.b16 %v655
      %v999 = vunpack.c.l.b16 %v656
      %v1000 = vunpack.c.l.b16 %v657
      %v1001 = vunpack.c.l.b16 %v658
      %v1002 = vunpack.c.l.b16 %v659
      %v1003 = vunpack.c.l.b16 %v660
      %v1004 = vunpack.c.l.b16 %v661
      %v1005 = vunpack.c.l.b16 %v662
      %v1006 = vunpack.c.l.b16 %v663
      %v1007 = vunpack.c.l.b16 %v664
      %v1008 = vunpack.c.l.b16 %v665
      %v1009 = vunpack.c.l.b16 %v666
      %v1010 = vunpack.c.l.b16 %v667
      %v1011 = vunpack.c.l.b16 %v668
      %v1012 = vunpack.c.l.b16 %v669
      %v1013 = vunpack.c.l.b16 %v670
      %v1014 = vunpack.c.l.b16 %v671
      %v1015 = vunpack.c.l.b16 %v672
      %v1016 = vunpack.c.l.b16 %v673
      %v1017 = vunpack.c.l.b16 %v674
      %v1018 = vunpack.c.l.b16 %v675
      %v1019 = vunpack.c.l.b16 %v676
      %v1020 = vunpack.c.l.b16 %v677
      %v1021 = vunpack.c.l.b16 %v678
      %v1022 = vunpack.c.l.b16 %v679
      %v1023 = vunpack.c.l.b16 %v680
      %v1024 = vunpack.c.l.b16 %v681
      %v1025 = vunpack.c.l.b16 %v682
      %v1026 = vunpack.c.l.b16 %v683
      %v1027 = vunpack.c.l.b16 %v684
      %v1028 = vunpack.c.l.b16 %v685
      %v1029 = vunpack.c.l.b16 %v686
      %v1030 = vunpack.c.l.b16 %v687
      %v1031 = vunpack.c.l.b16 %v688
      %v1032 = vunpack.c.l.b16 %v689
      %v1033 = vunpack.c.l.b16 %v690
      %v1034 = vunpack.c.l.b16 %v691
      %v1035 = vunpack.c.l.b16 %v692
      %v1036 = vunpack.c.l.b16 %v693
      %v1037 = vunpack.c.l.b16 %v694
      %v1038 = vunpack.c.l.b16 %v695
      %v1039 = vunpack.c.l.b16 %v696
      %v1040 = vunpack.c.l.b16 %v697
      %v1041 = vunpack.c.l.b16 %v698
      %v1042 = vunpack.c.l.b16 %v699
      %v1043 = vunpack.c.l.b16 %v700
      %v1044 = vunpack.c.l.b16 %v701
      %v1045 = vunpack.c.l.b16 %v702
      %v1046 = vunpack.c.l.b16 %v703
      %v1047 = vunpack.c.l.b16 %v704
      %v1048 = vunpack.c.l.b16 %v705
      %v1049 = vunpack.c.l.b16 %v706
      %v1050 = vunpack.c.l.b16 %v707
      %v1051 = vunpack.c.l.b16 %v708
      %v1052 = vunpack.c.l.b16 %v709
      %v1053 = vunpack.c.l.b16 %v710
      %v1054 = vunpack.c.l.b16 %v711
      %v1055 = vunpack.c.l.b16 %v712
      %v1056 = vunpack.c.l.b16 %v713
      %v1057 = vunpack.c.l.b16 %v714
      %v1058 = vunpack.c.l.b16 %v715
      %v1059 = vunpack.c.l.b16 %v716
      %v1060 = vunpack.c.l.b16 %v717
      %v1061 = vunpack.c.l.b16 %v718
      %v1062 = vunpack.c.l.b16 %v719
      %v1063 = vunpack.c.l.b16 %v720
      %v1064 = vunpack.c.l.b16 %v721
      %v1065 = vunpack.c.l.b16 %v722
      %v1066 = vunpack.c.l.b16 %v723
      %v1067 = vunpack.c.l.b16 %v724
      %v1068 = vunpack.c.l.b16 %v725
      %v1069 = vunpack.c.l.b16 %v726
      %v1070 = vunpack.c.l.b16 %v727
      %v1071 = vunpack.c.l.b16 %v728
      %v1072 = vpack.c.b16 %v975, %v974
      %v1073 = vpack.c.b16 %v977, %v976
      %v1074 = vpack.c.b16 %v979, %v978
      %v1075 = vpack.c.b16 %v981, %v980
      %v1076 = vpack.c.b16 %v983, %v982
      %v1077 = vpack.c.b16 %v985, %v984
      %v1078 = vpack.c.b16 %v987, %v986
      %v1079 = vpack.c.b16 %v989, %v988
      %v1080 = vpack.c.b16 %v991, %v990
      %v1081 = vpack.c.b16 %v993, %v992
      %v1082 = vpack.c.b16 %v995, %v994
      %v1083 = vpack.c.b16 %v997, %v996
      %v1084 = vpack.c.b16 %v999, %v998
      %v1085 = vpack.c.b16 %v1001, %v1000
      %v1086 = vpack.c.b16 %v1003, %v1002
      %v1087 = vpack.c.b16 %v1005, %v1004
      %v1088 = vpack.c.b16 %v1007, %v1006
      %v1089 = vpack.c.b16 %v1009, %v1008
      %v1090 = vpack.c.b16 %v1011, %v1010
      %v1091 = vpack.c.b16 %v1013, %v1012
      %v1092 = vpack.c.b16 %v1015, %v1014
      %v1093 = vpack.c.b16 %v1017, %v1016
      %v1094 = vpack.c.b16 %v1019, %v1018
      %v1095 = vpack.c.b16 %v1021, %v1020
      %v1096 = vpack.c.b16 %v1023, %v1022
      %v1097 = vpack.c.b16 %v1025, %v1024
      %v1098 = vpack.c.b16 %v1027, %v1026
      %v1099 = vpack.c.b16 %v1029, %v1028
      %v1100 = vpack.c.b16 %v1031, %v1030
      %v1101 = vpack.c.b16 %v1033, %v1032
      %v1102 = vpack.c.b16 %v1035, %v1034
      %v1103 = vpack.c.b16 %v1037, %v1036
      %v1104 = vpack.c.b16 %v1039, %v1038
      %v1105 = vpack.c.b16 %v1041, %v1040
      %v1106 = vpack.c.b16 %v1043, %v1042
      %v1107 = vpack.c.b16 %v1045, %v1044
      %v1108 = vpack.c.b16 %v1047, %v1046
      %v1109 = vpack.c.b16 %v1049, %v1048
      %v1110 = vpack.c.b16 %v1051, %v1050
      %v1111 = vpack.c.b16 %v1053, %v1052
      %v1112 = vpack.c.b16 %v1055, %v1054
      %v1113 = vpack.c.b16 %v1057, %v1056
      %v1114 = vpack.c.b16 %v1059, %v1058
      %v1115 = vpack.c.b16 %v1061, %v1060
      %v1116 = vpack.c.b16 %v1063, %v1062
      %v1117 = vpack.c.b16 %v1065, %v1064
      %v1118 = vpack.c.b16 %v1067, %v1066
      %v1119 = vpack.c.b16 %v1069, %v1068
      %v1120 = vpack.c.b16 %v1071, %v1070
      %vm1170 = vcmask 130048
      %v1172 = vsel %vm1170, %v830, 0
      %v1175 = vsel %vm1170, %v837, 0
      %v1178 = vsel %vm1170, %v844, 0
      %v1181 = vsel %vm1170, %v851, 0
      %1183 = vmatprep.subr.bf16.mxu0 0
      %1184 = vmatpush1.bf16.msra.mxu0 %v1072
      %1185 = vmatprep.subr.bf16.mxu0 0
      %1186 = vmatpush1.bf16.msra.mxu0 %v1073
      %1187 = vmatprep.subr.bf16.mxu0 0
      %1188 = vmatpush1.bf16.msra.mxu0 %v1074
      %1189 = vmatprep.subr.bf16.mxu0 0
      %1190 = vmatpush1.bf16.msra.mxu0 %v1075
      %1191 = vmatprep.subr.bf16.mxu0 0
      %1192 = vmatpush1.bf16.msra.mxu0 %v1076
      %1193 = vmatprep.subr.bf16.mxu0 0
      %1194 = vmatpush1.bf16.msra.mxu0 %v1077
      %1195 = vmatprep.subr.bf16.mxu0 0
      %1196 = vmatpush1.bf16.msra.mxu0 %v1078
      %1197 = vmatprep.subr.bf16.mxu0 0
      %1198 = vmatpush1.bf16.msra.mxu0 %v1079
      %1199 = vmatprep.subr.bf16.mxu0 0
      %1200 = vmatpush1.bf16.msra.mxu0 %v1080
      %1201 = vmatprep.subr.bf16.mxu0 0
      %1202 = vmatpush1.bf16.msra.mxu0 %v1081
      %1203 = vmatprep.subr.bf16.mxu0 0
      %1204 = vmatpush1.bf16.msra.mxu0 %v1082
      %1205 = vmatprep.subr.bf16.mxu0 0
      %1206 = vmatpush1.bf16.msra.mxu0 %v1083
      %1207 = vmatprep.subr.bf16.mxu0 0
      %1208 = vmatpush1.bf16.msra.mxu0 %v1084
      %1209 = vmatprep.subr.bf16.mxu0 0
      %1210 = vmatpush1.bf16.msra.mxu0 %v1085
      %1211 = vmatprep.subr.bf16.mxu0 0
      %1212 = vmatpush1.bf16.msra.mxu0 %v1086
      %1213 = vmatprep.subr.bf16.mxu0 0
      %1214 = vmatpush1.bf16.msra.mxu0 %v1087
      %1215 = vmatprep.mubr.bf16.mxu0 %v825
      %1216 = vmatmul.mubr.bf16.gmra.mrb[0].mxu0 %v824
      %v1217 = vpop.f32.mrb[0].mxu0
      %v1218 = vadd.f32 %v734, %v1217
      %v1219 = vpop.f32.mrb[0].mxu0
      %v1220 = vpop.f32.mrb[0].mxu0
      %v1221 = vadd.f32 %v734, %v1220
      %v1222 = vpop.f32.mrb[0].mxu0
      %1223 = vmatprep.mubr.bf16.mxu0 %v832
      %1224 = vmatmul.mubr.bf16.gmra.mrb[0].mxu0 %v831
      %v1225 = vpop.f32.mrb[0].mxu0
      %v1226 = vadd.f32 %v734, %v1225
      %v1227 = vpop.f32.mrb[0].mxu0
      %v1228 = vpop.f32.mrb[0].mxu0
      %v1229 = vadd.f32 %v734, %v1228
      %v1230 = vpop.f32.mrb[0].mxu0
      %1231 = vmatprep.mubr.bf16.mxu0 %v839
      %1232 = vmatmul.mubr.bf16.gmra.mrb[0].mxu0 %v838
      %v1233 = vpop.f32.mrb[0].mxu0
      %v1234 = vadd.f32 %v734, %v1233
      %v1235 = vpop.f32.mrb[0].mxu0
      %v1236 = vpop.f32.mrb[0].mxu0
      %v1237 = vadd.f32 %v734, %v1236
      %v1238 = vpop.f32.mrb[0].mxu0
      %1239 = vmatprep.mubr.bf16.mxu0 %v846
      %1240 = vmatmul.mubr.bf16.gmra.mrb[0].mxu0 %v845
      %v1241 = vpop.f32.mrb[0].mxu0
      %v1242 = vadd.f32 %v734, %v1241
      %v1243 = vpop.f32.mrb[0].mxu0
      %v1244 = vpop.f32.mrb[0].mxu0
      %v1245 = vadd.f32 %v734, %v1244
      %v1246 = vpop.f32.mrb[0].mxu0
      %1247 = vdwg.mxu0
      %1248 = vmatprep.subr.bf16.mxu0 0
      %1249 = vmatpush1.bf16.msra.mxu0 %v1088
      %1250 = vmatprep.subr.bf16.mxu0 0
      %1251 = vmatpush1.bf16.msra.mxu0 %v1089
      %1252 = vmatprep.subr.bf16.mxu0 0
      %1253 = vmatpush1.bf16.msra.mxu0 %v1090
      %1254 = vmatprep.subr.bf16.mxu0 0
      %1255 = vmatpush1.bf16.msra.mxu0 %v1091
      %1256 = vmatprep.subr.bf16.mxu0 0
      %1257 = vmatpush1.bf16.msra.mxu0 %v1092
      %1258 = vmatprep.subr.bf16.mxu0 0
      %1259 = vmatpush1.bf16.msra.mxu0 %v1093
      %1260 = vmatprep.subr.bf16.mxu0 0
      %1261 = vmatpush1.bf16.msra.mxu0 %v1094
      %1262 = vmatprep.subr.bf16.mxu0 0
      %1263 = vmatpush1.bf16.msra.mxu0 %v1095
      %1264 = vmatprep.subr.bf16.mxu0 0
      %1265 = vmatpush1.bf16.msra.mxu0 %v1096
      %1266 = vmatprep.subr.bf16.mxu0 0
      %1267 = vmatpush1.bf16.msra.mxu0 %v1097
      %1268 = vmatprep.subr.bf16.mxu0 0
      %1269 = vmatpush1.bf16.msra.mxu0 %v1098
      %1270 = vmatprep.subr.bf16.mxu0 0
      %1271 = vmatpush1.bf16.msra.mxu0 %v1099
      %1272 = vmatprep.subr.bf16.mxu0 0
      %1273 = vmatpush1.bf16.msra.mxu0 %v1100
      %1274 = vmatprep.subr.bf16.mxu0 0
      %1275 = vmatpush1.bf16.msra.mxu0 %v1101
      %1276 = vmatprep.subr.bf16.mxu0 0
      %1277 = vmatpush1.bf16.msra.mxu0 %v1102
      %1278 = vmatprep.subr.bf16.mxu0 0
      %1279 = vmatpush1.bf16.msra.mxu0 %v1103
      %1280 = vmatprep.mubr.bf16.mxu0 %v827
      %1281 = vmatmul.mubr.bf16.gmra.mrb[0].mxu0 %v826
      %v1282 = vpop.f32.mrb[0].mxu0
      %v1283 = vadd.f32 %v1218, %v1282
      %v1284 = vpop.f32.mrb[0].mxu0
      %v1285 = vpop.f32.mrb[0].mxu0
      %v1286 = vadd.f32 %v1221, %v1285
      %v1287 = vpop.f32.mrb[0].mxu0
      %1288 = vmatprep.mubr.bf16.mxu0 %v834
      %1289 = vmatmul.mubr.bf16.gmra.mrb[0].mxu0 %v833
      %v1290 = vpop.f32.mrb[0].mxu0
      %v1291 = vadd.f32 %v1226, %v1290
      %v1292 = vpop.f32.mrb[0].mxu0
      %v1293 = vpop.f32.mrb[0].mxu0
      %v1294 = vadd.f32 %v1229, %v1293
      %v1295 = vpop.f32.mrb[0].mxu0
      %1296 = vmatprep.mubr.bf16.mxu0 %v841
      %1297 = vmatmul.mubr.bf16.gmra.mrb[0].mxu0 %v840
      %v1298 = vpop.f32.mrb[0].mxu0
      %v1299 = vadd.f32 %v1234, %v1298
      %v1300 = vpop.f32.mrb[0].mxu0
      %v1301 = vpop.f32.mrb[0].mxu0
      %v1302 = vadd.f32 %v1237, %v1301
      %v1303 = vpop.f32.mrb[0].mxu0
      %1304 = vmatprep.mubr.bf16.mxu0 %v848
      %1305 = vmatmul.mubr.bf16.gmra.mrb[0].mxu0 %v847
      %v1306 = vpop.f32.mrb[0].mxu0
      %v1307 = vadd.f32 %v1242, %v1306
      %v1308 = vpop.f32.mrb[0].mxu0
      %v1309 = vpop.f32.mrb[0].mxu0
      %v1310 = vadd.f32 %v1245, %v1309
      %v1311 = vpop.f32.mrb[0].mxu0
      %1312 = vdwg.mxu0
      %1313 = vmatprep.subr.bf16.mxu0 0
      %1314 = vmatpush1.bf16.msra.mxu0 %v1104
      %1315 = vmatprep.subr.bf16.mxu0 0
      %1316 = vmatpush1.bf16.msra.mxu0 %v1105
      %1317 = vmatprep.subr.bf16.mxu0 0
      %1318 = vmatpush1.bf16.msra.mxu0 %v1106
      %1319 = vmatprep.subr.bf16.mxu0 0
      %1320 = vmatpush1.bf16.msra.mxu0 %v1107
      %1321 = vmatprep.subr.bf16.mxu0 0
      %1322 = vmatpush1.bf16.msra.mxu0 %v1108
      %1323 = vmatprep.subr.bf16.mxu0 0
      %1324 = vmatpush1.bf16.msra.mxu0 %v1109
      %1325 = vmatprep.subr.bf16.mxu0 0
      %1326 = vmatpush1.bf16.msra.mxu0 %v1110
      %1327 = vmatprep.subr.bf16.mxu0 0
      %1328 = vmatpush1.bf16.msra.mxu0 %v1111
      %1329 = vmatprep.subr.bf16.mxu0 0
      %1330 = vmatpush1.bf16.msra.mxu0 %v1112
      %1331 = vmatprep.subr.bf16.mxu0 0
      %1332 = vmatpush1.bf16.msra.mxu0 %v1113
      %1333 = vmatprep.subr.bf16.mxu0 0
      %1334 = vmatpush1.bf16.msra.mxu0 %v1114
      %1335 = vmatprep.subr.bf16.mxu0 0
      %1336 = vmatpush1.bf16.msra.mxu0 %v1115
      %1337 = vmatprep.subr.bf16.mxu0 0
      %1338 = vmatpush1.bf16.msra.mxu0 %v1116
      %1339 = vmatprep.subr.bf16.mxu0 0
      %1340 = vmatpush1.bf16.msra.mxu0 %v1117
      %1341 = vmatprep.subr.bf16.mxu0 0
      %1342 = vmatpush1.bf16.msra.mxu0 %v1118
      %1343 = vmatprep.subr.bf16.mxu0 0
      %1344 = vmatpush1.bf16.msra.mxu0 %v1119
      %1345 = vmatprep.mubr.bf16.mxu0 %v829
      %1346 = vmatmul.mubr.bf16.gmra.mrb[0].mxu0 %v828
      %v1347 = vpop.f32.mrb[0].mxu0
      %v1348 = vadd.f32 %v1283, %v1347
      %v1349 = vpop.f32.mrb[0].mxu0
      %v1350 = vpop.f32.mrb[0].mxu0
      %v1351 = vadd.f32 %v1286, %v1350
      %v1352 = vpop.f32.mrb[0].mxu0
      %1353 = vmatprep.mubr.bf16.mxu0 %v836
      %1354 = vmatmul.mubr.bf16.gmra.mrb[0].mxu0 %v835
      %v1355 = vpop.f32.mrb[0].mxu0
      %v1356 = vadd.f32 %v1291, %v1355
      %v1357 = vpop.f32.mrb[0].mxu0
      %v1358 = vpop.f32.mrb[0].mxu0
      %v1359 = vadd.f32 %v1294, %v1358
      %v1360 = vpop.f32.mrb[0].mxu0
      %1361 = vmatprep.mubr.bf16.mxu0 %v843
      %1362 = vmatmul.mubr.bf16.gmra.mrb[0].mxu0 %v842
      %v1363 = vpop.f32.mrb[0].mxu0
      %v1364 = vadd.f32 %v1299, %v1363
      %v1365 = vpop.f32.mrb[0].mxu0
      %v1366 = vpop.f32.mrb[0].mxu0
      %v1367 = vadd.f32 %v1302, %v1366
      %v1368 = vpop.f32.mrb[0].mxu0
      %1369 = vmatprep.mubr.bf16.mxu0 %v850
      %1370 = vmatmul.mubr.bf16.gmra.mrb[0].mxu0 %v849
      %v1371 = vpop.f32.mrb[0].mxu0
      %v1372 = vadd.f32 %v1307, %v1371
      %v1373 = vpop.f32.mrb[0].mxu0
      %v1374 = vpop.f32.mrb[0].mxu0
      %v1375 = vadd.f32 %v1310, %v1374
      %v1376 = vpop.f32.mrb[0].mxu0
      %1377 = vdwg.mxu0
      %1378 = vmatprep.subr.bf16.mxu0 0
      %1379 = vmatpush1.bf16.msra.mxu0 %v1120
      %1380 = vmatprep.subr.bf16.mxu0 0
      %1381 = vmatpush1.bf16.msra.mxu0 0
      %1382 = vmatprep.subr.bf16.mxu0 0
      %1383 = vmatpush1.bf16.msra.mxu0 0
      %1384 = vmatprep.subr.bf16.mxu0 0
      %1385 = vmatpush1.bf16.msra.mxu0 0
      %1386 = vmatprep.subr.bf16.mxu0 0
      %1387 = vmatpush1.bf16.msra.mxu0 0
      %1388 = vmatprep.subr.bf16.mxu0 0
      %1389 = vmatpush1.bf16.msra.mxu0 0
      %1390 = vmatprep.subr.bf16.mxu0 0
      %1391 = vmatpush1.bf16.msra.mxu0 0
      %1392 = vmatprep.subr.bf16.mxu0 0
      %1393 = vmatpush1.bf16.msra.mxu0 0
      %1394 = vmatprep.subr.bf16.mxu0 0
      %1395 = vmatpush1.bf16.msra.mxu0 0
      %1396 = vmatprep.subr.bf16.mxu0 0
      %1397 = vmatpush1.bf16.msra.mxu0 0
      %1398 = vmatprep.subr.bf16.mxu0 0
      %1399 = vmatpush1.bf16.msra.mxu0 0
      %1400 = vmatprep.subr.bf16.mxu0 0
      %1401 = vmatpush1.bf16.msra.mxu0 0
      %1402 = vmatprep.subr.bf16.mxu0 0
      %1403 = vmatpush1.bf16.msra.mxu0 0
      %1404 = vmatprep.subr.bf16.mxu0 0
      %1405 = vmatpush1.bf16.msra.mxu0 0
      %1406 = vmatprep.subr.bf16.mxu0 0
      %1407 = vmatpush1.bf16.msra.mxu0 0
      %1408 = vmatprep.subr.bf16.mxu0 0
      %1409 = vmatpush1.bf16.msra.mxu0 0
      %1410 = vmatprep.mubr.bf16.mxu0 0
      %1411 = vmatmul.mubr.bf16.gmra.mrb[0].mxu0 %v1172
      %v1412 = vpop.f32.mrb[0].mxu0
      %v1413 = vadd.f32 %v1348, %v1412
      %v1414 = vpop.f32.mrb[0].mxu0
      %v1415 = vpop.f32.mrb[0].mxu0
      %v1416 = vadd.f32 %v1351, %v1415
      %v1417 = vpop.f32.mrb[0].mxu0
      %1418 = vmatprep.mubr.bf16.mxu0 0
      %1419 = vmatmul.mubr.bf16.gmra.mrb[0].mxu0 %v1175
      %v1420 = vpop.f32.mrb[0].mxu0
      %v1421 = vadd.f32 %v1356, %v1420
      %v1422 = vpop.f32.mrb[0].mxu0
      %v1423 = vpop.f32.mrb[0].mxu0
      %v1424 = vadd.f32 %v1359, %v1423
      %v1425 = vpop.f32.mrb[0].mxu0
      %1426 = vmatprep.mubr.bf16.mxu0 0
      %1427 = vmatmul.mubr.bf16.gmra.mrb[0].mxu0 %v1178
      %v1428 = vpop.f32.mrb[0].mxu0
      %v1429 = vadd.f32 %v1364, %v1428
      %v1430 = vpop.f32.mrb[0].mxu0
      %v1431 = vpop.f32.mrb[0].mxu0
      %v1432 = vadd.f32 %v1367, %v1431
      %v1433 = vpop.f32.mrb[0].mxu0
      %1434 = vmatprep.mubr.bf16.mxu0 0
      %1435 = vmatmul.mubr.bf16.gmra.mrb[0].mxu0 %v1181
      %v1436 = vpop.f32.mrb[0].mxu0
      %v1437 = vadd.f32 %v1372, %v1436
      %v1438 = vpop.f32.mrb[0].mxu0
      %v1439 = vpop.f32.mrb[0].mxu0
      %v1440 = vadd.f32 %v1375, %v1439
      %v1441 = vpop.f32.mrb[0].mxu0
      %1442 = vdwg.mxu0
      %v1443 = vtanh.pop %v1413
      %v1444 = vtanh.pop %v1416
      %v1445 = vtanh.pop %v1421
      %v1446 = vtanh.pop %v1424
      %v1447 = vtanh.pop %v1429
      %v1448 = vtanh.pop %v1432
      %v1449 = vtanh.pop %v1437
      %v1450 = vtanh.pop %v1440
      %v1451 = vpack.c.bf16 %v1444, %v1443
      %v1452 = vpack.c.bf16 %v1446, %v1445
      %v1453 = vpack.c.bf16 %v1448, %v1447
      %v1454 = vpack.c.bf16 %v1450, %v1449
      %v1455 = vld [vmem:[%s3] sm:$0xf]
      %v1456 = vld [vmem:[%s3 + $0x4] sm:$0xf]
      %v1457 = vld [vmem:[%s3 + $0x8] sm:$0xf]
      %v1458 = vld [vmem:[%s3 + $0xc] sm:$0xf]
      %v1459 = vld [vmem:[%s3 + $0x10] sm:$0xf]
      %v1460 = vld [vmem:[%s3 + $0x14] sm:$0xf]
      %v1461 = vld [vmem:[%s3 + $0x18] sm:$0xf]
      %v1462 = vld [vmem:[%s3 + $0x1c] sm:$0xf]
      %v1463 = vld [vmem:[%s3 + $0x20] sm:$0xf]
      %v1464 = vld [vmem:[%s3 + $0x24] sm:$0xf]
      %v1465 = vld [vmem:[%s3 + $0x28] sm:$0xf]
      %v1466 = vld [vmem:[%s3 + $0x2c] sm:$0xf]
      %v1467 = vld [vmem:[%s3 + $0x30] sm:$0xf]
      %v1468 = vld [vmem:[%s3 + $0x34] sm:$0xf]
      %v1469 = vld [vmem:[%s3 + $0x38] sm:$0xf]
      %v1470 = vld [vmem:[%s3 + $0x3c] sm:$0xf]
      %v1471 = vld [vmem:[%s4] sm:$0x1]
      %v1473 = vlaneseq
      %v1474 = vshrl.u32 %v1473, 7
      %v1475 = vsub.s32 0, %v1474
      %v1476 = vrot.slane %v1471, %v1475
      %v1494 = vunpack.c.l.b16 %v1455
      %v1495 = vunpack.c.l.b16 %v1456
      %v1496 = vunpack.c.l.b16 %v1457
      %v1497 = vunpack.c.l.b16 %v1458
      %v1498 = vunpack.c.l.b16 %v1459
      %v1499 = vunpack.c.l.b16 %v1460
      %v1500 = vunpack.c.l.b16 %v1461
      %v1501 = vunpack.c.l.b16 %v1462
      %v1502 = vunpack.c.l.b16 %v1463
      %v1503 = vunpack.c.l.b16 %v1464
      %v1504 = vunpack.c.l.b16 %v1465
      %v1505 = vunpack.c.l.b16 %v1466
      %v1506 = vunpack.c.l.b16 %v1467
      %v1507 = vunpack.c.l.b16 %v1468
      %v1508 = vunpack.c.l.b16 %v1469
      %v1509 = vunpack.c.l.b16 %v1470
      %v1510 = vpack.c.b16 %v1495, %v1494
      %v1511 = vpack.c.b16 %v1497, %v1496
      %v1512 = vpack.c.b16 %v1499, %v1498
      %v1513 = vpack.c.b16 %v1501, %v1500
      %v1514 = vpack.c.b16 %v1503, %v1502
      %v1515 = vpack.c.b16 %v1505, %v1504
      %v1516 = vpack.c.b16 %v1507, %v1506
      %v1517 = vpack.c.b16 %v1509, %v1508
      %1526 = vmatprep.subr.bf16.mxu0 0
      %1527 = vmatpush1.bf16.msra.mxu0 %v1510
      %1528 = vmatprep.subr.bf16.mxu0 0
      %1529 = vmatpush1.bf16.msra.mxu0 %v1511
      %1530 = vmatprep.subr.bf16.mxu0 0
      %1531 = vmatpush1.bf16.msra.mxu0 %v1512
      %1532 = vmatprep.subr.bf16.mxu0 0
      %1533 = vmatpush1.bf16.msra.mxu0 %v1513
      %1534 = vmatprep.subr.bf16.mxu0 0
      %1535 = vmatpush1.bf16.msra.mxu0 %v1514
      %1536 = vmatprep.subr.bf16.mxu0 0
      %1537 = vmatpush1.bf16.msra.mxu0 %v1515
      %1538 = vmatprep.subr.bf16.mxu0 0
      %1539 = vmatpush1.bf16.msra.mxu0 %v1516
      %1540 = vmatprep.subr.bf16.mxu0 0
      %1541 = vmatpush1.bf16.msra.mxu0 %v1517
      %1542 = vmatprep.subr.bf16.mxu0 0
      %1543 = vmatpush1.bf16.msra.mxu0 0
      %1544 = vmatprep.subr.bf16.mxu0 0
      %1545 = vmatpush1.bf16.msra.mxu0 0
      %1546 = vmatprep.subr.bf16.mxu0 0
      %1547 = vmatpush1.bf16.msra.mxu0 0
      %1548 = vmatprep.subr.bf16.mxu0 0
      %1549 = vmatpush1.bf16.msra.mxu0 0
      %1550 = vmatprep.subr.bf16.mxu0 0
      %1551 = vmatpush1.bf16.msra.mxu0 0
      %1552 = vmatprep.subr.bf16.mxu0 0
      %1553 = vmatpush1.bf16.msra.mxu0 0
      %1554 = vmatprep.subr.bf16.mxu0 0
      %1555 = vmatpush1.bf16.msra.mxu0 0
      %1556 = vmatprep.subr.bf16.mxu0 0
      %1557 = vmatpush1.bf16.msra.mxu0 0
      %1558 = vmatprep.mubr.bf16.mxu0 0
      %1559 = vmatmul.mubr.bf16.gmra.mrb[0].mxu0 %v1451
      %v1560 = vpop.f32.mrb[0].mxu0
      %v1561 = vadd.f32 %v1476, %v1560
      %v1562 = vpop.f32.mrb[0].mxu0
      %v1563 = vpop.f32.mrb[0].mxu0
      %v1564 = vadd.f32 %v1476, %v1563
      %v1565 = vpop.f32.mrb[0].mxu0
      %1566 = vmatprep.mubr.bf16.mxu0 0
      %1567 = vmatmul.mubr.bf16.gmra.mrb[0].mxu0 %v1452
      %v1568 = vpop.f32.mrb[0].mxu0
      %v1569 = vadd.f32 %v1476, %v1568
      %v1570 = vpop.f32.mrb[0].mxu0
      %v1571 = vpop.f32.mrb[0].mxu0
      %v1572 = vadd.f32 %v1476, %v1571
      %v1573 = vpop.f32.mrb[0].mxu0
      %1574 = vmatprep.mubr.bf16.mxu0 0
      %1575 = vmatmul.mubr.bf16.gmra.mrb[0].mxu0 %v1453
      %v1576 = vpop.f32.mrb[0].mxu0
      %v1577 = vadd.f32 %v1476, %v1576
      %v1578 = vpop.f32.mrb[0].mxu0
      %v1579 = vpop.f32.mrb[0].mxu0
      %v1580 = vadd.f32 %v1476, %v1579
      %v1581 = vpop.f32.mrb[0].mxu0
      %1582 = vmatprep.mubr.bf16.mxu0 0
      %1583 = vmatmul.mubr.bf16.gmra.mrb[0].mxu0 %v1454
      %v1584 = vpop.f32.mrb[0].mxu0
      %v1585 = vadd.f32 %v1476, %v1584
      %v1586 = vpop.f32.mrb[0].mxu0
      %v1587 = vpop.f32.mrb[0].mxu0
      %v1588 = vadd.f32 %v1476, %v1587
      %v1589 = vpop.f32.mrb[0].mxu0
      %1590 = vdwg.mxu0
      %v1591 = vtanh.pop %v1561
      %v1592 = vtanh.pop %v1564
      %v1593 = vtanh.pop %v1569
      %v1594 = vtanh.pop %v1572
      %v1595 = vtanh.pop %v1577
      %v1596 = vtanh.pop %v1580
      %v1597 = vtanh.pop %v1585
      %v1598 = vtanh.pop %v1588
      %v1599 = vpack.c.bf16 %v1592, %v1591
      %v1600 = vpack.c.bf16 %v1594, %v1593
      %v1601 = vpack.c.bf16 %v1596, %v1595
      %v1602 = vpack.c.bf16 %v1598, %v1597
      %v1603 = vld [vmem:[%s5] sm:$0xf]
      %v1604 = vld [vmem:[%s5 + $0x4] sm:$0xf]
      %v1605 = vld [vmem:[%s5 + $0x8] sm:$0xf]
      %v1606 = vld [vmem:[%s5 + $0xc] sm:$0xf]
      %v1607 = vld [vmem:[%s5 + $0x10] sm:$0xf]
      %v1608 = vld [vmem:[%s5 + $0x14] sm:$0xf]
      %v1609 = vld [vmem:[%s5 + $0x18] sm:$0xf]
      %v1610 = vld [vmem:[%s5 + $0x1c] sm:$0xf]
      %v1611 = vld [vmem:[%s6] sm:$0x1]
      %v1613 = vlaneseq
      %v1614 = vshrl.u32 %v1613, 7
      %v1615 = vsub.s32 0, %v1614
      %v1616 = vrot.slane %v1611, %v1615
      %v1626 = vunpack.c.l.b16 %v1603
      %v1627 = vunpack.c.l.b16 %v1604
      %v1628 = vunpack.c.l.b16 %v1605
      %v1629 = vunpack.c.l.b16 %v1606
      %v1630 = vunpack.c.l.b16 %v1607
      %v1631 = vunpack.c.l.b16 %v1608
      %v1632 = vunpack.c.l.b16 %v1609
      %v1633 = vunpack.c.l.b16 %v1610
      %v1634 = vpack.c.b16 %v1627, %v1626
      %v1635 = vpack.c.b16 %v1629, %v1628
      %v1636 = vpack.c.b16 %v1631, %v1630
      %v1637 = vpack.c.b16 %v1633, %v1632
      %vm1642 = vcmask 523264
      %v1644 = vsel %vm1642, %v1599, 0
      %v1647 = vsel %vm1642, %v1600, 0
      %v1650 = vsel %vm1642, %v1601, 0
      %v1653 = vsel %vm1642, %v1602, 0
      %1655 = vmatprep.subr.bf16.mxu0 0
      %1656 = vmatpush1.bf16.msra.mxu0 %v1634
      %1657 = vmatprep.subr.bf16.mxu0 0
      %1658 = vmatpush1.bf16.msra.mxu0 %v1635
      %1659 = vmatprep.subr.bf16.mxu0 0
      %1660 = vmatpush1.bf16.msra.mxu0 %v1636
      %1661 = vmatprep.subr.bf16.mxu0 0
      %1662 = vmatpush1.bf16.msra.mxu0 %v1637
      %1663 = vmatprep.subr.bf16.mxu0 0
      %1664 = vmatpush1.bf16.msra.mxu0 0
      %1665 = vmatprep.subr.bf16.mxu0 0
      %1666 = vmatpush1.bf16.msra.mxu0 0
      %1667 = vmatprep.subr.bf16.mxu0 0
      %1668 = vmatpush1.bf16.msra.mxu0 0
      %1669 = vmatprep.subr.bf16.mxu0 0
      %1670 = vmatpush1.bf16.msra.mxu0 0
      %1671 = vmatprep.subr.bf16.mxu0 0
      %1672 = vmatpush1.bf16.msra.mxu0 0
      %1673 = vmatprep.subr.bf16.mxu0 0
      %1674 = vmatpush1.bf16.msra.mxu0 0
      %1675 = vmatprep.subr.bf16.mxu0 0
      %1676 = vmatpush1.bf16.msra.mxu0 0
      %1677 = vmatprep.subr.bf16.mxu0 0
      %1678 = vmatpush1.bf16.msra.mxu0 0
      %1679 = vmatprep.subr.bf16.mxu0 0
      %1680 = vmatpush1.bf16.msra.mxu0 0
      %1681 = vmatprep.subr.bf16.mxu0 0
      %1682 = vmatpush1.bf16.msra.mxu0 0
      %1683 = vmatprep.subr.bf16.mxu0 0
      %1684 = vmatpush1.bf16.msra.mxu0 0
      %1685 = vmatprep.subr.bf16.mxu0 0
      %1686 = vmatpush1.bf16.msra.mxu0 0
      %1687 = vmatprep.mubr.bf16.mxu0 0
      %1688 = vmatmul.mubr.bf16.gmra.mrb[0].mxu0 %v1644
      %v1689 = vpop.f32.mrb[0].mxu0
      %v1690 = vadd.f32 %v1616, %v1689
      %v1691 = vpop.f32.mrb[0].mxu0
      %v1692 = vpop.f32.mrb[0].mxu0
      %v1693 = vadd.f32 %v1616, %v1692
      %v1694 = vpop.f32.mrb[0].mxu0
      %1695 = vmatprep.mubr.bf16.mxu0 0
      %1696 = vmatmul.mubr.bf16.gmra.mrb[0].mxu0 %v1647
      %v1697 = vpop.f32.mrb[0].mxu0
      %v1698 = vadd.f32 %v1616, %v1697
      %v1699 = vpop.f32.mrb[0].mxu0
      %v1700 = vpop.f32.mrb[0].mxu0
      %v1701 = vadd.f32 %v1616, %v1700
      %v1702 = vpop.f32.mrb[0].mxu0
      %1703 = vmatprep.mubr.bf16.mxu0 0
      %1704 = vmatmul.mubr.bf16.gmra.mrb[0].mxu0 %v1650
      %v1705 = vpop.f32.mrb[0].mxu0
      %v1706 = vadd.f32 %v1616, %v1705
      %v1707 = vpop.f32.mrb[0].mxu0
      %v1708 = vpop.f32.mrb[0].mxu0
      %v1709 = vadd.f32 %v1616, %v1708
      %v1710 = vpop.f32.mrb[0].mxu0
      %1711 = vmatprep.mubr.bf16.mxu0 0
      %1712 = vmatmul.mubr.bf16.gmra.mrb[0].mxu0 %v1653
      %v1713 = vpop.f32.mrb[0].mxu0
      %v1714 = vadd.f32 %v1616, %v1713
      %v1715 = vpop.f32.mrb[0].mxu0
      %v1716 = vpop.f32.mrb[0].mxu0
      %v1717 = vadd.f32 %v1616, %v1716
      %v1718 = vpop.f32.mrb[0].mxu0
      %1719 = vdwg.mxu0
      %v1720 = vtanh.pop %v1690
      %v1721 = vtanh.pop %v1693
      %v1722 = vtanh.pop %v1698
      %v1723 = vtanh.pop %v1701
      %v1724 = vtanh.pop %v1706
      %v1725 = vtanh.pop %v1709
      %v1726 = vtanh.pop %v1714
      %v1727 = vtanh.pop %v1717
      %v1728 = vpack.c.bf16 %v1721, %v1720
      %v1729 = vpack.c.bf16 %v1723, %v1722
      %v1730 = vpack.c.bf16 %v1725, %v1724
      %v1731 = vpack.c.bf16 %v1727, %v1726
      %v1732 = vld [vmem:[%s7] sm:$0xf]
      %v1733 = vld [vmem:[%s7 + $0x4] sm:$0x3]
      %v1734 = vld [vmem:[%s8] sm:$0x1]
      %v1736 = vlaneseq
      %v1737 = vshrl.u32 %v1736, 7
      %v1738 = vsub.s32 0, %v1737
      %v1739 = vrot.slane %v1734, %v1738
      %v1743 = vunpack.c.l.b16 %v1732
      %v1744 = vunpack.c.l.b16 %v1733
      %v1745 = vpack.c.b16 %v1744, %v1743
      %vm1746 = vcmask 97280
      %v1748 = vsel %vm1746, %v1728, 0
      %v1751 = vsel %vm1746, %v1729, 0
      %v1754 = vsel %vm1746, %v1730, 0
      %v1757 = vsel %vm1746, %v1731, 0
      %vm1759 = vcmask 1045504
      %v1761 = vsel %vm1759, %v1745, 0
      %1763 = vmatprep.subr.bf16.mxu0 0
      %1764 = vmatpush1.bf16.msra.mxu0 %v1761
      %1765 = vmatprep.subr.bf16.mxu0 0
      %1766 = vmatpush1.bf16.msra.mxu0 0
      %1767 = vmatprep.subr.bf16.mxu0 0
      %1768 = vmatpush1.bf16.msra.mxu0 0
      %1769 = vmatprep.subr.bf16.mxu0 0
      %1770 = vmatpush1.bf16.msra.mxu0 0
      %1771 = vmatprep.subr.bf16.mxu0 0
      %1772 = vmatpush1.bf16.msra.mxu0 0
      %1773 = vmatprep.subr.bf16.mxu0 0
      %1774 = vmatpush1.bf16.msra.mxu0 0
      %1775 = vmatprep.subr.bf16.mxu0 0
      %1776 = vmatpush1.bf16.msra.mxu0 0
      %1777 = vmatprep.subr.bf16.mxu0 0
      %1778 = vmatpush1.bf16.msra.mxu0 0
      %1779 = vmatprep.subr.bf16.mxu0 0
      %1780 = vmatpush1.bf16.msra.mxu0 0
      %1781 = vmatprep.subr.bf16.mxu0 0
      %1782 = vmatpush1.bf16.msra.mxu0 0
      %1783 = vmatprep.subr.bf16.mxu0 0
      %1784 = vmatpush1.bf16.msra.mxu0 0
      %1785 = vmatprep.subr.bf16.mxu0 0
      %1786 = vmatpush1.bf16.msra.mxu0 0
      %1787 = vmatprep.subr.bf16.mxu0 0
      %1788 = vmatpush1.bf16.msra.mxu0 0
      %1789 = vmatprep.subr.bf16.mxu0 0
      %1790 = vmatpush1.bf16.msra.mxu0 0
      %1791 = vmatprep.subr.bf16.mxu0 0
      %1792 = vmatpush1.bf16.msra.mxu0 0
      %1793 = vmatprep.subr.bf16.mxu0 0
      %1794 = vmatpush1.bf16.msra.mxu0 0
      %1795 = vmatprep.mubr.bf16.mxu0 0
      %1796 = vmatmul.mubr.bf16.gmra.mrb[0].mxu0 %v1748
      %v1797 = vpop.f32.mrb[0].mxu0
      %v1798 = vadd.f32 %v1739, %v1797
      %v1799 = vpop.f32.mrb[0].mxu0
      %v1800 = vpop.f32.mrb[0].mxu0
      %v1801 = vadd.f32 %v1739, %v1800
      %v1802 = vpop.f32.mrb[0].mxu0
      %1803 = vmatprep.mubr.bf16.mxu0 0
      %1804 = vmatmul.mubr.bf16.gmra.mrb[0].mxu0 %v1751
      %v1805 = vpop.f32.mrb[0].mxu0
      %v1806 = vadd.f32 %v1739, %v1805
      %v1807 = vpop.f32.mrb[0].mxu0
      %v1808 = vpop.f32.mrb[0].mxu0
      %v1809 = vadd.f32 %v1739, %v1808
      %v1810 = vpop.f32.mrb[0].mxu0
      %1811 = vmatprep.mubr.bf16.mxu0 0
      %1812 = vmatmul.mubr.bf16.gmra.mrb[0].mxu0 %v1754
      %v1813 = vpop.f32.mrb[0].mxu0
      %v1814 = vadd.f32 %v1739, %v1813
      %v1815 = vpop.f32.mrb[0].mxu0
      %v1816 = vpop.f32.mrb[0].mxu0
      %v1817 = vadd.f32 %v1739, %v1816
      %v1818 = vpop.f32.mrb[0].mxu0
      %1819 = vmatprep.mubr.bf16.mxu0 0
      %1820 = vmatmul.mubr.bf16.gmra.mrb[0].mxu0 %v1757
      %v1821 = vpop.f32.mrb[0].mxu0
      %v1822 = vadd.f32 %v1739, %v1821
      %v1823 = vpop.f32.mrb[0].mxu0
      %v1824 = vpop.f32.mrb[0].mxu0
      %v1825 = vadd.f32 %v1739, %v1824
      %v1826 = vpop.f32.mrb[0].mxu0
      %1827 = vdwg.mxu0
      %1828 = vst [vmem:[%s589] sm:$0xff] %v1798
      %1829 = vst [vmem:[%s589 + $0x8] sm:$0xff] %v1801
      %1830 = vst [vmem:[%s589 + $0x10] sm:$0xff] %v1806
      %1831 = vst [vmem:[%s589 + $0x18] sm:$0xff] %v1809
      %1832 = vst [vmem:[%s589 + $0x20] sm:$0xff] %v1814
      %1833 = vst [vmem:[%s589 + $0x28] sm:$0xff] %v1817
      %1834 = vst [vmem:[%s589 + $0x30] sm:$0xff] %v1822
      %1835 = vst [vmem:[%s589 + $0x38] sm:$0xff] %v1825
      %v1836 = vpack.c.bf16 %v1801, %v1798
      %v1837 = vpack.c.bf16 %v1809, %v1806
      %v1838 = vpack.c.bf16 %v1817, %v1814
      %v1839 = vpack.c.bf16 %v1825, %v1822
      %v1840 = vld [vmem:[%s9] sm:$0xf]
      %v1841 = vld [vmem:[%s9 + $0x4] sm:$0xf]
      %v1842 = vld [vmem:[%s9 + $0x8] sm:$0xf]
      %v1843 = vld [vmem:[%s9 + $0xc] sm:$0xf]
      %v1844 = vld [vmem:[%s9 + $0x10] sm:$0xf]
      %v1845 = vld [vmem:[%s9 + $0x14] sm:$0xf]
      %v1846 = vld [vmem:[%s9 + $0x18] sm:$0xf]
      %v1847 = vld [vmem:[%s9 + $0x1c] sm:$0xf]
      %v1848 = vld [vmem:[%s9 + $0x20] sm:$0xf]
      %v1849 = vld [vmem:[%s9 + $0x24] sm:$0xf]
      %v1850 = vld [vmem:[%s9 + $0x28] sm:$0xf]
      %v1851 = vld [vmem:[%s9 + $0x2c] sm:$0xf]
      %v1852 = vld [vmem:[%s9 + $0x30] sm:$0xf]
      %v1853 = vld [vmem:[%s9 + $0x34] sm:$0xf]
      %v1854 = vld [vmem:[%s9 + $0x38] sm:$0xf]
      %v1855 = vld [vmem:[%s9 + $0x3c] sm:$0xf]
      %v1856 = vld [vmem:[%s10] sm:$0x1]
      %v1858 = vlaneseq
      %v1859 = vshrl.u32 %v1858, 7
      %v1860 = vsub.s32 0, %v1859
      %v1861 = vrot.slane %v1856, %v1860
      %v1879 = vunpack.c.l.b16 %v1840
      %v1880 = vunpack.c.l.b16 %v1841
      %v1881 = vunpack.c.l.b16 %v1842
      %v1882 = vunpack.c.l.b16 %v1843
      %v1883 = vunpack.c.l.b16 %v1844
      %v1884 = vunpack.c.l.b16 %v1845
      %v1885 = vunpack.c.l.b16 %v1846
      %v1886 = vunpack.c.l.b16 %v1847
      %v1887 = vunpack.c.l.b16 %v1848
      %v1888 = vunpack.c.l.b16 %v1849
      %v1889 = vunpack.c.l.b16 %v1850
      %v1890 = vunpack.c.l.b16 %v1851
      %v1891 = vunpack.c.l.b16 %v1852
      %v1892 = vunpack.c.l.b16 %v1853
      %v1893 = vunpack.c.l.b16 %v1854
      %v1894 = vunpack.c.l.b16 %v1855
      %v1895 = vpack.c.b16 %v1880, %v1879
      %v1896 = vpack.c.b16 %v1882, %v1881
      %v1897 = vpack.c.b16 %v1884, %v1883
      %v1898 = vpack.c.b16 %v1886, %v1885
      %v1899 = vpack.c.b16 %v1888, %v1887
      %v1900 = vpack.c.b16 %v1890, %v1889
      %v1901 = vpack.c.b16 %v1892, %v1891
      %v1902 = vpack.c.b16 %v1894, %v1893
      %1911 = vmatprep.subr.bf16.mxu0 0
      %1912 = vmatpush1.bf16.msra.mxu0 %v1895
      %1913 = vmatprep.subr.bf16.mxu0 0
      %1914 = vmatpush1.bf16.msra.mxu0 %v1896
      %1915 = vmatprep.subr.bf16.mxu0 0
      %1916 = vmatpush1.bf16.msra.mxu0 %v1897
      %1917 = vmatprep.subr.bf16.mxu0 0
      %1918 = vmatpush1.bf16.msra.mxu0 %v1898
      %1919 = vmatprep.subr.bf16.mxu0 0
      %1920 = vmatpush1.bf16.msra.mxu0 %v1899
      %1921 = vmatprep.subr.bf16.mxu0 0
      %1922 = vmatpush1.bf16.msra.mxu0 %v1900
      %1923 = vmatprep.subr.bf16.mxu0 0
      %1924 = vmatpush1.bf16.msra.mxu0 %v1901
      %1925 = vmatprep.subr.bf16.mxu0 0
      %1926 = vmatpush1.bf16.msra.mxu0 %v1902
      %1927 = vmatprep.subr.bf16.mxu0 0
      %1928 = vmatpush1.bf16.msra.mxu0 0
      %1929 = vmatprep.subr.bf16.mxu0 0
      %1930 = vmatpush1.bf16.msra.mxu0 0
      %1931 = vmatprep.subr.bf16.mxu0 0
      %1932 = vmatpush1.bf16.msra.mxu0 0
      %1933 = vmatprep.subr.bf16.mxu0 0
      %1934 = vmatpush1.bf16.msra.mxu0 0
      %1935 = vmatprep.subr.bf16.mxu0 0
      %1936 = vmatpush1.bf16.msra.mxu0 0
      %1937 = vmatprep.subr.bf16.mxu0 0
      %1938 = vmatpush1.bf16.msra.mxu0 0
      %1939 = vmatprep.subr.bf16.mxu0 0
      %1940 = vmatpush1.bf16.msra.mxu0 0
      %1941 = vmatprep.subr.bf16.mxu0 0
      %1942 = vmatpush1.bf16.msra.mxu0 0
      %1943 = vmatprep.mubr.bf16.mxu0 0
      %1944 = vmatmul.mubr.bf16.gmra.mrb[0].mxu0 %v1836
      %v1945 = vpop.f32.mrb[0].mxu0
      %v1946 = vadd.f32 %v1861, %v1945
      %v1947 = vpop.f32.mrb[0].mxu0
      %v1948 = vpop.f32.mrb[0].mxu0
      %v1949 = vadd.f32 %v1861, %v1948
      %v1950 = vpop.f32.mrb[0].mxu0
      %1951 = vmatprep.mubr.bf16.mxu0 0
      %1952 = vmatmul.mubr.bf16.gmra.mrb[0].mxu0 %v1837
      %v1953 = vpop.f32.mrb[0].mxu0
      %v1954 = vadd.f32 %v1861, %v1953
      %v1955 = vpop.f32.mrb[0].mxu0
      %v1956 = vpop.f32.mrb[0].mxu0
      %v1957 = vadd.f32 %v1861, %v1956
      %v1958 = vpop.f32.mrb[0].mxu0
      %1959 = vmatprep.mubr.bf16.mxu0 0
      %1960 = vmatmul.mubr.bf16.gmra.mrb[0].mxu0 %v1838
      %v1961 = vpop.f32.mrb[0].mxu0
      %v1962 = vadd.f32 %v1861, %v1961
      %v1963 = vpop.f32.mrb[0].mxu0
      %v1964 = vpop.f32.mrb[0].mxu0
      %v1965 = vadd.f32 %v1861, %v1964
      %v1966 = vpop.f32.mrb[0].mxu0
      %1967 = vmatprep.mubr.bf16.mxu0 0
      %1968 = vmatmul.mubr.bf16.gmra.mrb[0].mxu0 %v1839
      %v1969 = vpop.f32.mrb[0].mxu0
      %v1970 = vadd.f32 %v1861, %v1969
      %v1971 = vpop.f32.mrb[0].mxu0
      %v1972 = vpop.f32.mrb[0].mxu0
      %v1973 = vadd.f32 %v1861, %v1972
      %v1974 = vpop.f32.mrb[0].mxu0
      %1975 = vdwg.mxu0
      %v1976 = vtanh.pop %v1946
      %v1977 = vtanh.pop %v1949
      %v1978 = vtanh.pop %v1954
      %v1979 = vtanh.pop %v1957
      %v1980 = vtanh.pop %v1962
      %v1981 = vtanh.pop %v1965
      %v1982 = vtanh.pop %v1970
      %v1983 = vtanh.pop %v1973
      %v1984 = vpack.c.bf16 %v1977, %v1976
      %v1985 = vpack.c.bf16 %v1979, %v1978
      %v1986 = vpack.c.bf16 %v1981, %v1980
      %v1987 = vpack.c.bf16 %v1983, %v1982
      %v1988 = vld [vmem:[%s11] sm:$0xf]
      %v1989 = vld [vmem:[%s11 + $0x4] sm:$0x3]
      %v1990 = vld [vmem:[%s12] sm:$0x1]
      %v1992 = vlaneseq
      %v1993 = vshrl.u32 %v1992, 7
      %v1994 = vsub.s32 0, %v1993
      %v1995 = vrot.slane %v1990, %v1994
      %v1999 = vunpack.c.l.b16 %v1988
      %v2000 = vunpack.c.l.b16 %v1989
      %v2001 = vpack.c.b16 %v2000, %v1999
      %v2003 = vsel %vm1746, %v1984, 0
      %v2006 = vsel %vm1746, %v1985, 0
      %v2009 = vsel %vm1746, %v1986, 0
      %v2012 = vsel %vm1746, %v1987, 0
      %v2015 = vsel %vm1759, %v2001, 0
      %2017 = vmatprep.subr.bf16.mxu0 0
      %2018 = vmatpush1.bf16.msra.mxu0 %v2015
      %2019 = vmatprep.subr.bf16.mxu0 0
      %2020 = vmatpush1.bf16.msra.mxu0 0
      %2021 = vmatprep.subr.bf16.mxu0 0
      %2022 = vmatpush1.bf16.msra.mxu0 0
      %2023 = vmatprep.subr.bf16.mxu0 0
      %2024 = vmatpush1.bf16.msra.mxu0 0
      %2025 = vmatprep.subr.bf16.mxu0 0
      %2026 = vmatpush1.bf16.msra.mxu0 0
      %2027 = vmatprep.subr.bf16.mxu0 0
      %2028 = vmatpush1.bf16.msra.mxu0 0
      %2029 = vmatprep.subr.bf16.mxu0 0
      %2030 = vmatpush1.bf16.msra.mxu0 0
      %2031 = vmatprep.subr.bf16.mxu0 0
      %2032 = vmatpush1.bf16.msra.mxu0 0
      %2033 = vmatprep.subr.bf16.mxu0 0
      %2034 = vmatpush1.bf16.msra.mxu0 0
      %2035 = vmatprep.subr.bf16.mxu0 0
      %2036 = vmatpush1.bf16.msra.mxu0 0
      %2037 = vmatprep.subr.bf16.mxu0 0
      %2038 = vmatpush1.bf16.msra.mxu0 0
      %2039 = vmatprep.subr.bf16.mxu0 0
      %2040 = vmatpush1.bf16.msra.mxu0 0
      %2041 = vmatprep.subr.bf16.mxu0 0
      %2042 = vmatpush1.bf16.msra.mxu0 0
      %2043 = vmatprep.subr.bf16.mxu0 0
      %2044 = vmatpush1.bf16.msra.mxu0 0
      %2045 = vmatprep.subr.bf16.mxu0 0
      %2046 = vmatpush1.bf16.msra.mxu0 0
      %2047 = vmatprep.subr.bf16.mxu0 0
      %2048 = vmatpush1.bf16.msra.mxu0 0
      %2049 = vmatprep.mubr.bf16.mxu0 0
      %2050 = vmatmul.mubr.bf16.gmra.mrb[0].mxu0 %v2003
      %v2051 = vpop.f32.mrb[0].mxu0
      %v2052 = vadd.f32 %v1995, %v2051
      %v2053 = vpop.f32.mrb[0].mxu0
      %v2054 = vpop.f32.mrb[0].mxu0
      %v2055 = vadd.f32 %v1995, %v2054
      %v2056 = vpop.f32.mrb[0].mxu0
      %2057 = vmatprep.mubr.bf16.mxu0 0
      %2058 = vmatmul.mubr.bf16.gmra.mrb[0].mxu0 %v2006
      %v2059 = vpop.f32.mrb[0].mxu0
      %v2060 = vadd.f32 %v1995, %v2059
      %v2061 = vpop.f32.mrb[0].mxu0
      %v2062 = vpop.f32.mrb[0].mxu0
      %v2063 = vadd.f32 %v1995, %v2062
      %v2064 = vpop.f32.mrb[0].mxu0
      %2065 = vmatprep.mubr.bf16.mxu0 0
      %2066 = vmatmul.mubr.bf16.gmra.mrb[0].mxu0 %v2009
      %v2067 = vpop.f32.mrb[0].mxu0
      %v2068 = vadd.f32 %v1995, %v2067
      %v2069 = vpop.f32.mrb[0].mxu0
      %v2070 = vpop.f32.mrb[0].mxu0
      %v2071 = vadd.f32 %v1995, %v2070
      %v2072 = vpop.f32.mrb[0].mxu0
      %2073 = vmatprep.mubr.bf16.mxu0 0
      %2074 = vmatmul.mubr.bf16.gmra.mrb[0].mxu0 %v2012
      %v2075 = vpop.f32.mrb[0].mxu0
      %v2076 = vadd.f32 %v1995, %v2075
      %v2077 = vpop.f32.mrb[0].mxu0
      %v2078 = vpop.f32.mrb[0].mxu0
      %v2079 = vadd.f32 %v1995, %v2078
      %v2080 = vpop.f32.mrb[0].mxu0
      %2081 = vdwg.mxu0
      %v2082 = vtanh.pop %v2052
      %v2083 = vtanh.pop %v2055
      %v2084 = vtanh.pop %v2060
      %v2085 = vtanh.pop %v2063
      %v2086 = vtanh.pop %v2068
      %v2087 = vtanh.pop %v2071
      %v2088 = vtanh.pop %v2076
      %v2089 = vtanh.pop %v2079
      %v2090 = vpack.c.bf16 %v2083, %v2082
      %v2091 = vpack.c.bf16 %v2085, %v2084
      %v2092 = vpack.c.bf16 %v2087, %v2086
      %v2093 = vpack.c.bf16 %v2089, %v2088
      %v2094 = vld [vmem:[%s13] sm:$0xf]
      %v2095 = vld [vmem:[%s13 + $0x4] sm:$0xf]
      %v2096 = vld [vmem:[%s13 + $0x8] sm:$0xf]
      %v2097 = vld [vmem:[%s13 + $0xc] sm:$0xf]
      %v2098 = vld [vmem:[%s13 + $0x10] sm:$0xf]
      %v2099 = vld [vmem:[%s13 + $0x14] sm:$0xf]
      %v2100 = vld [vmem:[%s13 + $0x18] sm:$0xf]
      %v2101 = vld [vmem:[%s13 + $0x1c] sm:$0xf]
      %v2102 = vld [vmem:[%s14] sm:$0x1]
      %v2104 = vlaneseq
      %v2105 = vshrl.u32 %v2104, 7
      %v2106 = vsub.s32 0, %v2105
      %v2107 = vrot.slane %v2102, %v2106
      %v2117 = vunpack.c.l.b16 %v2094
      %v2118 = vunpack.c.l.b16 %v2095
      %v2119 = vunpack.c.l.b16 %v2096
      %v2120 = vunpack.c.l.b16 %v2097
      %v2121 = vunpack.c.l.b16 %v2098
      %v2122 = vunpack.c.l.b16 %v2099
      %v2123 = vunpack.c.l.b16 %v2100
      %v2124 = vunpack.c.l.b16 %v2101
      %v2125 = vpack.c.b16 %v2118, %v2117
      %v2126 = vpack.c.b16 %v2120, %v2119
      %v2127 = vpack.c.b16 %v2122, %v2121
      %v2128 = vpack.c.b16 %v2124, %v2123
      %v2134 = vsel %vm1642, %v2090, 0
      %v2137 = vsel %vm1642, %v2091, 0
      %v2140 = vsel %vm1642, %v2092, 0
      %v2143 = vsel %vm1642, %v2093, 0
      %2145 = vmatprep.subr.bf16.mxu0 0
      %2146 = vmatpush1.bf16.msra.mxu0 %v2125
      %2147 = vmatprep.subr.bf16.mxu0 0
      %2148 = vmatpush1.bf16.msra.mxu0 %v2126
      %2149 = vmatprep.subr.bf16.mxu0 0
      %2150 = vmatpush1.bf16.msra.mxu0 %v2127
      %2151 = vmatprep.subr.bf16.mxu0 0
      %2152 = vmatpush1.bf16.msra.mxu0 %v2128
      %2153 = vmatprep.subr.bf16.mxu0 0
      %2154 = vmatpush1.bf16.msra.mxu0 0
      %2155 = vmatprep.subr.bf16.mxu0 0
      %2156 = vmatpush1.bf16.msra.mxu0 0
      %2157 = vmatprep.subr.bf16.mxu0 0
      %2158 = vmatpush1.bf16.msra.mxu0 0
      %2159 = vmatprep.subr.bf16.mxu0 0
      %2160 = vmatpush1.bf16.msra.mxu0 0
      %2161 = vmatprep.subr.bf16.mxu0 0
      %2162 = vmatpush1.bf16.msra.mxu0 0
      %2163 = vmatprep.subr.bf16.mxu0 0
      %2164 = vmatpush1.bf16.msra.mxu0 0
      %2165 = vmatprep.subr.bf16.mxu0 0
      %2166 = vmatpush1.bf16.msra.mxu0 0
      %2167 = vmatprep.subr.bf16.mxu0 0
      %2168 = vmatpush1.bf16.msra.mxu0 0
      %2169 = vmatprep.subr.bf16.mxu0 0
      %2170 = vmatpush1.bf16.msra.mxu0 0
      %2171 = vmatprep.subr.bf16.mxu0 0
      %2172 = vmatpush1.bf16.msra.mxu0 0
      %2173 = vmatprep.subr.bf16.mxu0 0
      %2174 = vmatpush1.bf16.msra.mxu0 0
      %2175 = vmatprep.subr.bf16.mxu0 0
      %2176 = vmatpush1.bf16.msra.mxu0 0
      %2177 = vmatprep.mubr.bf16.mxu0 0
      %2178 = vmatmul.mubr.bf16.gmra.mrb[0].mxu0 %v2134
      %v2179 = vpop.f32.mrb[0].mxu0
      %v2180 = vadd.f32 %v2107, %v2179
      %v2181 = vpop.f32.mrb[0].mxu0
      %v2182 = vpop.f32.mrb[0].mxu0
      %v2183 = vadd.f32 %v2107, %v2182
      %v2184 = vpop.f32.mrb[0].mxu0
      %2185 = vmatprep.mubr.bf16.mxu0 0
      %2186 = vmatmul.mubr.bf16.gmra.mrb[0].mxu0 %v2137
      %v2187 = vpop.f32.mrb[0].mxu0
      %v2188 = vadd.f32 %v2107, %v2187
      %v2189 = vpop.f32.mrb[0].mxu0
      %v2190 = vpop.f32.mrb[0].mxu0
      %v2191 = vadd.f32 %v2107, %v2190
      %v2192 = vpop.f32.mrb[0].mxu0
      %2193 = vmatprep.mubr.bf16.mxu0 0
      %2194 = vmatmul.mubr.bf16.gmra.mrb[0].mxu0 %v2140
      %v2195 = vpop.f32.mrb[0].mxu0
      %v2196 = vadd.f32 %v2107, %v2195
      %v2197 = vpop.f32.mrb[0].mxu0
      %v2198 = vpop.f32.mrb[0].mxu0
      %v2199 = vadd.f32 %v2107, %v2198
      %v2200 = vpop.f32.mrb[0].mxu0
      %2201 = vmatprep.mubr.bf16.mxu0 0
      %2202 = vmatmul.mubr.bf16.gmra.mrb[0].mxu0 %v2143
      %v2203 = vpop.f32.mrb[0].mxu0
      %v2204 = vadd.f32 %v2107, %v2203
      %v2205 = vpop.f32.mrb[0].mxu0
      %v2206 = vpop.f32.mrb[0].mxu0
      %v2207 = vadd.f32 %v2107, %v2206
      %v2208 = vpop.f32.mrb[0].mxu0
      %2209 = vdwg.mxu0
      %v2210 = vtanh.pop %v2180
      %v2211 = vtanh.pop %v2183
      %v2212 = vtanh.pop %v2188
      %v2213 = vtanh.pop %v2191
      %v2214 = vtanh.pop %v2196
      %v2215 = vtanh.pop %v2199
      %v2216 = vtanh.pop %v2204
      %v2217 = vtanh.pop %v2207
      %v2218 = vpack.c.bf16 %v2211, %v2210
      %v2219 = vpack.c.bf16 %v2213, %v2212
      %v2220 = vpack.c.bf16 %v2215, %v2214
      %v2221 = vpack.c.bf16 %v2217, %v2216
      %v2222 = vld [vmem:[%s15] sm:$0xff]
      %v2223 = vld [vmem:[%s15 + $0x8] sm:$0xff]
      %v2224 = vld [vmem:[%s15 + $0x10] sm:$0xff]
      %v2225 = vld [vmem:[%s15 + $0x18] sm:$0xf]
      %v2226 = vld [vmem:[%s15 + $0x1c] sm:$0xff]
      %v2227 = vld [vmem:[%s15 + $0x24] sm:$0xff]
      %v2228 = vld [vmem:[%s15 + $0x2c] sm:$0xff]
      %v2229 = vld [vmem:[%s15 + $0x34] sm:$0xf]
      %v2230 = vld [vmem:[%s15 + $0x38] sm:$0xff]
      %v2231 = vld [vmem:[%s15 + $0x40] sm:$0xff]
      %v2232 = vld [vmem:[%s15 + $0x48] sm:$0xff]
      %v2233 = vld [vmem:[%s15 + $0x50] sm:$0xf]
      %v2234 = vld [vmem:[%s15 + $0x54] sm:$0xff]
      %v2235 = vld [vmem:[%s15 + $0x5c] sm:$0xff]
      %v2236 = vld [vmem:[%s15 + $0x64] sm:$0xff]
      %v2237 = vld [vmem:[%s15 + $0x6c] sm:$0xf]
      %v2238 = vld [vmem:[%s15 + $0x70] sm:$0xff]
      %v2239 = vld [vmem:[%s15 + $0x78] sm:$0xff]
      %v2240 = vld [vmem:[%s15 + $0x80] sm:$0xff]
      %v2241 = vld [vmem:[%s15 + $0x88] sm:$0xf]
      %v2242 = vld [vmem:[%s15 + $0x8c] sm:$0xff]
      %v2243 = vld [vmem:[%s15 + $0x94] sm:$0xff]
      %v2244 = vld [vmem:[%s15 + $0x9c] sm:$0xff]
      %v2245 = vld [vmem:[%s15 + $0xa4] sm:$0xf]
      %v2246 = vld [vmem:[%s15 + $0xa8] sm:$0xff]
      %v2247 = vld [vmem:[%s15 + $0xb0] sm:$0xff]
      %v2248 = vld [vmem:[%s15 + $0xb8] sm:$0xff]
      %v2249 = vld [vmem:[%s15 + $0xc0] sm:$0xf]
      %v2250 = vld [vmem:[%s15 + $0xc4] sm:$0xff]
      %v2251 = vld [vmem:[%s15 + $0xcc] sm:$0xff]
      %v2252 = vld [vmem:[%s15 + $0xd4] sm:$0xff]
      %v2253 = vld [vmem:[%s15 + $0xdc] sm:$0xf]
      %v2254 = vld [vmem:[%s15 + $0xe0] sm:$0xff]
      %v2255 = vld [vmem:[%s15 + $0xe8] sm:$0xff]
      %v2256 = vld [vmem:[%s15 + $0xf0] sm:$0xff]
      %v2257 = vld [vmem:[%s15 + $0xf8] sm:$0xf]
      %v2258 = vld [vmem:[%s15 + $0xfc] sm:$0xff]
      %v2259 = vld [vmem:[%s15 + $0x104] sm:$0xff]
      %v2260 = vld [vmem:[%s15 + $0x10c] sm:$0xff]
      %v2261 = vld [vmem:[%s15 + $0x114] sm:$0xf]
      %v2262 = vld [vmem:[%s15 + $0x118] sm:$0xff]
      %v2263 = vld [vmem:[%s15 + $0x120] sm:$0xff]
      %v2264 = vld [vmem:[%s15 + $0x128] sm:$0xff]
      %v2265 = vld [vmem:[%s15 + $0x130] sm:$0xf]
      %v2266 = vld [vmem:[%s15 + $0x134] sm:$0xff]
      %v2267 = vld [vmem:[%s15 + $0x13c] sm:$0xff]
      %v2268 = vld [vmem:[%s15 + $0x144] sm:$0xff]
      %v2269 = vld [vmem:[%s15 + $0x14c] sm:$0xf]
      %v2270 = vld [vmem:[%s15 + $0x150] sm:$0xff]
      %v2271 = vld [vmem:[%s15 + $0x158] sm:$0xff]
      %v2272 = vld [vmem:[%s15 + $0x160] sm:$0xff]
      %v2273 = vld [vmem:[%s15 + $0x168] sm:$0xf]
      %v2274 = vld [vmem:[%s15 + $0x16c] sm:$0xff]
      %v2275 = vld [vmem:[%s15 + $0x174] sm:$0xff]
      %v2276 = vld [vmem:[%s15 + $0x17c] sm:$0xff]
      %v2277 = vld [vmem:[%s15 + $0x184] sm:$0xf]
      %v2278 = vld [vmem:[%s15 + $0x188] sm:$0xff]
      %v2279 = vld [vmem:[%s15 + $0x190] sm:$0xff]
      %v2280 = vld [vmem:[%s15 + $0x198] sm:$0xff]
      %v2281 = vld [vmem:[%s15 + $0x1a0] sm:$0xf]
      %v2282 = vld [vmem:[%s15 + $0x1a4] sm:$0xff]
      %v2283 = vld [vmem:[%s15 + $0x1ac] sm:$0xff]
      %v2284 = vld [vmem:[%s15 + $0x1b4] sm:$0xff]
      %v2285 = vld [vmem:[%s15 + $0x1bc] sm:$0xf]
      %v2286 = vld [vmem:[%s16] sm:$0x7f]
      %v2288 = vlaneseq
      %v2289 = vshrl.u32 %v2288, 7
      %v2290 = vsub.s32 0, %v2289
      %v2291 = vrot.slane %v2286, %v2290
      %v2292 = vlaneseq
      %v2293 = vshrl.u32 %v2292, 7
      %v2294 = vsub.s32 1, %v2293
      %v2295 = vrot.slane %v2286, %v2294
      %v2296 = vlaneseq
      %v2297 = vshrl.u32 %v2296, 7
      %v2298 = vsub.s32 2, %v2297
      %v2299 = vrot.slane %v2286, %v2298
      %v2300 = vlaneseq
      %v2301 = vshrl.u32 %v2300, 7
      %v2302 = vsub.s32 3, %v2301
      %v2303 = vrot.slane %v2286, %v2302
      %v2304 = vlaneseq
      %v2305 = vshrl.u32 %v2304, 7
      %v2306 = vsub.s32 4, %v2305
      %v2307 = vrot.slane %v2286, %v2306
      %v2308 = vlaneseq
      %v2309 = vshrl.u32 %v2308, 7
      %v2310 = vsub.s32 5, %v2309
      %v2311 = vrot.slane %v2286, %v2310
      %v2312 = vlaneseq
      %v2313 = vshrl.u32 %v2312, 7
      %v2314 = vsub.s32 6, %v2313
      %v2315 = vrot.slane %v2286, %v2314
      %v2387 = vunpack.c.l.b16 %v2222
      %v2388 = vunpack.c.h.b16 %v2222
      %v2389 = vunpack.c.l.b16 %v2223
      %v2390 = vunpack.c.h.b16 %v2223
      %v2391 = vunpack.c.l.b16 %v2224
      %v2392 = vunpack.c.h.b16 %v2224
      %v2393 = vunpack.c.l.b16 %v2225
      %v2394 = vunpack.c.l.b16 %v2226
      %v2395 = vunpack.c.h.b16 %v2226
      %v2396 = vunpack.c.l.b16 %v2227
      %v2397 = vunpack.c.h.b16 %v2227
      %v2398 = vunpack.c.l.b16 %v2228
      %v2399 = vunpack.c.h.b16 %v2228
      %v2400 = vunpack.c.l.b16 %v2229
      %v2401 = vunpack.c.l.b16 %v2230
      %v2402 = vunpack.c.h.b16 %v2230
      %v2403 = vunpack.c.l.b16 %v2231
      %v2404 = vunpack.c.h.b16 %v2231
      %v2405 = vunpack.c.l.b16 %v2232
      %v2406 = vunpack.c.h.b16 %v2232
      %v2407 = vunpack.c.l.b16 %v2233
      %v2408 = vunpack.c.l.b16 %v2234
      %v2409 = vunpack.c.h.b16 %v2234
      %v2410 = vunpack.c.l.b16 %v2235
      %v2411 = vunpack.c.h.b16 %v2235
      %v2412 = vunpack.c.l.b16 %v2236
      %v2413 = vunpack.c.h.b16 %v2236
      %v2414 = vunpack.c.l.b16 %v2237
      %v2415 = vunpack.c.l.b16 %v2238
      %v2416 = vunpack.c.h.b16 %v2238
      %v2417 = vunpack.c.l.b16 %v2239
      %v2418 = vunpack.c.h.b16 %v2239
      %v2419 = vunpack.c.l.b16 %v2240
      %v2420 = vunpack.c.h.b16 %v2240
      %v2421 = vunpack.c.l.b16 %v2241
      %v2422 = vunpack.c.l.b16 %v2242
      %v2423 = vunpack.c.h.b16 %v2242
      %v2424 = vunpack.c.l.b16 %v2243
      %v2425 = vunpack.c.h.b16 %v2243
      %v2426 = vunpack.c.l.b16 %v2244
      %v2427 = vunpack.c.h.b16 %v2244
      %v2428 = vunpack.c.l.b16 %v2245
      %v2429 = vunpack.c.l.b16 %v2246
      %v2430 = vunpack.c.h.b16 %v2246
      %v2431 = vunpack.c.l.b16 %v2247
      %v2432 = vunpack.c.h.b16 %v2247
      %v2433 = vunpack.c.l.b16 %v2248
      %v2434 = vunpack.c.h.b16 %v2248
      %v2435 = vunpack.c.l.b16 %v2249
      %v2436 = vunpack.c.l.b16 %v2250
      %v2437 = vunpack.c.h.b16 %v2250
      %v2438 = vunpack.c.l.b16 %v2251
      %v2439 = vunpack.c.h.b16 %v2251
      %v2440 = vunpack.c.l.b16 %v2252
      %v2441 = vunpack.c.h.b16 %v2252
      %v2442 = vunpack.c.l.b16 %v2253
      %v2443 = vunpack.c.l.b16 %v2254
      %v2444 = vunpack.c.h.b16 %v2254
      %v2445 = vunpack.c.l.b16 %v2255
      %v2446 = vunpack.c.h.b16 %v2255
      %v2447 = vunpack.c.l.b16 %v2256
      %v2448 = vunpack.c.h.b16 %v2256
      %v2449 = vunpack.c.l.b16 %v2257
      %v2450 = vunpack.c.l.b16 %v2258
      %v2451 = vunpack.c.h.b16 %v2258
      %v2452 = vunpack.c.l.b16 %v2259
      %v2453 = vunpack.c.h.b16 %v2259
      %v2454 = vunpack.c.l.b16 %v2260
      %v2455 = vunpack.c.h.b16 %v2260
      %v2456 = vunpack.c.l.b16 %v2261
      %v2457 = vunpack.c.l.b16 %v2262
      %v2458 = vunpack.c.h.b16 %v2262
      %v2459 = vunpack.c.l.b16 %v2263
      %v2460 = vunpack.c.h.b16 %v2263
      %v2461 = vunpack.c.l.b16 %v2264
      %v2462 = vunpack.c.h.b16 %v2264
      %v2463 = vunpack.c.l.b16 %v2265
      %v2464 = vunpack.c.l.b16 %v2266
      %v2465 = vunpack.c.h.b16 %v2266
      %v2466 = vunpack.c.l.b16 %v2267
      %v2467 = vunpack.c.h.b16 %v2267
      %v2468 = vunpack.c.l.b16 %v2268
      %v2469 = vunpack.c.h.b16 %v2268
      %v2470 = vunpack.c.l.b16 %v2269
      %v2471 = vunpack.c.l.b16 %v2270
      %v2472 = vunpack.c.h.b16 %v2270
      %v2473 = vunpack.c.l.b16 %v2271
      %v2474 = vunpack.c.h.b16 %v2271
      %v2475 = vunpack.c.l.b16 %v2272
      %v2476 = vunpack.c.h.b16 %v2272
      %v2477 = vunpack.c.l.b16 %v2273
      %v2478 = vunpack.c.l.b16 %v2274
      %v2479 = vunpack.c.h.b16 %v2274
      %v2480 = vunpack.c.l.b16 %v2275
      %v2481 = vunpack.c.h.b16 %v2275
      %v2482 = vunpack.c.l.b16 %v2276
      %v2483 = vunpack.c.h.b16 %v2276
      %v2484 = vunpack.c.l.b16 %v2277
      %v2485 = vunpack.c.l.b16 %v2278
      %v2486 = vunpack.c.h.b16 %v2278
      %v2487 = vunpack.c.l.b16 %v2279
      %v2488 = vunpack.c.h.b16 %v2279
      %v2489 = vunpack.c.l.b16 %v2280
      %v2490 = vunpack.c.h.b16 %v2280
      %v2491 = vunpack.c.l.b16 %v2281
      %v2492 = vunpack.c.l.b16 %v2282
      %v2493 = vunpack.c.h.b16 %v2282
      %v2494 = vunpack.c.l.b16 %v2283
      %v2495 = vunpack.c.h.b16 %v2283
      %v2496 = vunpack.c.l.b16 %v2284
      %v2497 = vunpack.c.h.b16 %v2284
      %v2498 = vunpack.c.l.b16 %v2285
      %v2499 = vpack.c.b16 %v2394, %v2387
      %v2500 = vpack.c.b16 %v2395, %v2388
      %v2501 = vpack.c.b16 %v2396, %v2389
      %v2502 = vpack.c.b16 %v2397, %v2390
      %v2503 = vpack.c.b16 %v2398, %v2391
      %v2504 = vpack.c.b16 %v2399, %v2392
      %v2505 = vpack.c.b16 %v2400, %v2393
      %v2506 = vpack.c.b16 %v2408, %v2401
      %v2507 = vpack.c.b16 %v2409, %v2402
      %v2508 = vpack.c.b16 %v2410, %v2403
      %v2509 = vpack.c.b16 %v2411, %v2404
      %v2510 = vpack.c.b16 %v2412, %v2405
      %v2511 = vpack.c.b16 %v2413, %v2406
      %v2512 = vpack.c.b16 %v2414, %v2407
      %v2513 = vpack.c.b16 %v2422, %v2415
      %v2514 = vpack.c.b16 %v2423, %v2416
      %v2515 = vpack.c.b16 %v2424, %v2417
      %v2516 = vpack.c.b16 %v2425, %v2418
      %v2517 = vpack.c.b16 %v2426, %v2419
      %v2518 = vpack.c.b16 %v2427, %v2420
      %v2519 = vpack.c.b16 %v2428, %v2421
      %v2520 = vpack.c.b16 %v2436, %v2429
      %v2521 = vpack.c.b16 %v2437, %v2430
      %v2522 = vpack.c.b16 %v2438, %v2431
      %v2523 = vpack.c.b16 %v2439, %v2432
      %v2524 = vpack.c.b16 %v2440, %v2433
      %v2525 = vpack.c.b16 %v2441, %v2434
      %v2526 = vpack.c.b16 %v2442, %v2435
      %v2527 = vpack.c.b16 %v2450, %v2443
      %v2528 = vpack.c.b16 %v2451, %v2444
      %v2529 = vpack.c.b16 %v2452, %v2445
      %v2530 = vpack.c.b16 %v2453, %v2446
      %v2531 = vpack.c.b16 %v2454, %v2447
      %v2532 = vpack.c.b16 %v2455, %v2448
      %v2533 = vpack.c.b16 %v2456, %v2449
      %v2534 = vpack.c.b16 %v2464, %v2457
      %v2535 = vpack.c.b16 %v2465, %v2458
      %v2536 = vpack.c.b16 %v2466, %v2459
      %v2537 = vpack.c.b16 %v2467, %v2460
      %v2538 = vpack.c.b16 %v2468, %v2461
      %v2539 = vpack.c.b16 %v2469, %v2462
      %v2540 = vpack.c.b16 %v2470, %v2463
      %v2541 = vpack.c.b16 %v2478, %v2471
      %v2542 = vpack.c.b16 %v2479, %v2472
      %v2543 = vpack.c.b16 %v2480, %v2473
      %v2544 = vpack.c.b16 %v2481, %v2474
      %v2545 = vpack.c.b16 %v2482, %v2475
      %v2546 = vpack.c.b16 %v2483, %v2476
      %v2547 = vpack.c.b16 %v2484, %v2477
      %v2548 = vpack.c.b16 %v2492, %v2485
      %v2549 = vpack.c.b16 %v2493, %v2486
      %v2550 = vpack.c.b16 %v2494, %v2487
      %v2551 = vpack.c.b16 %v2495, %v2488
      %v2552 = vpack.c.b16 %v2496, %v2489
      %v2553 = vpack.c.b16 %v2497, %v2490
      %v2554 = vpack.c.b16 %v2498, %v2491
      %2611 = vmatprep.subr.bf16.mxu0 %v2500
      %2612 = vmatpush1.bf16.msra.mxu0 %v2499
      %2613 = vmatprep.subr.bf16.mxu0 %v2507
      %2614 = vmatpush1.bf16.msra.mxu0 %v2506
      %2615 = vmatprep.subr.bf16.mxu0 %v2514
      %2616 = vmatpush1.bf16.msra.mxu0 %v2513
      %2617 = vmatprep.subr.bf16.mxu0 %v2521
      %2618 = vmatpush1.bf16.msra.mxu0 %v2520
      %2619 = vmatprep.subr.bf16.mxu0 %v2528
      %2620 = vmatpush1.bf16.msra.mxu0 %v2527
      %2621 = vmatprep.subr.bf16.mxu0 %v2535
      %2622 = vmatpush1.bf16.msra.mxu0 %v2534
      %2623 = vmatprep.subr.bf16.mxu0 %v2542
      %2624 = vmatpush1.bf16.msra.mxu0 %v2541
      %2625 = vmatprep.subr.bf16.mxu0 %v2549
      %2626 = vmatpush1.bf16.msra.mxu0 %v2548
      %2627 = vmatprep.subr.bf16.mxu0 0
      %2628 = vmatpush1.bf16.msra.mxu0 0
      %2629 = vmatprep.subr.bf16.mxu0 0
      %2630 = vmatpush1.bf16.msra.mxu0 0
      %2631 = vmatprep.subr.bf16.mxu0 0
      %2632 = vmatpush1.bf16.msra.mxu0 0
      %2633 = vmatprep.subr.bf16.mxu0 0
      %2634 = vmatpush1.bf16.msra.mxu0 0
      %2635 = vmatprep.subr.bf16.mxu0 0
      %2636 = vmatpush1.bf16.msra.mxu0 0
      %2637 = vmatprep.subr.bf16.mxu0 0
      %2638 = vmatpush1.bf16.msra.mxu0 0
      %2639 = vmatprep.subr.bf16.mxu0 0
      %2640 = vmatpush1.bf16.msra.mxu0 0
      %2641 = vmatprep.subr.bf16.mxu0 0
      %2642 = vmatpush1.bf16.msra.mxu0 0
      %2643 = vmatprep.mubr.bf16.mxu0 0
      %2644 = vmatmul.mubr.bf16.gmra.mrb[0].mxu0 %v2218
      %v2645 = vpop.f32.mrb[0].mxu0
      %v2646 = vadd.f32 %v2291, %v2645
      %v2647 = vpop.f32.mrb[0].mxu0
      %v2648 = vadd.f32 %v2295, %v2647
      %v2649 = vpop.f32.mrb[0].mxu0
      %v2650 = vadd.f32 %v2291, %v2649
      %v2651 = vpop.f32.mrb[0].mxu0
      %v2652 = vadd.f32 %v2295, %v2651
      %2653 = vmatprep.mubr.bf16.mxu0 0
      %2654 = vmatmul.mubr.bf16.gmra.mrb[0].mxu0 %v2219
      %v2655 = vpop.f32.mrb[0].mxu0
      %v2656 = vadd.f32 %v2291, %v2655
      %v2657 = vpop.f32.mrb[0].mxu0
      %v2658 = vadd.f32 %v2295, %v2657
      %v2659 = vpop.f32.mrb[0].mxu0
      %v2660 = vadd.f32 %v2291, %v2659
      %v2661 = vpop.f32.mrb[0].mxu0
      %v2662 = vadd.f32 %v2295, %v2661
      %2663 = vmatprep.mubr.bf16.mxu0 0
      %2664 = vmatmul.mubr.bf16.gmra.mrb[0].mxu0 %v2220
      %v2665 = vpop.f32.mrb[0].mxu0
      %v2666 = vadd.f32 %v2291, %v2665
      %v2667 = vpop.f32.mrb[0].mxu0
      %v2668 = vadd.f32 %v2295, %v2667
      %v2669 = vpop.f32.mrb[0].mxu0
      %v2670 = vadd.f32 %v2291, %v2669
      %v2671 = vpop.f32.mrb[0].mxu0
      %v2672 = vadd.f32 %v2295, %v2671
      %2673 = vmatprep.mubr.bf16.mxu0 0
      %2674 = vmatmul.mubr.bf16.gmra.mrb[0].mxu0 %v2221
      %v2675 = vpop.f32.mrb[0].mxu0
      %v2676 = vadd.f32 %v2291, %v2675
      %v2677 = vpop.f32.mrb[0].mxu0
      %v2678 = vadd.f32 %v2295, %v2677
      %v2679 = vpop.f32.mrb[0].mxu0
      %v2680 = vadd.f32 %v2291, %v2679
      %v2681 = vpop.f32.mrb[0].mxu0
      %v2682 = vadd.f32 %v2295, %v2681
      %2683 = vdwg.mxu0
      %2684 = vmatprep.subr.bf16.mxu0 %v2502
      %2685 = vmatpush1.bf16.msra.mxu0 %v2501
      %2686 = vmatprep.subr.bf16.mxu0 %v2509
      %2687 = vmatpush1.bf16.msra.mxu0 %v2508
      %2688 = vmatprep.subr.bf16.mxu0 %v2516
      %2689 = vmatpush1.bf16.msra.mxu0 %v2515
      %2690 = vmatprep.subr.bf16.mxu0 %v2523
      %2691 = vmatpush1.bf16.msra.mxu0 %v2522
      %2692 = vmatprep.subr.bf16.mxu0 %v2530
      %2693 = vmatpush1.bf16.msra.mxu0 %v2529
      %2694 = vmatprep.subr.bf16.mxu0 %v2537
      %2695 = vmatpush1.bf16.msra.mxu0 %v2536
      %2696 = vmatprep.subr.bf16.mxu0 %v2544
      %2697 = vmatpush1.bf16.msra.mxu0 %v2543
      %2698 = vmatprep.subr.bf16.mxu0 %v2551
      %2699 = vmatpush1.bf16.msra.mxu0 %v2550
      %2700 = vmatprep.subr.bf16.mxu0 0
      %2701 = vmatpush1.bf16.msra.mxu0 0
      %2702 = vmatprep.subr.bf16.mxu0 0
      %2703 = vmatpush1.bf16.msra.mxu0 0
      %2704 = vmatprep.subr.bf16.mxu0 0
      %2705 = vmatpush1.bf16.msra.mxu0 0
      %2706 = vmatprep.subr.bf16.mxu0 0
      %2707 = vmatpush1.bf16.msra.mxu0 0
      %2708 = vmatprep.subr.bf16.mxu0 0
      %2709 = vmatpush1.bf16.msra.mxu0 0
      %2710 = vmatprep.subr.bf16.mxu0 0
      %2711 = vmatpush1.bf16.msra.mxu0 0
      %2712 = vmatprep.subr.bf16.mxu0 0
      %2713 = vmatpush1.bf16.msra.mxu0 0
      %2714 = vmatprep.subr.bf16.mxu0 0
      %2715 = vmatpush1.bf16.msra.mxu0 0
      %2716 = vmatprep.mubr.bf16.mxu0 0
      %2717 = vmatmul.mubr.bf16.gmra.mrb[0].mxu0 %v2218
      %v2718 = vpop.f32.mrb[0].mxu0
      %v2719 = vadd.f32 %v2299, %v2718
      %v2720 = vpop.f32.mrb[0].mxu0
      %v2721 = vadd.f32 %v2303, %v2720
      %v2722 = vpop.f32.mrb[0].mxu0
      %v2723 = vadd.f32 %v2299, %v2722
      %v2724 = vpop.f32.mrb[0].mxu0
      %v2725 = vadd.f32 %v2303, %v2724
      %2726 = vmatprep.mubr.bf16.mxu0 0
      %2727 = vmatmul.mubr.bf16.gmra.mrb[0].mxu0 %v2219
      %v2728 = vpop.f32.mrb[0].mxu0
      %v2729 = vadd.f32 %v2299, %v2728
      %v2730 = vpop.f32.mrb[0].mxu0
      %v2731 = vadd.f32 %v2303, %v2730
      %v2732 = vpop.f32.mrb[0].mxu0
      %v2733 = vadd.f32 %v2299, %v2732
      %v2734 = vpop.f32.mrb[0].mxu0
      %v2735 = vadd.f32 %v2303, %v2734
      %2736 = vmatprep.mubr.bf16.mxu0 0
      %2737 = vmatmul.mubr.bf16.gmra.mrb[0].mxu0 %v2220
      %v2738 = vpop.f32.mrb[0].mxu0
      %v2739 = vadd.f32 %v2299, %v2738
      %v2740 = vpop.f32.mrb[0].mxu0
      %v2741 = vadd.f32 %v2303, %v2740
      %v2742 = vpop.f32.mrb[0].mxu0
      %v2743 = vadd.f32 %v2299, %v2742
      %v2744 = vpop.f32.mrb[0].mxu0
      %v2745 = vadd.f32 %v2303, %v2744
      %2746 = vmatprep.mubr.bf16.mxu0 0
      %2747 = vmatmul.mubr.bf16.gmra.mrb[0].mxu0 %v2221
      %v2748 = vpop.f32.mrb[0].mxu0
      %v2749 = vadd.f32 %v2299, %v2748
      %v2750 = vpop.f32.mrb[0].mxu0
      %v2751 = vadd.f32 %v2303, %v2750
      %v2752 = vpop.f32.mrb[0].mxu0
      %v2753 = vadd.f32 %v2299, %v2752
      %v2754 = vpop.f32.mrb[0].mxu0
      %v2755 = vadd.f32 %v2303, %v2754
      %2756 = vdwg.mxu0
      %2757 = vmatprep.subr.bf16.mxu0 %v2504
      %2758 = vmatpush1.bf16.msra.mxu0 %v2503
      %2759 = vmatprep.subr.bf16.mxu0 %v2511
      %2760 = vmatpush1.bf16.msra.mxu0 %v2510
      %2761 = vmatprep.subr.bf16.mxu0 %v2518
      %2762 = vmatpush1.bf16.msra.mxu0 %v2517
      %2763 = vmatprep.subr.bf16.mxu0 %v2525
      %2764 = vmatpush1.bf16.msra.mxu0 %v2524
      %2765 = vmatprep.subr.bf16.mxu0 %v2532
      %2766 = vmatpush1.bf16.msra.mxu0 %v2531
      %2767 = vmatprep.subr.bf16.mxu0 %v2539
      %2768 = vmatpush1.bf16.msra.mxu0 %v2538
      %2769 = vmatprep.subr.bf16.mxu0 %v2546
      %2770 = vmatpush1.bf16.msra.mxu0 %v2545
      %2771 = vmatprep.subr.bf16.mxu0 %v2553
      %2772 = vmatpush1.bf16.msra.mxu0 %v2552
      %2773 = vmatprep.subr.bf16.mxu0 0
      %2774 = vmatpush1.bf16.msra.mxu0 0
      %2775 = vmatprep.subr.bf16.mxu0 0
      %2776 = vmatpush1.bf16.msra.mxu0 0
      %2777 = vmatprep.subr.bf16.mxu0 0
      %2778 = vmatpush1.bf16.msra.mxu0 0
      %2779 = vmatprep.subr.bf16.mxu0 0
      %2780 = vmatpush1.bf16.msra.mxu0 0
      %2781 = vmatprep.subr.bf16.mxu0 0
      %2782 = vmatpush1.bf16.msra.mxu0 0
      %2783 = vmatprep.subr.bf16.mxu0 0
      %2784 = vmatpush1.bf16.msra.mxu0 0
      %2785 = vmatprep.subr.bf16.mxu0 0
      %2786 = vmatpush1.bf16.msra.mxu0 0
      %2787 = vmatprep.subr.bf16.mxu0 0
      %2788 = vmatpush1.bf16.msra.mxu0 0
      %2789 = vmatprep.mubr.bf16.mxu0 0
      %2790 = vmatmul.mubr.bf16.gmra.mrb[0].mxu0 %v2218
      %v2791 = vpop.f32.mrb[0].mxu0
      %v2792 = vadd.f32 %v2307, %v2791
      %v2793 = vpop.f32.mrb[0].mxu0
      %v2794 = vadd.f32 %v2311, %v2793
      %v2795 = vpop.f32.mrb[0].mxu0
      %v2796 = vadd.f32 %v2307, %v2795
      %v2797 = vpop.f32.mrb[0].mxu0
      %v2798 = vadd.f32 %v2311, %v2797
      %2799 = vmatprep.mubr.bf16.mxu0 0
      %2800 = vmatmul.mubr.bf16.gmra.mrb[0].mxu0 %v2219
      %v2801 = vpop.f32.mrb[0].mxu0
      %v2802 = vadd.f32 %v2307, %v2801
      %v2803 = vpop.f32.mrb[0].mxu0
      %v2804 = vadd.f32 %v2311, %v2803
      %v2805 = vpop.f32.mrb[0].mxu0
      %v2806 = vadd.f32 %v2307, %v2805
      %v2807 = vpop.f32.mrb[0].mxu0
      %v2808 = vadd.f32 %v2311, %v2807
      %2809 = vmatprep.mubr.bf16.mxu0 0
      %2810 = vmatmul.mubr.bf16.gmra.mrb[0].mxu0 %v2220
      %v2811 = vpop.f32.mrb[0].mxu0
      %v2812 = vadd.f32 %v2307, %v2811
      %v2813 = vpop.f32.mrb[0].mxu0
      %v2814 = vadd.f32 %v2311, %v2813
      %v2815 = vpop.f32.mrb[0].mxu0
      %v2816 = vadd.f32 %v2307, %v2815
      %v2817 = vpop.f32.mrb[0].mxu0
      %v2818 = vadd.f32 %v2311, %v2817
      %2819 = vmatprep.mubr.bf16.mxu0 0
      %2820 = vmatmul.mubr.bf16.gmra.mrb[0].mxu0 %v2221
      %v2821 = vpop.f32.mrb[0].mxu0
      %v2822 = vadd.f32 %v2307, %v2821
      %v2823 = vpop.f32.mrb[0].mxu0
      %v2824 = vadd.f32 %v2311, %v2823
      %v2825 = vpop.f32.mrb[0].mxu0
      %v2826 = vadd.f32 %v2307, %v2825
      %v2827 = vpop.f32.mrb[0].mxu0
      %v2828 = vadd.f32 %v2311, %v2827
      %2829 = vdwg.mxu0
      %2830 = vmatprep.subr.bf16.mxu0 0
      %2831 = vmatpush1.bf16.msra.mxu0 %v2505
      %2832 = vmatprep.subr.bf16.mxu0 0
      %2833 = vmatpush1.bf16.msra.mxu0 %v2512
      %2834 = vmatprep.subr.bf16.mxu0 0
      %2835 = vmatpush1.bf16.msra.mxu0 %v2519
      %2836 = vmatprep.subr.bf16.mxu0 0
      %2837 = vmatpush1.bf16.msra.mxu0 %v2526
      %2838 = vmatprep.subr.bf16.mxu0 0
      %2839 = vmatpush1.bf16.msra.mxu0 %v2533
      %2840 = vmatprep.subr.bf16.mxu0 0
      %2841 = vmatpush1.bf16.msra.mxu0 %v2540
      %2842 = vmatprep.subr.bf16.mxu0 0
      %2843 = vmatpush1.bf16.msra.mxu0 %v2547
      %2844 = vmatprep.subr.bf16.mxu0 0
      %2845 = vmatpush1.bf16.msra.mxu0 %v2554
      %2846 = vmatprep.subr.bf16.mxu0 0
      %2847 = vmatpush1.bf16.msra.mxu0 0
      %2848 = vmatprep.subr.bf16.mxu0 0
      %2849 = vmatpush1.bf16.msra.mxu0 0
      %2850 = vmatprep.subr.bf16.mxu0 0
      %2851 = vmatpush1.bf16.msra.mxu0 0
      %2852 = vmatprep.subr.bf16.mxu0 0
      %2853 = vmatpush1.bf16.msra.mxu0 0
      %2854 = vmatprep.subr.bf16.mxu0 0
      %2855 = vmatpush1.bf16.msra.mxu0 0
      %2856 = vmatprep.subr.bf16.mxu0 0
      %2857 = vmatpush1.bf16.msra.mxu0 0
      %2858 = vmatprep.subr.bf16.mxu0 0
      %2859 = vmatpush1.bf16.msra.mxu0 0
      %2860 = vmatprep.subr.bf16.mxu0 0
      %2861 = vmatpush1.bf16.msra.mxu0 0
      %2862 = vmatprep.mubr.bf16.mxu0 0
      %2863 = vmatmul.mubr.bf16.gmra.mrb[0].mxu0 %v2218
      %v2864 = vpop.f32.mrb[0].mxu0
      %v2865 = vadd.f32 %v2315, %v2864
      %v2866 = vpop.f32.mrb[0].mxu0
      %v2867 = vpop.f32.mrb[0].mxu0
      %v2868 = vadd.f32 %v2315, %v2867
      %v2869 = vpop.f32.mrb[0].mxu0
      %2870 = vmatprep.mubr.bf16.mxu0 0
      %2871 = vmatmul.mubr.bf16.gmra.mrb[0].mxu0 %v2219
      %v2872 = vpop.f32.mrb[0].mxu0
      %v2873 = vadd.f32 %v2315, %v2872
      %v2874 = vpop.f32.mrb[0].mxu0
      %v2875 = vpop.f32.mrb[0].mxu0
      %v2876 = vadd.f32 %v2315, %v2875
      %v2877 = vpop.f32.mrb[0].mxu0
      %2878 = vmatprep.mubr.bf16.mxu0 0
      %2879 = vmatmul.mubr.bf16.gmra.mrb[0].mxu0 %v2220
      %v2880 = vpop.f32.mrb[0].mxu0
      %v2881 = vadd.f32 %v2315, %v2880
      %v2882 = vpop.f32.mrb[0].mxu0
      %v2883 = vpop.f32.mrb[0].mxu0
      %v2884 = vadd.f32 %v2315, %v2883
      %v2885 = vpop.f32.mrb[0].mxu0
      %2886 = vmatprep.mubr.bf16.mxu0 0
      %2887 = vmatmul.mubr.bf16.gmra.mrb[0].mxu0 %v2221
      %v2888 = vpop.f32.mrb[0].mxu0
      %v2889 = vadd.f32 %v2315, %v2888
      %v2890 = vpop.f32.mrb[0].mxu0
      %v2891 = vpop.f32.mrb[0].mxu0
      %v2892 = vadd.f32 %v2315, %v2891
      %v2893 = vpop.f32.mrb[0].mxu0
      %2894 = vdwg.mxu0
      %v2895 = vxor.u32 %v2646, 2147483648
      %v2896 = vxor.u32 %v2648, 2147483648
      %v2897 = vxor.u32 %v2719, 2147483648
      %v2898 = vxor.u32 %v2721, 2147483648
      %v2899 = vxor.u32 %v2792, 2147483648
      %v2900 = vxor.u32 %v2794, 2147483648
      %v2901 = vxor.u32 %v2865, 2147483648
      %v2902 = vxor.u32 %v2650, 2147483648
      %v2903 = vxor.u32 %v2652, 2147483648
      %v2904 = vxor.u32 %v2723, 2147483648
      %v2905 = vxor.u32 %v2725, 2147483648
      %v2906 = vxor.u32 %v2796, 2147483648
      %v2907 = vxor.u32 %v2798, 2147483648
      %v2908 = vxor.u32 %v2868, 2147483648
      %v2909 = vxor.u32 %v2656, 2147483648
      %v2910 = vxor.u32 %v2658, 2147483648
      %v2911 = vxor.u32 %v2729, 2147483648
      %v2912 = vxor.u32 %v2731, 2147483648
      %v2913 = vxor.u32 %v2802, 2147483648
      %v2914 = vxor.u32 %v2804, 2147483648
      %v2915 = vxor.u32 %v2873, 2147483648
      %v2916 = vxor.u32 %v2660, 2147483648
      %v2917 = vxor.u32 %v2662, 2147483648
      %v2918 = vxor.u32 %v2733, 2147483648
      %v2919 = vxor.u32 %v2735, 2147483648
      %v2920 = vxor.u32 %v2806, 2147483648
      %v2921 = vxor.u32 %v2808, 2147483648
      %v2922 = vxor.u32 %v2876, 2147483648
      %v2923 = vxor.u32 %v2666, 2147483648
      %v2924 = vxor.u32 %v2668, 2147483648
      %v2925 = vxor.u32 %v2739, 2147483648
      %v2926 = vxor.u32 %v2741, 2147483648
      %v2927 = vxor.u32 %v2812, 2147483648
      %v2928 = vxor.u32 %v2814, 2147483648
      %v2929 = vxor.u32 %v2881, 2147483648
      %v2930 = vxor.u32 %v2670, 2147483648
      %v2931 = vxor.u32 %v2672, 2147483648
      %v2932 = vxor.u32 %v2743, 2147483648
      %v2933 = vxor.u32 %v2745, 2147483648
      %v2934 = vxor.u32 %v2816, 2147483648
      %v2935 = vxor.u32 %v2818, 2147483648
      %v2936 = vxor.u32 %v2884, 2147483648
      %v2937 = vxor.u32 %v2676, 2147483648
      %v2938 = vxor.u32 %v2678, 2147483648
      %v2939 = vxor.u32 %v2749, 2147483648
      %v2940 = vxor.u32 %v2751, 2147483648
      %v2941 = vxor.u32 %v2822, 2147483648
      %v2942 = vxor.u32 %v2824, 2147483648
      %v2943 = vxor.u32 %v2889, 2147483648
      %v2944 = vxor.u32 %v2680, 2147483648
      %v2945 = vxor.u32 %v2682, 2147483648
      %v2946 = vxor.u32 %v2753, 2147483648
      %v2947 = vxor.u32 %v2755, 2147483648
      %v2948 = vxor.u32 %v2826, 2147483648
      %v2949 = vxor.u32 %v2828, 2147483648
      %v2950 = vxor.u32 %v2892, 2147483648
      %v2951 = vmul.f32 %v2895, 1.442695
      %v2952 = vpow.pop %v2951
      %v2953 = vmul.f32 %v2896, 1.442695
      %v2954 = vpow.pop %v2953
      %v2955 = vmul.f32 %v2897, 1.442695
      %v2956 = vpow.pop %v2955
      %v2957 = vmul.f32 %v2898, 1.442695
      %v2958 = vpow.pop %v2957
      %v2959 = vmul.f32 %v2899, 1.442695
      %v2960 = vpow.pop %v2959
      %v2961 = vmul.f32 %v2900, 1.442695
      %v2962 = vpow.pop %v2961
      %v2963 = vmul.f32 %v2901, 1.442695
      %v2964 = vpow.pop %v2963
      %v2965 = vmul.f32 %v2902, 1.442695
      %v2966 = vpow.pop %v2965
      %v2967 = vmul.f32 %v2903, 1.442695
      %v2968 = vpow.pop %v2967
      %v2969 = vmul.f32 %v2904, 1.442695
      %v2970 = vpow.pop %v2969
      %v2971 = vmul.f32 %v2905, 1.442695
      %v2972 = vpow.pop %v2971
      %v2973 = vmul.f32 %v2906, 1.442695
      %v2974 = vpow.pop %v2973
      %v2975 = vmul.f32 %v2907, 1.442695
      %v2976 = vpow.pop %v2975
      %v2977 = vmul.f32 %v2908, 1.442695
      %v2978 = vpow.pop %v2977
      %v2979 = vmul.f32 %v2909, 1.442695
      %v2980 = vpow.pop %v2979
      %v2981 = vmul.f32 %v2910, 1.442695
      %v2982 = vpow.pop %v2981
      %v2983 = vmul.f32 %v2911, 1.442695
      %v2984 = vpow.pop %v2983
      %v2985 = vmul.f32 %v2912, 1.442695
      %v2986 = vpow.pop %v2985
      %v2987 = vmul.f32 %v2913, 1.442695
      %v2988 = vpow.pop %v2987
      %v2989 = vmul.f32 %v2914, 1.442695
      %v2990 = vpow.pop %v2989
      %v2991 = vmul.f32 %v2915, 1.442695
      %v2992 = vpow.pop %v2991
      %v2993 = vmul.f32 %v2916, 1.442695
      %v2994 = vpow.pop %v2993
      %v2995 = vmul.f32 %v2917, 1.442695
      %v2996 = vpow.pop %v2995
      %v2997 = vmul.f32 %v2918, 1.442695
      %v2998 = vpow.pop %v2997
      %v2999 = vmul.f32 %v2919, 1.442695
      %v3000 = vpow.pop %v2999
      %v3001 = vmul.f32 %v2920, 1.442695
      %v3002 = vpow.pop %v3001
      %v3003 = vmul.f32 %v2921, 1.442695
      %v3004 = vpow.pop %v3003
      %v3005 = vmul.f32 %v2922, 1.442695
      %v3006 = vpow.pop %v3005
      %v3007 = vmul.f32 %v2923, 1.442695
      %v3008 = vpow.pop %v3007
      %v3009 = vmul.f32 %v2924, 1.442695
      %v3010 = vpow.pop %v3009
      %v3011 = vmul.f32 %v2925, 1.442695
      %v3012 = vpow.pop %v3011
      %v3013 = vmul.f32 %v2926, 1.442695
      %v3014 = vpow.pop %v3013
      %v3015 = vmul.f32 %v2927, 1.442695
      %v3016 = vpow.pop %v3015
      %v3017 = vmul.f32 %v2928, 1.442695
      %v3018 = vpow.pop %v3017
      %v3019 = vmul.f32 %v2929, 1.442695
      %v3020 = vpow.pop %v3019
      %v3021 = vmul.f32 %v2930, 1.442695
      %v3022 = vpow.pop %v3021
      %v3023 = vmul.f32 %v2931, 1.442695
      %v3024 = vpow.pop %v3023
      %v3025 = vmul.f32 %v2932, 1.442695
      %v3026 = vpow.pop %v3025
      %v3027 = vmul.f32 %v2933, 1.442695
      %v3028 = vpow.pop %v3027
      %v3029 = vmul.f32 %v2934, 1.442695
      %v3030 = vpow.pop %v3029
      %v3031 = vmul.f32 %v2935, 1.442695
      %v3032 = vpow.pop %v3031
      %v3033 = vmul.f32 %v2936, 1.442695
      %v3034 = vpow.pop %v3033
      %v3035 = vmul.f32 %v2937, 1.442695
      %v3036 = vpow.pop %v3035
      %v3037 = vmul.f32 %v2938, 1.442695
      %v3038 = vpow.pop %v3037
      %v3039 = vmul.f32 %v2939, 1.442695
      %v3040 = vpow.pop %v3039
      %v3041 = vmul.f32 %v2940, 1.442695
      %v3042 = vpow.pop %v3041
      %v3043 = vmul.f32 %v2941, 1.442695
      %v3044 = vpow.pop %v3043
      %v3045 = vmul.f32 %v2942, 1.442695
      %v3046 = vpow.pop %v3045
      %v3047 = vmul.f32 %v2943, 1.442695
      %v3048 = vpow.pop %v3047
      %v3049 = vmul.f32 %v2944, 1.442695
      %v3050 = vpow.pop %v3049
      %v3051 = vmul.f32 %v2945, 1.442695
      %v3052 = vpow.pop %v3051
      %v3053 = vmul.f32 %v2946, 1.442695
      %v3054 = vpow.pop %v3053
      %v3055 = vmul.f32 %v2947, 1.442695
      %v3056 = vpow.pop %v3055
      %v3057 = vmul.f32 %v2948, 1.442695
      %v3058 = vpow.pop %v3057
      %v3059 = vmul.f32 %v2949, 1.442695
      %v3060 = vpow.pop %v3059
      %v3061 = vmul.f32 %v2950, 1.442695
      %v3062 = vpow.pop %v3061
      %v3063 = vadd.f32 %v2952, 1.0
      %v3064 = vadd.f32 %v2954, 1.0
      %v3065 = vadd.f32 %v2956, 1.0
      %v3066 = vadd.f32 %v2958, 1.0
      %v3067 = vadd.f32 %v2960, 1.0
      %v3068 = vadd.f32 %v2962, 1.0
      %v3069 = vadd.f32 %v2964, 1.0
      %v3070 = vadd.f32 %v2966, 1.0
      %v3071 = vadd.f32 %v2968, 1.0
      %v3072 = vadd.f32 %v2970, 1.0
      %v3073 = vadd.f32 %v2972, 1.0
      %v3074 = vadd.f32 %v2974, 1.0
      %v3075 = vadd.f32 %v2976, 1.0
      %v3076 = vadd.f32 %v2978, 1.0
      %v3077 = vadd.f32 %v2980, 1.0
      %v3078 = vadd.f32 %v2982, 1.0
      %v3079 = vadd.f32 %v2984, 1.0
      %v3080 = vadd.f32 %v2986, 1.0
      %v3081 = vadd.f32 %v2988, 1.0
      %v3082 = vadd.f32 %v2990, 1.0
      %v3083 = vadd.f32 %v2992, 1.0
      %v3084 = vadd.f32 %v2994, 1.0
      %v3085 = vadd.f32 %v2996, 1.0
      %v3086 = vadd.f32 %v2998, 1.0
      %v3087 = vadd.f32 %v3000, 1.0
      %v3088 = vadd.f32 %v3002, 1.0
      %v3089 = vadd.f32 %v3004, 1.0
      %v3090 = vadd.f32 %v3006, 1.0
      %v3091 = vadd.f32 %v3008, 1.0
      %v3092 = vadd.f32 %v3010, 1.0
      %v3093 = vadd.f32 %v3012, 1.0
      %v3094 = vadd.f32 %v3014, 1.0
      %v3095 = vadd.f32 %v3016, 1.0
      %v3096 = vadd.f32 %v3018, 1.0
      %v3097 = vadd.f32 %v3020, 1.0
      %v3098 = vadd.f32 %v3022, 1.0
      %v3099 = vadd.f32 %v3024, 1.0
      %v3100 = vadd.f32 %v3026, 1.0
      %v3101 = vadd.f32 %v3028, 1.0
      %v3102 = vadd.f32 %v3030, 1.0
      %v3103 = vadd.f32 %v3032, 1.0
      %v3104 = vadd.f32 %v3034, 1.0
      %v3105 = vadd.f32 %v3036, 1.0
      %v3106 = vadd.f32 %v3038, 1.0
      %v3107 = vadd.f32 %v3040, 1.0
      %v3108 = vadd.f32 %v3042, 1.0
      %v3109 = vadd.f32 %v3044, 1.0
      %v3110 = vadd.f32 %v3046, 1.0
      %v3111 = vadd.f32 %v3048, 1.0
      %v3112 = vadd.f32 %v3050, 1.0
      %v3113 = vadd.f32 %v3052, 1.0
      %v3114 = vadd.f32 %v3054, 1.0
      %v3115 = vadd.f32 %v3056, 1.0
      %v3116 = vadd.f32 %v3058, 1.0
      %v3117 = vadd.f32 %v3060, 1.0
      %v3118 = vadd.f32 %v3062, 1.0
      %v3119 = vrcp.pop %v3063
      %v3120 = vmul.f32 1.0, %v3119
      %v3121 = vrcp.pop %v3064
      %v3122 = vmul.f32 1.0, %v3121
      %v3123 = vrcp.pop %v3065
      %v3124 = vmul.f32 1.0, %v3123
      %v3125 = vrcp.pop %v3066
      %v3126 = vmul.f32 1.0, %v3125
      %v3127 = vrcp.pop %v3067
      %v3128 = vmul.f32 1.0, %v3127
      %v3129 = vrcp.pop %v3068
      %v3130 = vmul.f32 1.0, %v3129
      %v3131 = vrcp.pop %v3069
      %v3132 = vmul.f32 1.0, %v3131
      %v3133 = vrcp.pop %v3070
      %v3134 = vmul.f32 1.0, %v3133
      %v3135 = vrcp.pop %v3071
      %v3136 = vmul.f32 1.0, %v3135
      %v3137 = vrcp.pop %v3072
      %v3138 = vmul.f32 1.0, %v3137
      %v3139 = vrcp.pop %v3073
      %v3140 = vmul.f32 1.0, %v3139
      %v3141 = vrcp.pop %v3074
      %v3142 = vmul.f32 1.0, %v3141
      %v3143 = vrcp.pop %v3075
      %v3144 = vmul.f32 1.0, %v3143
      %v3145 = vrcp.pop %v3076
      %v3146 = vmul.f32 1.0, %v3145
      %v3147 = vrcp.pop %v3077
      %v3148 = vmul.f32 1.0, %v3147
      %v3149 = vrcp.pop %v3078
      %v3150 = vmul.f32 1.0, %v3149
      %v3151 = vrcp.pop %v3079
      %v3152 = vmul.f32 1.0, %v3151
      %v3153 = vrcp.pop %v3080
      %v3154 = vmul.f32 1.0, %v3153
      %v3155 = vrcp.pop %v3081
      %v3156 = vmul.f32 1.0, %v3155
      %v3157 = vrcp.pop %v3082
      %v3158 = vmul.f32 1.0, %v3157
      %v3159 = vrcp.pop %v3083
      %v3160 = vmul.f32 1.0, %v3159
      %v3161 = vrcp.pop %v3084
      %v3162 = vmul.f32 1.0, %v3161
      %v3163 = vrcp.pop %v3085
      %v3164 = vmul.f32 1.0, %v3163
      %v3165 = vrcp.pop %v3086
      %v3166 = vmul.f32 1.0, %v3165
      %v3167 = vrcp.pop %v3087
      %v3168 = vmul.f32 1.0, %v3167
      %v3169 = vrcp.pop %v3088
      %v3170 = vmul.f32 1.0, %v3169
      %v3171 = vrcp.pop %v3089
      %v3172 = vmul.f32 1.0, %v3171
      %v3173 = vrcp.pop %v3090
      %v3174 = vmul.f32 1.0, %v3173
      %v3175 = vrcp.pop %v3091
      %v3176 = vmul.f32 1.0, %v3175
      %v3177 = vrcp.pop %v3092
      %v3178 = vmul.f32 1.0, %v3177
      %v3179 = vrcp.pop %v3093
      %v3180 = vmul.f32 1.0, %v3179
      %v3181 = vrcp.pop %v3094
      %v3182 = vmul.f32 1.0, %v3181
      %v3183 = vrcp.pop %v3095
      %v3184 = vmul.f32 1.0, %v3183
      %v3185 = vrcp.pop %v3096
      %v3186 = vmul.f32 1.0, %v3185
      %v3187 = vrcp.pop %v3097
      %v3188 = vmul.f32 1.0, %v3187
      %v3189 = vrcp.pop %v3098
      %v3190 = vmul.f32 1.0, %v3189
      %v3191 = vrcp.pop %v3099
      %v3192 = vmul.f32 1.0, %v3191
      %v3193 = vrcp.pop %v3100
      %v3194 = vmul.f32 1.0, %v3193
      %v3195 = vrcp.pop %v3101
      %v3196 = vmul.f32 1.0, %v3195
      %v3197 = vrcp.pop %v3102
      %v3198 = vmul.f32 1.0, %v3197
      %v3199 = vrcp.pop %v3103
      %v3200 = vmul.f32 1.0, %v3199
      %v3201 = vrcp.pop %v3104
      %v3202 = vmul.f32 1.0, %v3201
      %v3203 = vrcp.pop %v3105
      %v3204 = vmul.f32 1.0, %v3203
      %v3205 = vrcp.pop %v3106
      %v3206 = vmul.f32 1.0, %v3205
      %v3207 = vrcp.pop %v3107
      %v3208 = vmul.f32 1.0, %v3207
      %v3209 = vrcp.pop %v3108
      %v3210 = vmul.f32 1.0, %v3209
      %v3211 = vrcp.pop %v3109
      %v3212 = vmul.f32 1.0, %v3211
      %v3213 = vrcp.pop %v3110
      %v3214 = vmul.f32 1.0, %v3213
      %v3215 = vrcp.pop %v3111
      %v3216 = vmul.f32 1.0, %v3215
      %v3217 = vrcp.pop %v3112
      %v3218 = vmul.f32 1.0, %v3217
      %v3219 = vrcp.pop %v3113
      %v3220 = vmul.f32 1.0, %v3219
      %v3221 = vrcp.pop %v3114
      %v3222 = vmul.f32 1.0, %v3221
      %v3223 = vrcp.pop %v3115
      %v3224 = vmul.f32 1.0, %v3223
      %v3225 = vrcp.pop %v3116
      %v3226 = vmul.f32 1.0, %v3225
      %v3227 = vrcp.pop %v3117
      %v3228 = vmul.f32 1.0, %v3227
      %v3229 = vrcp.pop %v3118
      %v3230 = vmul.f32 1.0, %v3229
      %v3231 = vpack.c.bf16 %v3134, %v3120
      %v3232 = vpack.c.bf16 %v3136, %v3122
      %v3233 = vpack.c.bf16 %v3138, %v3124
      %v3234 = vpack.c.bf16 %v3140, %v3126
      %v3235 = vpack.c.bf16 %v3142, %v3128
      %v3236 = vpack.c.bf16 %v3144, %v3130
      %v3237 = vpack.c.bf16 %v3146, %v3132
      %v3238 = vpack.c.bf16 %v3162, %v3148
      %v3239 = vpack.c.bf16 %v3164, %v3150
      %v3240 = vpack.c.bf16 %v3166, %v3152
      %v3241 = vpack.c.bf16 %v3168, %v3154
      %v3242 = vpack.c.bf16 %v3170, %v3156
      %v3243 = vpack.c.bf16 %v3172, %v3158
      %v3244 = vpack.c.bf16 %v3174, %v3160
      %v3245 = vpack.c.bf16 %v3190, %v3176
      %v3246 = vpack.c.bf16 %v3192, %v3178
      %v3247 = vpack.c.bf16 %v3194, %v3180
      %v3248 = vpack.c.bf16 %v3196, %v3182
      %v3249 = vpack.c.bf16 %v3198, %v3184
      %v3250 = vpack.c.bf16 %v3200, %v3186
      %v3251 = vpack.c.bf16 %v3202, %v3188
      %v3252 = vpack.c.bf16 %v3218, %v3204
      %v3253 = vpack.c.bf16 %v3220, %v3206
      %v3254 = vpack.c.bf16 %v3222, %v3208
      %v3255 = vpack.c.bf16 %v3224, %v3210
      %v3256 = vpack.c.bf16 %v3226, %v3212
      %v3257 = vpack.c.bf16 %v3228, %v3214
      %v3258 = vpack.c.bf16 %v3230, %v3216
      %v3287 = vunpack.c.l.b16 %v3231
      %v3288 = vunpack.c.l.b16 %v3232
      %v3289 = vunpack.c.l.b16 %v3233
      %v3290 = vunpack.c.l.b16 %v3234
      %v3291 = vunpack.c.l.b16 %v3235
      %v3292 = vunpack.c.l.b16 %v3236
      %v3293 = vunpack.c.l.b16 %v3237
      %v3294 = vunpack.c.h.b16 %v3231
      %v3295 = vunpack.c.h.b16 %v3232
      %v3296 = vunpack.c.h.b16 %v3233
      %v3297 = vunpack.c.h.b16 %v3234
      %v3298 = vunpack.c.h.b16 %v3235
      %v3299 = vunpack.c.h.b16 %v3236
      %v3300 = vunpack.c.h.b16 %v3237
      %v3301 = vunpack.c.l.b16 %v3238
      %v3302 = vunpack.c.l.b16 %v3239
      %v3303 = vunpack.c.l.b16 %v3240
      %v3304 = vunpack.c.l.b16 %v3241
      %v3305 = vunpack.c.l.b16 %v3242
      %v3306 = vunpack.c.l.b16 %v3243
      %v3307 = vunpack.c.l.b16 %v3244
      %v3308 = vunpack.c.h.b16 %v3238
      %v3309 = vunpack.c.h.b16 %v3239
      %v3310 = vunpack.c.h.b16 %v3240
      %v3311 = vunpack.c.h.b16 %v3241
      %v3312 = vunpack.c.h.b16 %v3242
      %v3313 = vunpack.c.h.b16 %v3243
      %v3314 = vunpack.c.h.b16 %v3244
      %v3315 = vunpack.c.l.b16 %v3245
      %v3316 = vunpack.c.l.b16 %v3246
      %v3317 = vunpack.c.l.b16 %v3247
      %v3318 = vunpack.c.l.b16 %v3248
      %v3319 = vunpack.c.l.b16 %v3249
      %v3320 = vunpack.c.l.b16 %v3250
      %v3321 = vunpack.c.l.b16 %v3251
      %v3322 = vunpack.c.h.b16 %v3245
      %v3323 = vunpack.c.h.b16 %v3246
      %v3324 = vunpack.c.h.b16 %v3247
      %v3325 = vunpack.c.h.b16 %v3248
      %v3326 = vunpack.c.h.b16 %v3249
      %v3327 = vunpack.c.h.b16 %v3250
      %v3328 = vunpack.c.h.b16 %v3251
      %v3329 = vunpack.c.l.b16 %v3252
      %v3330 = vunpack.c.l.b16 %v3253
      %v3331 = vunpack.c.l.b16 %v3254
      %v3332 = vunpack.c.l.b16 %v3255
      %v3333 = vunpack.c.l.b16 %v3256
      %v3334 = vunpack.c.l.b16 %v3257
      %v3335 = vunpack.c.l.b16 %v3258
      %v3336 = vunpack.c.h.b16 %v3252
      %v3337 = vunpack.c.h.b16 %v3253
      %v3338 = vunpack.c.h.b16 %v3254
      %v3339 = vunpack.c.h.b16 %v3255
      %v3340 = vunpack.c.h.b16 %v3256
      %v3341 = vunpack.c.h.b16 %v3257
      %v3342 = vunpack.c.h.b16 %v3258
      %v3343 = vpack.c.b16 %v3288, %v3287
      %v3344 = vpack.c.b16 %v3290, %v3289
      %v3345 = vpack.c.b16 %v3292, %v3291
      %v3346 = vpack.c.b16 %v3293, %v3293
      %v3347 = vpack.c.b16 %v3295, %v3294
      %v3348 = vpack.c.b16 %v3297, %v3296
      %v3349 = vpack.c.b16 %v3299, %v3298
      %v3350 = vpack.c.b16 %v3300, %v3300
      %v3351 = vpack.c.b16 %v3302, %v3301
      %v3352 = vpack.c.b16 %v3304, %v3303
      %v3353 = vpack.c.b16 %v3306, %v3305
      %v3354 = vpack.c.b16 %v3307, %v3307
      %v3355 = vpack.c.b16 %v3309, %v3308
      %v3356 = vpack.c.b16 %v3311, %v3310
      %v3357 = vpack.c.b16 %v3313, %v3312
      %v3358 = vpack.c.b16 %v3314, %v3314
      %v3359 = vpack.c.b16 %v3316, %v3315
      %v3360 = vpack.c.b16 %v3318, %v3317
      %v3361 = vpack.c.b16 %v3320, %v3319
      %v3362 = vpack.c.b16 %v3321, %v3321
      %v3363 = vpack.c.b16 %v3323, %v3322
      %v3364 = vpack.c.b16 %v3325, %v3324
      %v3365 = vpack.c.b16 %v3327, %v3326
      %v3366 = vpack.c.b16 %v3328, %v3328
      %v3367 = vpack.c.b16 %v3330, %v3329
      %v3368 = vpack.c.b16 %v3332, %v3331
      %v3369 = vpack.c.b16 %v3334, %v3333
      %v3370 = vpack.c.b16 %v3335, %v3335
      %v3371 = vpack.c.b16 %v3337, %v3336
      %v3372 = vpack.c.b16 %v3339, %v3338
      %v3373 = vpack.c.b16 %v3341, %v3340
      %v3374 = vpack.c.b16 %v3342, %v3342
      %3407 = vst [vmem:[%s596] sm:$0xff] %v3343
      %3408 = vst [vmem:[%s596 + $0x8] sm:$0xff] %v3344
      %3409 = vst [vmem:[%s596 + $0x10] sm:$0xff] %v3345
      %vm3410 = vcmask 125952
      %3411 = vst.msk [vmem:[%s596 + $0x18] sm:$0xf] %vm3410, %v3346
      %3412 = vst [vmem:[%s596 + $0x1c] sm:$0xff] %v3347
      %3413 = vst [vmem:[%s596 + $0x24] sm:$0xff] %v3348
      %3414 = vst [vmem:[%s596 + $0x2c] sm:$0xff] %v3349
      %3415 = vst.msk [vmem:[%s596 + $0x34] sm:$0xf] %vm3410, %v3350
      %3416 = vst [vmem:[%s596 + $0x38] sm:$0xff] %v3351
      %3417 = vst [vmem:[%s596 + $0x40] sm:$0xff] %v3352
      %3418 = vst [vmem:[%s596 + $0x48] sm:$0xff] %v3353
      %3419 = vst.msk [vmem:[%s596 + $0x50] sm:$0xf] %vm3410, %v3354
      %3420 = vst [vmem:[%s596 + $0x54] sm:$0xff] %v3355
      %3421 = vst [vmem:[%s596 + $0x5c] sm:$0xff] %v3356
      %3422 = vst [vmem:[%s596 + $0x64] sm:$0xff] %v3357
      %3423 = vst.msk [vmem:[%s596 + $0x6c] sm:$0xf] %vm3410, %v3358
      %3424 = vst [vmem:[%s596 + $0x70] sm:$0xff] %v3359
      %3425 = vst [vmem:[%s596 + $0x78] sm:$0xff] %v3360
      %3426 = vst [vmem:[%s596 + $0x80] sm:$0xff] %v3361
      %3427 = vst.msk [vmem:[%s596 + $0x88] sm:$0xf] %vm3410, %v3362
      %3428 = vst [vmem:[%s596 + $0x8c] sm:$0xff] %v3363
      %3429 = vst [vmem:[%s596 + $0x94] sm:$0xff] %v3364
      %3430 = vst [vmem:[%s596 + $0x9c] sm:$0xff] %v3365
      %3431 = vst.msk [vmem:[%s596 + $0xa4] sm:$0xf] %vm3410, %v3366
      %3432 = vst [vmem:[%s596 + $0xa8] sm:$0xff] %v3367
      %3433 = vst [vmem:[%s596 + $0xb0] sm:$0xff] %v3368
      %3434 = vst [vmem:[%s596 + $0xb8] sm:$0xff] %v3369
      %3435 = vst.msk [vmem:[%s596 + $0xc0] sm:$0xf] %vm3410, %v3370
      %3436 = vst [vmem:[%s596 + $0xc4] sm:$0xff] %v3371
      %3437 = vst [vmem:[%s596 + $0xcc] sm:$0xff] %v3372
      %3438 = vst [vmem:[%s596 + $0xd4] sm:$0xff] %v3373
      %3439 = vst.msk [vmem:[%s596 + $0xdc] sm:$0xf] %vm3410, %v3374
      %s3440 = smul.u32 8, %s30
      %p3441 = scmp.lt.s32.totalorder %s3440, 31
      %s3442 = scalar_select %p3441, %s3440, 31
      %s3443 = smul.addr %s3442, 8
      %s3444 = scalar_lea.vmem %s17, %s3443
      %s3445 = smul.u32 8, %s30
      %p3446 = scmp.lt.s32.totalorder %s3445, 31
      %s3447 = scalar_select %p3446, %s3445, 31
      %s3448 = smul.addr %s3447, 7
      %s3449 = smul.addr %s3448, 4
      %s3450 = scalar_lea.vmem %s18, %s3449
      // Predicated region
      $region89: #{autoencoder_forward.1} parent=87 // pred_check
        %p3451 = pneg %p410
      $region90: #{autoencoder_forward.1} parent=87 // pred_check_branch
        %3453 = sbr.rel (%p3451) target = $region92
      $region91: #{autoencoder_forward.1} parent=87 // pred_region
        %s3454 = smul.u32 8, %s30
      $region92: #{autoencoder_forward.1} parent=87 // pred_fallthru
        _
      // Predicated region
      $region93: #{autoencoder_forward.1} parent=87 // pred_check
        %p3455 = pneg %p436
      $region94: #{autoencoder_forward.1} parent=87 // pred_check_branch
        %3457 = sbr.rel (%p3455) target = $region96
      $region95: #{autoencoder_forward.1} parent=87 // pred_region
        %s3458 = smul.u32 8, %s30
      $region96: #{autoencoder_forward.1} parent=87 // pred_fallthru
        _
    $region88: #{autoencoder_forward.1} parent=5 // pred_fallthru
      _
    %p3459 = scmp.le.s32.totalorder 2, %s25
    // Predicated region
    $region97: #{autoencoder_forward.1} parent=5 // pred_check
      %p3460 = pneg %p3459
    $region98: #{autoencoder_forward.1} parent=5 // pred_check_branch
      %3462 = sbr.rel (%p3460) target = $region100
    $region99: #{autoencoder_forward.1} parent=5 // pred_region
      %s3463 = ssub.s32 %s25, 2
      // Predicated region
      $region101: #{autoencoder_forward.1} parent=99 // pred_check
        %p3464 = pneg %p416
      $region102: #{autoencoder_forward.1} parent=99 // pred_check_branch
        %3466 = sbr.rel (%p3464) target = $region104
      $region103: #{autoencoder_forward.1} parent=99 // pred_region
        %s3467 = smul.u32 8, %s31
        %p3468 = scmp.lt.s32.totalorder %s3467, 31
        %s3469 = scalar_select %p3468, %s3467, 31
        %s3470 = smul.addr %s3469, 8
        %s3471 = scalar_lea.vmem %s17, %s3470
      $region104: #{autoencoder_forward.1} parent=99 // pred_fallthru
        _
      // Predicated region
      $region105: #{autoencoder_forward.1} parent=99 // pred_check
        %p3472 = pneg %p442
      $region106: #{autoencoder_forward.1} parent=99 // pred_check_branch
        %3474 = sbr.rel (%p3472) target = $region108
      $region107: #{autoencoder_forward.1} parent=99 // pred_region
        %s3475 = smul.u32 8, %s31
        %p3476 = scmp.lt.s32.totalorder %s3475, 31
        %s3477 = scalar_select %p3476, %s3475, 31
        %s3478 = smul.addr %s3477, 7
        %s3479 = smul.addr %s3478, 4
        %s3480 = scalar_lea.vmem %s18, %s3479
      $region108: #{autoencoder_forward.1} parent=99 // pred_fallthru
        _
    $region100: #{autoencoder_forward.1} parent=5 // pred_fallthru
      _
  $region6: #{autoencoder_forward.1} parent=0 // loop_footer
    %s29 = sadd.s32 1, %s25
  $region7: #{autoencoder_forward.1} parent=0 // loop_footer_branch
    %24 = sbr.rel target = $region3
  $region8: #{autoencoder_forward.1} parent=0 // loop_exit
    _

</llo_original>
